<compile_context>
chip_gen: v7x
topology: tpu7x:2x2x1
jax: 0.10.0
libtpu: 0.0.40
codegen_flags: <defaults>
</compile_context>

<pallas_src>
import math

import jax
import jax.numpy as jnp
from jax.experimental import pallas as pl
from jax.experimental.pallas import tpu as pltpu

IN_FEATURES = 3 * 32 * 32   # 3072
HIDDEN = 512
OUT_FEATURES = 10
OUT_PADDED = 128            # lane-dense padded fc2 output width


def mlp_kernel(x_ref, w1_ref, b1_ref, w2_ref, b2_ref, o_ref):
    """One batch tile per grid step. Weights are VMEM-resident (constant
    index_map), so the only per-step DMA is the x tile and the output tile."""
    # fc1 on the MXU: bf16 inputs, fp32 accumulation.
    h = jnp.dot(x_ref[...].astype(jnp.bfloat16), w1_ref[...],
                preferred_element_type=jnp.float32)
    h = jnp.maximum(h + b1_ref[...], 0.0)                 # bias + ReLU (fp32, VPU)
    # fc2 on the MXU (bf16 in, fp32 acc), lane-dense 128-wide output.
    out = jnp.dot(h.astype(jnp.bfloat16), w2_ref[...],
                  preferred_element_type=jnp.float32)
    o_ref[...] = (out + b2_ref[...]).astype(o_ref.dtype)


def small_mlp_forward(x_nchw, w1, b1, w2, b2):
    """x_nchw: (B, 3, 32, 32) float32 -> logits (B, 10) float32."""
    B = x_nchw.shape[0]
    # Same semantics as torch's x.view(-1, 3*32*32) on a contiguous NCHW tensor.
    # Stays fp32; the bf16 cast happens inside the kernel (saves an XLA pass).
    x2d = x_nchw.reshape(B, IN_FEATURES)

    # Batch tile: large tiles when the batch is big, else padded to a 16-row
    # (bf16 sublane-friendly) minimum.
    if B >= 256:
        tm = 256
    elif B >= 128:
        tm = 128
    else:
        tm = max(16, ((B + 15) // 16) * 16)
    padded_b = pl.cdiv(B, tm) * tm
    if padded_b != B:
        x2d = jnp.pad(x2d, ((0, padded_b - B), (0, 0)))

    w1_bf = w1.astype(jnp.bfloat16)
    # Zero-pad fc2 weight/bias to a 128-wide, lane-dense output slab.
    w2_pad = jnp.zeros((HIDDEN, OUT_PADDED), jnp.bfloat16)
    w2_pad = w2_pad.at[:, :OUT_FEATURES].set(w2.astype(jnp.bfloat16))
    b1_2d = b1.reshape(1, HIDDEN).astype(jnp.float32)
    b2_pad = jnp.zeros((1, OUT_PADDED), jnp.float32)
    b2_pad = b2_pad.at[:, :OUT_FEATURES].set(b2.astype(jnp.float32))

    grid = (padded_b // tm,)

    out_padded = pl.pallas_call(
        mlp_kernel,
        out_shape=jax.ShapeDtypeStruct((padded_b, OUT_PADDED), jnp.float32),
        grid_spec=pltpu.PrefetchScalarGridSpec(
            num_scalar_prefetch=0,
            grid=grid,
            in_specs=[
                pl.BlockSpec((tm, IN_FEATURES), lambda i: (i, 0)),        # x tile (streamed)
                pl.BlockSpec((IN_FEATURES, HIDDEN), lambda i: (0, 0)),    # W1 (resident)
                pl.BlockSpec((1, HIDDEN), lambda i: (0, 0)),              # b1 (resident)
                pl.BlockSpec((HIDDEN, OUT_PADDED), lambda i: (0, 0)),     # W2 (resident)
                pl.BlockSpec((1, OUT_PADDED), lambda i: (0, 0)),          # b2 (resident)
            ],
            out_specs=pl.BlockSpec((tm, OUT_PADDED), lambda i: (i, 0)),
        ),
        compiler_params=pltpu.CompilerParams(
            dimension_semantics=("parallel",),
            vmem_limit_bytes=32 << 20,
        ),
    )(x2d, w1_bf, b1_2d, w2_pad, b2_pad)

    return out_padded[:B, :OUT_FEATURES]


def init_params(key):
    """Deterministic init mimicking torch.nn.Linear defaults:
    U(-1/sqrt(fan_in), 1/sqrt(fan_in)) for both weight and bias."""
    k1, k2, k3, k4 = jax.random.split(key, 4)
    bound1 = 1.0 / math.sqrt(IN_FEATURES)
    bound2 = 1.0 / math.sqrt(HIDDEN)
    # Stored as (in, out) — transpose of torch's (out, in) Linear.weight.
    w1 = jax.random.uniform(k1, (IN_FEATURES, HIDDEN), jnp.float32,
                            minval=-bound1, maxval=bound1)
    b1 = jax.random.uniform(k2, (HIDDEN,), jnp.float32,
                            minval=-bound1, maxval=bound1)
    w2 = jax.random.uniform(k3, (HIDDEN, OUT_FEATURES), jnp.float32,
                            minval=-bound2, maxval=bound2)
    b2 = jax.random.uniform(k4, (OUT_FEATURES,), jnp.float32,
                            minval=-bound2, maxval=bound2)
    return w1, b1, w2, b2


if __name__ == "__main__":
    key = jax.random.PRNGKey(0)
    k_x, k_p = jax.random.split(key)

    batch = 2
    x = jax.random.normal(k_x, (batch, 3, 32, 32), dtype=jnp.float32)
    w1, b1, w2, b2 = init_params(k_p)

    fwd = jax.jit(small_mlp_forward)
    out = fwd(x, w1, b1, w2, b2)
    jax.block_until_ready(out)

    # Sanity check against a pure-JAX fp32 reference (looser tolerance due to
    # bf16 matmul inputs; accumulation is fp32).
    ref = jnp.maximum(x.reshape(batch, -1) @ w1 + b1, 0.0) @ w2 + b2
    assert out.shape == (batch, OUT_FEATURES)
    assert jnp.allclose(out, ref, atol=3e-2, rtol=3e-2), (
        float(jnp.max(jnp.abs(out - ref))))

    print("KERNEL_OK")
</pallas_src>

<mosaic_0001>
module attributes {stable_mosaic.version = 11 : i64} {
  func.func @mlp_kernel(%arg0: i32, %arg1: memref<16x3072xf32, #tpu.memory_space<vmem>>, %arg2: memref<3072x512xbf16, #tpu.memory_space<vmem>>, %arg3: memref<1x512xf32, #tpu.memory_space<vmem>>, %arg4: memref<512x128xbf16, #tpu.memory_space<vmem>>, %arg5: memref<1x128xf32, #tpu.memory_space<vmem>>, %arg6: memref<16x128xf32, #tpu.memory_space<vmem>>) attributes {dimension_semantics = [#tpu.dimension_semantics<parallel>], iteration_bounds = array<i64: 1>, scalar_prefetch = 0 : i64, scratch_operands = 0 : i64, tpu.core_type = #tpu.core_type<tc>, window_params = [{transform_indices = @transform_0, window_bounds = array<i64: 16, 3072>}, {pipeline_mode = #tpu.pipeline_mode<synchronous>, transform_indices = @transform_1, window_bounds = array<i64: 3072, 512>}, {pipeline_mode = #tpu.pipeline_mode<synchronous>, transform_indices = @transform_2, window_bounds = array<i64: 1, 512>}, {pipeline_mode = #tpu.pipeline_mode<synchronous>, transform_indices = @transform_3, window_bounds = array<i64: 512, 128>}, {pipeline_mode = #tpu.pipeline_mode<synchronous>, transform_indices = @transform_4, window_bounds = array<i64: 1, 128>}, {transform_indices = @transform_5, window_bounds = array<i64: 16, 128>}]} {
    %c0 = arith.constant 0 : index
    %c0_0 = arith.constant 0 : index
    %0 = vector.load %arg1[%c0, %c0_0] : memref<16x3072xf32, #tpu.memory_space<vmem>>, vector<16x3072xf32>
    %1 = arith.truncf %0 : vector<16x3072xf32> to vector<16x3072xbf16>
    %c0_1 = arith.constant 0 : index
    %c0_2 = arith.constant 0 : index
    %2 = vector.load %arg2[%c0_1, %c0_2] : memref<3072x512xbf16, #tpu.memory_space<vmem>>, vector<3072x512xbf16>
    %cst = arith.constant dense<0.000000e+00> : vector<16x512xf32>
    %3 = tpu.matmul %1, %2, %cst {dimension_numbers = #tpu.dot_dimension_numbers<[1], [0], [0], [1], [0, 0, 1, 1], [], []>} : vector<16x3072xbf16>, vector<3072x512xbf16>, vector<16x512xf32> -> vector<16x512xf32>
    %c0_3 = arith.constant 0 : index
    %c0_4 = arith.constant 0 : index
    %4 = vector.load %arg3[%c0_3, %c0_4] : memref<1x512xf32, #tpu.memory_space<vmem>>, vector<1x512xf32>
    %5 = vector.broadcast %4 : vector<1x512xf32> to vector<16x512xf32>
    %6 = arith.addf %3, %5 : vector<16x512xf32>
    %cst_5 = arith.constant 0.000000e+00 : f32
    %7 = vector.broadcast %cst_5 : f32 to vector<16x512xf32>
    %8 = arith.maximumf %6, %7 : vector<16x512xf32>
    %9 = arith.truncf %8 : vector<16x512xf32> to vector<16x512xbf16>
    %c0_6 = arith.constant 0 : index
    %c0_7 = arith.constant 0 : index
    %10 = vector.load %arg4[%c0_6, %c0_7] : memref<512x128xbf16, #tpu.memory_space<vmem>>, vector<512x128xbf16>
    %cst_8 = arith.constant dense<0.000000e+00> : vector<16x128xf32>
    %11 = tpu.matmul %9, %10, %cst_8 {dimension_numbers = #tpu.dot_dimension_numbers<[1], [0], [0], [1], [0, 0, 1, 1], [], []>} : vector<16x512xbf16>, vector<512x128xbf16>, vector<16x128xf32> -> vector<16x128xf32>
    %c0_9 = arith.constant 0 : index
    %c0_10 = arith.constant 0 : index
    %12 = vector.load %arg5[%c0_9, %c0_10] : memref<1x128xf32, #tpu.memory_space<vmem>>, vector<1x128xf32>
    %13 = vector.broadcast %12 : vector<1x128xf32> to vector<16x128xf32>
    %14 = arith.addf %11, %13 : vector<16x128xf32>
    %c0_11 = arith.constant 0 : index
    %c0_12 = arith.constant 0 : index
    %15 = vector.load %arg6[%c0_11, %c0_12] : memref<16x128xf32, #tpu.memory_space<vmem>>, vector<16x128xf32>
    tpu.vector_store %arg6[%c0_11, %c0_12], %14 {strides = array<i32>} : memref<16x128xf32, #tpu.memory_space<vmem>>, vector<16x128xf32>,
    return
  }
  func.func @transform_0(%arg0: i32) -> (i32, i32) {
    %c0_i32 = arith.constant 0 : i32
    %c0_i32_0 = arith.constant 0 : i32
    return %arg0, %c0_i32 : i32, i32
  }
  func.func @transform_1(%arg0: i32) -> (i32, i32) {
    %c0_i32 = arith.constant 0 : i32
    %c0_i32_0 = arith.constant 0 : i32
    %c0_i32_1 = arith.constant 0 : i32
    return %c0_i32, %c0_i32_0 : i32, i32
  }
  func.func @transform_2(%arg0: i32) -> (i32, i32) {
    %c0_i32 = arith.constant 0 : i32
    %c0_i32_0 = arith.constant 0 : i32
    %c0_i32_1 = arith.constant 0 : i32
    return %c0_i32, %c0_i32_0 : i32, i32
  }
  func.func @transform_3(%arg0: i32) -> (i32, i32) {
    %c0_i32 = arith.constant 0 : i32
    %c0_i32_0 = arith.constant 0 : i32
    %c0_i32_1 = arith.constant 0 : i32
    return %c0_i32, %c0_i32_0 : i32, i32
  }
  func.func @transform_4(%arg0: i32) -> (i32, i32) {
    %c0_i32 = arith.constant 0 : i32
    %c0_i32_0 = arith.constant 0 : i32
    %c0_i32_1 = arith.constant 0 : i32
    return %c0_i32, %c0_i32_0 : i32, i32
  }
  func.func @transform_5(%arg0: i32) -> (i32, i32) {
    %c0_i32 = arith.constant 0 : i32
    %c0_i32_0 = arith.constant 0 : i32
    return %arg0, %c0_i32 : i32, i32
  }
}

</mosaic_0001>

<llo_original>
// kernel: small_mlp_forward.1
$region0: #{small_mlp_forward.1}
  #allocation0 [shape = 'u32[]', space=smem, size = 0x4, offset = 0x4, fixed_abs, tag = 'smem constant byte address 0x4 - core index']
  #allocation1 [shape = 'u32[144,128]{1,0:T(1,128)}', space=vmem, size = 0x12000, scoped, tag = 'internal scratch']
  %s0 = inlined_call_operand.vmem [shape: f32[16,3072], index: 0, kind: input, shape index: {}]
  %s1 = inlined_call_operand.vmem [shape: bf16[3072,512], index: 1, kind: input, shape index: {}]
  %s2 = inlined_call_operand.vmem [shape: f32[1,512], index: 2, kind: input, shape index: {}]
  %s3 = inlined_call_operand.vmem [shape: bf16[512,128], index: 3, kind: input, shape index: {}]
  %s4 = inlined_call_operand.vmem [shape: f32[1,128], index: 4, kind: input, shape index: {}]
  %s5 = inlined_call_operand.vmem [shape: f32[16,128], index: 5, kind: output, shape index: {}]
  %s6 = sld [smem:[#allocation0]]
  $region30: #{small_mlp_forward.1} parent=0
    _
  %s8 = ssub.s32 1, %s6
  %s9 = scalar_select 0, %s8, %s6
  // Predicated region
  $region2: #{small_mlp_forward.1} parent=0 // pred_check
    _
  $region3: #{small_mlp_forward.1} parent=0 // pred_check_branch
    %11 = sbr.rel (0) target = $region5
  $region4: #{small_mlp_forward.1} parent=0 // pred_region
    _
  $region5: #{small_mlp_forward.1} parent=0 // pred_fallthru
    _
  // Predicated region
  $region6: #{small_mlp_forward.1} parent=0 // pred_check
    _
  $region7: #{small_mlp_forward.1} parent=0 // pred_check_branch
    %13 = sbr.rel (0) target = $region9
  $region8: #{small_mlp_forward.1} parent=0 // pred_region
    _
  $region9: #{small_mlp_forward.1} parent=0 // pred_fallthru
    _
  // Predicated region
  $region10: #{small_mlp_forward.1} parent=0 // pred_check
    _
  $region11: #{small_mlp_forward.1} parent=0 // pred_check_branch
    %15 = sbr.rel (0) target = $region13
  $region12: #{small_mlp_forward.1} parent=0 // pred_region
    _
  $region13: #{small_mlp_forward.1} parent=0 // pred_fallthru
    _
  // Predicated region
  $region14: #{small_mlp_forward.1} parent=0 // pred_check
    _
  $region15: #{small_mlp_forward.1} parent=0 // pred_check_branch
    %17 = sbr.rel (0) target = $region17
  $region16: #{small_mlp_forward.1} parent=0 // pred_region
    _
  $region17: #{small_mlp_forward.1} parent=0 // pred_fallthru
    _
  // Predicated region
  $region18: #{small_mlp_forward.1} parent=0 // pred_check
    _
  $region19: #{small_mlp_forward.1} parent=0 // pred_check_branch
    %19 = sbr.rel (0) target = $region21
  $region20: #{small_mlp_forward.1} parent=0 // pred_region
    _
  $region21: #{small_mlp_forward.1} parent=0 // pred_fallthru
    _
  %v21 = vld [vmem:[%s0] sm:$0xff]
  %v22 = vld [vmem:[%s0 + $0x8] sm:$0xff]
  %v23 = vld [vmem:[%s0 + $0x10] sm:$0xff]
  %v24 = vld [vmem:[%s0 + $0x18] sm:$0xff]
  %v25 = vld [vmem:[%s0 + $0x20] sm:$0xff]
  %v26 = vld [vmem:[%s0 + $0x28] sm:$0xff]
  %v27 = vld [vmem:[%s0 + $0x30] sm:$0xff]
  %v28 = vld [vmem:[%s0 + $0x38] sm:$0xff]
  %v29 = vld [vmem:[%s0 + $0x40] sm:$0xff]
  %v30 = vld [vmem:[%s0 + $0x48] sm:$0xff]
  %v31 = vld [vmem:[%s0 + $0x50] sm:$0xff]
  %v32 = vld [vmem:[%s0 + $0x58] sm:$0xff]
  %v33 = vld [vmem:[%s0 + $0x60] sm:$0xff]
  %v34 = vld [vmem:[%s0 + $0x68] sm:$0xff]
  %v35 = vld [vmem:[%s0 + $0x70] sm:$0xff]
  %v36 = vld [vmem:[%s0 + $0x78] sm:$0xff]
  %v37 = vld [vmem:[%s0 + $0x80] sm:$0xff]
  %v38 = vld [vmem:[%s0 + $0x88] sm:$0xff]
  %v39 = vld [vmem:[%s0 + $0x90] sm:$0xff]
  %v40 = vld [vmem:[%s0 + $0x98] sm:$0xff]
  %v41 = vld [vmem:[%s0 + $0xa0] sm:$0xff]
  %v42 = vld [vmem:[%s0 + $0xa8] sm:$0xff]
  %v43 = vld [vmem:[%s0 + $0xb0] sm:$0xff]
  %v44 = vld [vmem:[%s0 + $0xb8] sm:$0xff]
  %v45 = vld [vmem:[%s0 + $0xc0] sm:$0xff]
  %v46 = vld [vmem:[%s0 + $0xc8] sm:$0xff]
  %v47 = vld [vmem:[%s0 + $0xd0] sm:$0xff]
  %v48 = vld [vmem:[%s0 + $0xd8] sm:$0xff]
  %v49 = vld [vmem:[%s0 + $0xe0] sm:$0xff]
  %v50 = vld [vmem:[%s0 + $0xe8] sm:$0xff]
  %v51 = vld [vmem:[%s0 + $0xf0] sm:$0xff]
  %v52 = vld [vmem:[%s0 + $0xf8] sm:$0xff]
  %v53 = vld [vmem:[%s0 + $0x100] sm:$0xff]
  %v54 = vld [vmem:[%s0 + $0x108] sm:$0xff]
  %v55 = vld [vmem:[%s0 + $0x110] sm:$0xff]
  %v56 = vld [vmem:[%s0 + $0x118] sm:$0xff]
  %v57 = vld [vmem:[%s0 + $0x120] sm:$0xff]
  %v58 = vld [vmem:[%s0 + $0x128] sm:$0xff]
  %v59 = vld [vmem:[%s0 + $0x130] sm:$0xff]
  %v60 = vld [vmem:[%s0 + $0x138] sm:$0xff]
  %v61 = vld [vmem:[%s0 + $0x140] sm:$0xff]
  %v62 = vld [vmem:[%s0 + $0x148] sm:$0xff]
  %v63 = vld [vmem:[%s0 + $0x150] sm:$0xff]
  %v64 = vld [vmem:[%s0 + $0x158] sm:$0xff]
  %v65 = vld [vmem:[%s0 + $0x160] sm:$0xff]
  %v66 = vld [vmem:[%s0 + $0x168] sm:$0xff]
  %v67 = vld [vmem:[%s0 + $0x170] sm:$0xff]
  %v68 = vld [vmem:[%s0 + $0x178] sm:$0xff]
  %v69 = vpack.c.bf16 %v45, %v21
  %v70 = vpack.c.bf16 %v46, %v22
  %v71 = vpack.c.bf16 %v47, %v23
  %v72 = vpack.c.bf16 %v48, %v24
  %v73 = vpack.c.bf16 %v49, %v25
  %v74 = vpack.c.bf16 %v50, %v26
  %v75 = vpack.c.bf16 %v51, %v27
  %v76 = vpack.c.bf16 %v52, %v28
  %v77 = vpack.c.bf16 %v53, %v29
  %v78 = vpack.c.bf16 %v54, %v30
  %v79 = vpack.c.bf16 %v55, %v31
  %v80 = vpack.c.bf16 %v56, %v32
  %v81 = vpack.c.bf16 %v57, %v33
  %v82 = vpack.c.bf16 %v58, %v34
  %v83 = vpack.c.bf16 %v59, %v35
  %v84 = vpack.c.bf16 %v60, %v36
  %v85 = vpack.c.bf16 %v61, %v37
  %v86 = vpack.c.bf16 %v62, %v38
  %v87 = vpack.c.bf16 %v63, %v39
  %v88 = vpack.c.bf16 %v64, %v40
  %v89 = vpack.c.bf16 %v65, %v41
  %v90 = vpack.c.bf16 %v66, %v42
  %v91 = vpack.c.bf16 %v67, %v43
  %v92 = vpack.c.bf16 %v68, %v44
  %v93 = vld [vmem:[%s1] sm:$0xff]
  %v94 = vld [vmem:[%s1 + $0x8] sm:$0xff]
  %v95 = vld [vmem:[%s1 + $0x10] sm:$0xff]
  %v96 = vld [vmem:[%s1 + $0x18] sm:$0xff]
  %v97 = vld [vmem:[%s1 + $0x20] sm:$0xff]
  %v98 = vld [vmem:[%s1 + $0x28] sm:$0xff]
  %v99 = vld [vmem:[%s1 + $0x30] sm:$0xff]
  %v100 = vld [vmem:[%s1 + $0x38] sm:$0xff]
  %v101 = vld [vmem:[%s1 + $0x40] sm:$0xff]
  %v102 = vld [vmem:[%s1 + $0x48] sm:$0xff]
  %v103 = vld [vmem:[%s1 + $0x50] sm:$0xff]
  %v104 = vld [vmem:[%s1 + $0x58] sm:$0xff]
  %v105 = vld [vmem:[%s1 + $0x60] sm:$0xff]
  %v106 = vld [vmem:[%s1 + $0x68] sm:$0xff]
  %v107 = vld [vmem:[%s1 + $0x70] sm:$0xff]
  %v108 = vld [vmem:[%s1 + $0x78] sm:$0xff]
  %v109 = vld [vmem:[%s1 + $0x80] sm:$0xff]
  %v110 = vld [vmem:[%s1 + $0x88] sm:$0xff]
  %v111 = vld [vmem:[%s1 + $0x90] sm:$0xff]
  %v112 = vld [vmem:[%s1 + $0x98] sm:$0xff]
  %v113 = vld [vmem:[%s1 + $0xa0] sm:$0xff]
  %v114 = vld [vmem:[%s1 + $0xa8] sm:$0xff]
  %v115 = vld [vmem:[%s1 + $0xb0] sm:$0xff]
  %v116 = vld [vmem:[%s1 + $0xb8] sm:$0xff]
  %v117 = vld [vmem:[%s1 + $0xc0] sm:$0xff]
  %v118 = vld [vmem:[%s1 + $0xc8] sm:$0xff]
  %v119 = vld [vmem:[%s1 + $0xd0] sm:$0xff]
  %v120 = vld [vmem:[%s1 + $0xd8] sm:$0xff]
  %v121 = vld [vmem:[%s1 + $0xe0] sm:$0xff]
  %v122 = vld [vmem:[%s1 + $0xe8] sm:$0xff]
  %v123 = vld [vmem:[%s1 + $0xf0] sm:$0xff]
  %v124 = vld [vmem:[%s1 + $0xf8] sm:$0xff]
  %v125 = vld [vmem:[%s1 + $0x100] sm:$0xff]
  %v126 = vld [vmem:[%s1 + $0x108] sm:$0xff]
  %v127 = vld [vmem:[%s1 + $0x110] sm:$0xff]
  %v128 = vld [vmem:[%s1 + $0x118] sm:$0xff]
  %v129 = vld [vmem:[%s1 + $0x120] sm:$0xff]
  %v130 = vld [vmem:[%s1 + $0x128] sm:$0xff]
  %v131 = vld [vmem:[%s1 + $0x130] sm:$0xff]
  %v132 = vld [vmem:[%s1 + $0x138] sm:$0xff]
  %v133 = vld [vmem:[%s1 + $0x140] sm:$0xff]
  %v134 = vld [vmem:[%s1 + $0x148] sm:$0xff]
  %v135 = vld [vmem:[%s1 + $0x150] sm:$0xff]
  %v136 = vld [vmem:[%s1 + $0x158] sm:$0xff]
  %v137 = vld [vmem:[%s1 + $0x160] sm:$0xff]
  %v138 = vld [vmem:[%s1 + $0x168] sm:$0xff]
  %v139 = vld [vmem:[%s1 + $0x170] sm:$0xff]
  %v140 = vld [vmem:[%s1 + $0x178] sm:$0xff]
  %v141 = vld [vmem:[%s1 + $0x180] sm:$0xff]
  %v142 = vld [vmem:[%s1 + $0x188] sm:$0xff]
  %v143 = vld [vmem:[%s1 + $0x190] sm:$0xff]
  %v144 = vld [vmem:[%s1 + $0x198] sm:$0xff]
  %v145 = vld [vmem:[%s1 + $0x1a0] sm:$0xff]
  %v146 = vld [vmem:[%s1 + $0x1a8] sm:$0xff]
  %v147 = vld [vmem:[%s1 + $0x1b0] sm:$0xff]
  %v148 = vld [vmem:[%s1 + $0x1b8] sm:$0xff]
  %v149 = vld [vmem:[%s1 + $0x1c0] sm:$0xff]
  %v150 = vld [vmem:[%s1 + $0x1c8] sm:$0xff]
  %v151 = vld [vmem:[%s1 + $0x1d0] sm:$0xff]
  %v152 = vld [vmem:[%s1 + $0x1d8] sm:$0xff]
  %v153 = vld [vmem:[%s1 + $0x1e0] sm:$0xff]
  %v154 = vld [vmem:[%s1 + $0x1e8] sm:$0xff]
  %v155 = vld [vmem:[%s1 + $0x1f0] sm:$0xff]
  %v156 = vld [vmem:[%s1 + $0x1f8] sm:$0xff]
  %v157 = vld [vmem:[%s1 + $0x200] sm:$0xff]
  %v158 = vld [vmem:[%s1 + $0x208] sm:$0xff]
  %v159 = vld [vmem:[%s1 + $0x210] sm:$0xff]
  %v160 = vld [vmem:[%s1 + $0x218] sm:$0xff]
  %v161 = vld [vmem:[%s1 + $0x220] sm:$0xff]
  %v162 = vld [vmem:[%s1 + $0x228] sm:$0xff]
  %v163 = vld [vmem:[%s1 + $0x230] sm:$0xff]
  %v164 = vld [vmem:[%s1 + $0x238] sm:$0xff]
  %v165 = vld [vmem:[%s1 + $0x240] sm:$0xff]
  %v166 = vld [vmem:[%s1 + $0x248] sm:$0xff]
  %v167 = vld [vmem:[%s1 + $0x250] sm:$0xff]
  %v168 = vld [vmem:[%s1 + $0x258] sm:$0xff]
  %v169 = vld [vmem:[%s1 + $0x260] sm:$0xff]
  %v170 = vld [vmem:[%s1 + $0x268] sm:$0xff]
  %v171 = vld [vmem:[%s1 + $0x270] sm:$0xff]
  %v172 = vld [vmem:[%s1 + $0x278] sm:$0xff]
  %v173 = vld [vmem:[%s1 + $0x280] sm:$0xff]
  %v174 = vld [vmem:[%s1 + $0x288] sm:$0xff]
  %v175 = vld [vmem:[%s1 + $0x290] sm:$0xff]
  %v176 = vld [vmem:[%s1 + $0x298] sm:$0xff]
  %v177 = vld [vmem:[%s1 + $0x2a0] sm:$0xff]
  %v178 = vld [vmem:[%s1 + $0x2a8] sm:$0xff]
  %v179 = vld [vmem:[%s1 + $0x2b0] sm:$0xff]
  %v180 = vld [vmem:[%s1 + $0x2b8] sm:$0xff]
  %v181 = vld [vmem:[%s1 + $0x2c0] sm:$0xff]
  %v182 = vld [vmem:[%s1 + $0x2c8] sm:$0xff]
  %v183 = vld [vmem:[%s1 + $0x2d0] sm:$0xff]
  %v184 = vld [vmem:[%s1 + $0x2d8] sm:$0xff]
  %v185 = vld [vmem:[%s1 + $0x2e0] sm:$0xff]
  %v186 = vld [vmem:[%s1 + $0x2e8] sm:$0xff]
  %v187 = vld [vmem:[%s1 + $0x2f0] sm:$0xff]
  %v188 = vld [vmem:[%s1 + $0x2f8] sm:$0xff]
  %v189 = vld [vmem:[%s1 + $0x300] sm:$0xff]
  %v190 = vld [vmem:[%s1 + $0x308] sm:$0xff]
  %v191 = vld [vmem:[%s1 + $0x310] sm:$0xff]
  %v192 = vld [vmem:[%s1 + $0x318] sm:$0xff]
  %v193 = vld [vmem:[%s1 + $0x320] sm:$0xff]
  %v194 = vld [vmem:[%s1 + $0x328] sm:$0xff]
  %v195 = vld [vmem:[%s1 + $0x330] sm:$0xff]
  %v196 = vld [vmem:[%s1 + $0x338] sm:$0xff]
  %v197 = vld [vmem:[%s1 + $0x340] sm:$0xff]
  %v198 = vld [vmem:[%s1 + $0x348] sm:$0xff]
  %v199 = vld [vmem:[%s1 + $0x350] sm:$0xff]
  %v200 = vld [vmem:[%s1 + $0x358] sm:$0xff]
  %v201 = vld [vmem:[%s1 + $0x360] sm:$0xff]
  %v202 = vld [vmem:[%s1 + $0x368] sm:$0xff]
  %v203 = vld [vmem:[%s1 + $0x370] sm:$0xff]
  %v204 = vld [vmem:[%s1 + $0x378] sm:$0xff]
  %v205 = vld [vmem:[%s1 + $0x380] sm:$0xff]
  %v206 = vld [vmem:[%s1 + $0x388] sm:$0xff]
  %v207 = vld [vmem:[%s1 + $0x390] sm:$0xff]
  %v208 = vld [vmem:[%s1 + $0x398] sm:$0xff]
  %v209 = vld [vmem:[%s1 + $0x3a0] sm:$0xff]
  %v210 = vld [vmem:[%s1 + $0x3a8] sm:$0xff]
  %v211 = vld [vmem:[%s1 + $0x3b0] sm:$0xff]
  %v212 = vld [vmem:[%s1 + $0x3b8] sm:$0xff]
  %v213 = vld [vmem:[%s1 + $0x3c0] sm:$0xff]
  %v214 = vld [vmem:[%s1 + $0x3c8] sm:$0xff]
  %v215 = vld [vmem:[%s1 + $0x3d0] sm:$0xff]
  %v216 = vld [vmem:[%s1 + $0x3d8] sm:$0xff]
  %v217 = vld [vmem:[%s1 + $0x3e0] sm:$0xff]
  %v218 = vld [vmem:[%s1 + $0x3e8] sm:$0xff]
  %v219 = vld [vmem:[%s1 + $0x3f0] sm:$0xff]
  %v220 = vld [vmem:[%s1 + $0x3f8] sm:$0xff]
  %v221 = vld [vmem:[%s1 + $0x400] sm:$0xff]
  %v222 = vld [vmem:[%s1 + $0x408] sm:$0xff]
  %v223 = vld [vmem:[%s1 + $0x410] sm:$0xff]
  %v224 = vld [vmem:[%s1 + $0x418] sm:$0xff]
  %v225 = vld [vmem:[%s1 + $0x420] sm:$0xff]
  %v226 = vld [vmem:[%s1 + $0x428] sm:$0xff]
  %v227 = vld [vmem:[%s1 + $0x430] sm:$0xff]
  %v228 = vld [vmem:[%s1 + $0x438] sm:$0xff]
  %v229 = vld [vmem:[%s1 + $0x440] sm:$0xff]
  %v230 = vld [vmem:[%s1 + $0x448] sm:$0xff]
  %v231 = vld [vmem:[%s1 + $0x450] sm:$0xff]
  %v232 = vld [vmem:[%s1 + $0x458] sm:$0xff]
  %v233 = vld [vmem:[%s1 + $0x460] sm:$0xff]
  %v234 = vld [vmem:[%s1 + $0x468] sm:$0xff]
  %v235 = vld [vmem:[%s1 + $0x470] sm:$0xff]
  %v236 = vld [vmem:[%s1 + $0x478] sm:$0xff]
  %v237 = vld [vmem:[%s1 + $0x480] sm:$0xff]
  %v238 = vld [vmem:[%s1 + $0x488] sm:$0xff]
  %v239 = vld [vmem:[%s1 + $0x490] sm:$0xff]
  %v240 = vld [vmem:[%s1 + $0x498] sm:$0xff]
  %v241 = vld [vmem:[%s1 + $0x4a0] sm:$0xff]
  %v242 = vld [vmem:[%s1 + $0x4a8] sm:$0xff]
  %v243 = vld [vmem:[%s1 + $0x4b0] sm:$0xff]
  %v244 = vld [vmem:[%s1 + $0x4b8] sm:$0xff]
  %v245 = vld [vmem:[%s1 + $0x4c0] sm:$0xff]
  %v246 = vld [vmem:[%s1 + $0x4c8] sm:$0xff]
  %v247 = vld [vmem:[%s1 + $0x4d0] sm:$0xff]
  %v248 = vld [vmem:[%s1 + $0x4d8] sm:$0xff]
  %v249 = vld [vmem:[%s1 + $0x4e0] sm:$0xff]
  %v250 = vld [vmem:[%s1 + $0x4e8] sm:$0xff]
  %v251 = vld [vmem:[%s1 + $0x4f0] sm:$0xff]
  %v252 = vld [vmem:[%s1 + $0x4f8] sm:$0xff]
  %v253 = vld [vmem:[%s1 + $0x500] sm:$0xff]
  %v254 = vld [vmem:[%s1 + $0x508] sm:$0xff]
  %v255 = vld [vmem:[%s1 + $0x510] sm:$0xff]
  %v256 = vld [vmem:[%s1 + $0x518] sm:$0xff]
  %v257 = vld [vmem:[%s1 + $0x520] sm:$0xff]
  %v258 = vld [vmem:[%s1 + $0x528] sm:$0xff]
  %v259 = vld [vmem:[%s1 + $0x530] sm:$0xff]
  %v260 = vld [vmem:[%s1 + $0x538] sm:$0xff]
  %v261 = vld [vmem:[%s1 + $0x540] sm:$0xff]
  %v262 = vld [vmem:[%s1 + $0x548] sm:$0xff]
  %v263 = vld [vmem:[%s1 + $0x550] sm:$0xff]
  %v264 = vld [vmem:[%s1 + $0x558] sm:$0xff]
  %v265 = vld [vmem:[%s1 + $0x560] sm:$0xff]
  %v266 = vld [vmem:[%s1 + $0x568] sm:$0xff]
  %v267 = vld [vmem:[%s1 + $0x570] sm:$0xff]
  %v268 = vld [vmem:[%s1 + $0x578] sm:$0xff]
  %v269 = vld [vmem:[%s1 + $0x580] sm:$0xff]
  %v270 = vld [vmem:[%s1 + $0x588] sm:$0xff]
  %v271 = vld [vmem:[%s1 + $0x590] sm:$0xff]
  %v272 = vld [vmem:[%s1 + $0x598] sm:$0xff]
  %v273 = vld [vmem:[%s1 + $0x5a0] sm:$0xff]
  %v274 = vld [vmem:[%s1 + $0x5a8] sm:$0xff]
  %v275 = vld [vmem:[%s1 + $0x5b0] sm:$0xff]
  %v276 = vld [vmem:[%s1 + $0x5b8] sm:$0xff]
  %v277 = vld [vmem:[%s1 + $0x5c0] sm:$0xff]
  %v278 = vld [vmem:[%s1 + $0x5c8] sm:$0xff]
  %v279 = vld [vmem:[%s1 + $0x5d0] sm:$0xff]
  %v280 = vld [vmem:[%s1 + $0x5d8] sm:$0xff]
  %v281 = vld [vmem:[%s1 + $0x5e0] sm:$0xff]
  %v282 = vld [vmem:[%s1 + $0x5e8] sm:$0xff]
  %v283 = vld [vmem:[%s1 + $0x5f0] sm:$0xff]
  %v284 = vld [vmem:[%s1 + $0x5f8] sm:$0xff]
  %v285 = vld [vmem:[%s1 + $0x600] sm:$0xff]
  %v286 = vld [vmem:[%s1 + $0x608] sm:$0xff]
  %v287 = vld [vmem:[%s1 + $0x610] sm:$0xff]
  %v288 = vld [vmem:[%s1 + $0x618] sm:$0xff]
  %v289 = vld [vmem:[%s1 + $0x620] sm:$0xff]
  %v290 = vld [vmem:[%s1 + $0x628] sm:$0xff]
  %v291 = vld [vmem:[%s1 + $0x630] sm:$0xff]
  %v292 = vld [vmem:[%s1 + $0x638] sm:$0xff]
  %v293 = vld [vmem:[%s1 + $0x640] sm:$0xff]
  %v294 = vld [vmem:[%s1 + $0x648] sm:$0xff]
  %v295 = vld [vmem:[%s1 + $0x650] sm:$0xff]
  %v296 = vld [vmem:[%s1 + $0x658] sm:$0xff]
  %v297 = vld [vmem:[%s1 + $0x660] sm:$0xff]
  %v298 = vld [vmem:[%s1 + $0x668] sm:$0xff]
  %v299 = vld [vmem:[%s1 + $0x670] sm:$0xff]
  %v300 = vld [vmem:[%s1 + $0x678] sm:$0xff]
  %v301 = vld [vmem:[%s1 + $0x680] sm:$0xff]
  %v302 = vld [vmem:[%s1 + $0x688] sm:$0xff]
  %v303 = vld [vmem:[%s1 + $0x690] sm:$0xff]
  %v304 = vld [vmem:[%s1 + $0x698] sm:$0xff]
  %v305 = vld [vmem:[%s1 + $0x6a0] sm:$0xff]
  %v306 = vld [vmem:[%s1 + $0x6a8] sm:$0xff]
  %v307 = vld [vmem:[%s1 + $0x6b0] sm:$0xff]
  %v308 = vld [vmem:[%s1 + $0x6b8] sm:$0xff]
  %v309 = vld [vmem:[%s1 + $0x6c0] sm:$0xff]
  %v310 = vld [vmem:[%s1 + $0x6c8] sm:$0xff]
  %v311 = vld [vmem:[%s1 + $0x6d0] sm:$0xff]
  %v312 = vld [vmem:[%s1 + $0x6d8] sm:$0xff]
  %v313 = vld [vmem:[%s1 + $0x6e0] sm:$0xff]
  %v314 = vld [vmem:[%s1 + $0x6e8] sm:$0xff]
  %v315 = vld [vmem:[%s1 + $0x6f0] sm:$0xff]
  %v316 = vld [vmem:[%s1 + $0x6f8] sm:$0xff]
  %v317 = vld [vmem:[%s1 + $0x700] sm:$0xff]
  %v318 = vld [vmem:[%s1 + $0x708] sm:$0xff]
  %v319 = vld [vmem:[%s1 + $0x710] sm:$0xff]
  %v320 = vld [vmem:[%s1 + $0x718] sm:$0xff]
  %v321 = vld [vmem:[%s1 + $0x720] sm:$0xff]
  %v322 = vld [vmem:[%s1 + $0x728] sm:$0xff]
  %v323 = vld [vmem:[%s1 + $0x730] sm:$0xff]
  %v324 = vld [vmem:[%s1 + $0x738] sm:$0xff]
  %v325 = vld [vmem:[%s1 + $0x740] sm:$0xff]
  %v326 = vld [vmem:[%s1 + $0x748] sm:$0xff]
  %v327 = vld [vmem:[%s1 + $0x750] sm:$0xff]
  %v328 = vld [vmem:[%s1 + $0x758] sm:$0xff]
  %v329 = vld [vmem:[%s1 + $0x760] sm:$0xff]
  %v330 = vld [vmem:[%s1 + $0x768] sm:$0xff]
  %v331 = vld [vmem:[%s1 + $0x770] sm:$0xff]
  %v332 = vld [vmem:[%s1 + $0x778] sm:$0xff]
  %v333 = vld [vmem:[%s1 + $0x780] sm:$0xff]
  %v334 = vld [vmem:[%s1 + $0x788] sm:$0xff]
  %v335 = vld [vmem:[%s1 + $0x790] sm:$0xff]
  %v336 = vld [vmem:[%s1 + $0x798] sm:$0xff]
  %v337 = vld [vmem:[%s1 + $0x7a0] sm:$0xff]
  %v338 = vld [vmem:[%s1 + $0x7a8] sm:$0xff]
  %v339 = vld [vmem:[%s1 + $0x7b0] sm:$0xff]
  %v340 = vld [vmem:[%s1 + $0x7b8] sm:$0xff]
  %v341 = vld [vmem:[%s1 + $0x7c0] sm:$0xff]
  %v342 = vld [vmem:[%s1 + $0x7c8] sm:$0xff]
  %v343 = vld [vmem:[%s1 + $0x7d0] sm:$0xff]
  %v344 = vld [vmem:[%s1 + $0x7d8] sm:$0xff]
  %v345 = vld [vmem:[%s1 + $0x7e0] sm:$0xff]
  %v346 = vld [vmem:[%s1 + $0x7e8] sm:$0xff]
  %v347 = vld [vmem:[%s1 + $0x7f0] sm:$0xff]
  %v348 = vld [vmem:[%s1 + $0x7f8] sm:$0xff]
  %v349 = vld [vmem:[%s1 + $0x800] sm:$0xff]
  %v350 = vld [vmem:[%s1 + $0x808] sm:$0xff]
  %v351 = vld [vmem:[%s1 + $0x810] sm:$0xff]
  %v352 = vld [vmem:[%s1 + $0x818] sm:$0xff]
  %v353 = vld [vmem:[%s1 + $0x820] sm:$0xff]
  %v354 = vld [vmem:[%s1 + $0x828] sm:$0xff]
  %v355 = vld [vmem:[%s1 + $0x830] sm:$0xff]
  %v356 = vld [vmem:[%s1 + $0x838] sm:$0xff]
  %v357 = vld [vmem:[%s1 + $0x840] sm:$0xff]
  %v358 = vld [vmem:[%s1 + $0x848] sm:$0xff]
  %v359 = vld [vmem:[%s1 + $0x850] sm:$0xff]
  %v360 = vld [vmem:[%s1 + $0x858] sm:$0xff]
  %v361 = vld [vmem:[%s1 + $0x860] sm:$0xff]
  %v362 = vld [vmem:[%s1 + $0x868] sm:$0xff]
  %v363 = vld [vmem:[%s1 + $0x870] sm:$0xff]
  %v364 = vld [vmem:[%s1 + $0x878] sm:$0xff]
  %v365 = vld [vmem:[%s1 + $0x880] sm:$0xff]
  %v366 = vld [vmem:[%s1 + $0x888] sm:$0xff]
  %v367 = vld [vmem:[%s1 + $0x890] sm:$0xff]
  %v368 = vld [vmem:[%s1 + $0x898] sm:$0xff]
  %v369 = vld [vmem:[%s1 + $0x8a0] sm:$0xff]
  %v370 = vld [vmem:[%s1 + $0x8a8] sm:$0xff]
  %v371 = vld [vmem:[%s1 + $0x8b0] sm:$0xff]
  %v372 = vld [vmem:[%s1 + $0x8b8] sm:$0xff]
  %v373 = vld [vmem:[%s1 + $0x8c0] sm:$0xff]
  %v374 = vld [vmem:[%s1 + $0x8c8] sm:$0xff]
  %v375 = vld [vmem:[%s1 + $0x8d0] sm:$0xff]
  %v376 = vld [vmem:[%s1 + $0x8d8] sm:$0xff]
  %v377 = vld [vmem:[%s1 + $0x8e0] sm:$0xff]
  %v378 = vld [vmem:[%s1 + $0x8e8] sm:$0xff]
  %v379 = vld [vmem:[%s1 + $0x8f0] sm:$0xff]
  %v380 = vld [vmem:[%s1 + $0x8f8] sm:$0xff]
  %v381 = vld [vmem:[%s1 + $0x900] sm:$0xff]
  %v382 = vld [vmem:[%s1 + $0x908] sm:$0xff]
  %v383 = vld [vmem:[%s1 + $0x910] sm:$0xff]
  %v384 = vld [vmem:[%s1 + $0x918] sm:$0xff]
  %v385 = vld [vmem:[%s1 + $0x920] sm:$0xff]
  %v386 = vld [vmem:[%s1 + $0x928] sm:$0xff]
  %v387 = vld [vmem:[%s1 + $0x930] sm:$0xff]
  %v388 = vld [vmem:[%s1 + $0x938] sm:$0xff]
  %v389 = vld [vmem:[%s1 + $0x940] sm:$0xff]
  %v390 = vld [vmem:[%s1 + $0x948] sm:$0xff]
  %v391 = vld [vmem:[%s1 + $0x950] sm:$0xff]
  %v392 = vld [vmem:[%s1 + $0x958] sm:$0xff]
  %v393 = vld [vmem:[%s1 + $0x960] sm:$0xff]
  %v394 = vld [vmem:[%s1 + $0x968] sm:$0xff]
  %v395 = vld [vmem:[%s1 + $0x970] sm:$0xff]
  %v396 = vld [vmem:[%s1 + $0x978] sm:$0xff]
  %v397 = vld [vmem:[%s1 + $0x980] sm:$0xff]
  %v398 = vld [vmem:[%s1 + $0x988] sm:$0xff]
  %v399 = vld [vmem:[%s1 + $0x990] sm:$0xff]
  %v400 = vld [vmem:[%s1 + $0x998] sm:$0xff]
  %v401 = vld [vmem:[%s1 + $0x9a0] sm:$0xff]
  %v402 = vld [vmem:[%s1 + $0x9a8] sm:$0xff]
  %v403 = vld [vmem:[%s1 + $0x9b0] sm:$0xff]
  %v404 = vld [vmem:[%s1 + $0x9b8] sm:$0xff]
  %v405 = vld [vmem:[%s1 + $0x9c0] sm:$0xff]
  %v406 = vld [vmem:[%s1 + $0x9c8] sm:$0xff]
  %v407 = vld [vmem:[%s1 + $0x9d0] sm:$0xff]
  %v408 = vld [vmem:[%s1 + $0x9d8] sm:$0xff]
  %v409 = vld [vmem:[%s1 + $0x9e0] sm:$0xff]
  %v410 = vld [vmem:[%s1 + $0x9e8] sm:$0xff]
  %v411 = vld [vmem:[%s1 + $0x9f0] sm:$0xff]
  %v412 = vld [vmem:[%s1 + $0x9f8] sm:$0xff]
  %v413 = vld [vmem:[%s1 + $0xa00] sm:$0xff]
  %v414 = vld [vmem:[%s1 + $0xa08] sm:$0xff]
  %v415 = vld [vmem:[%s1 + $0xa10] sm:$0xff]
  %v416 = vld [vmem:[%s1 + $0xa18] sm:$0xff]
  %v417 = vld [vmem:[%s1 + $0xa20] sm:$0xff]
  %v418 = vld [vmem:[%s1 + $0xa28] sm:$0xff]
  %v419 = vld [vmem:[%s1 + $0xa30] sm:$0xff]
  %v420 = vld [vmem:[%s1 + $0xa38] sm:$0xff]
  %v421 = vld [vmem:[%s1 + $0xa40] sm:$0xff]
  %v422 = vld [vmem:[%s1 + $0xa48] sm:$0xff]
  %v423 = vld [vmem:[%s1 + $0xa50] sm:$0xff]
  %v424 = vld [vmem:[%s1 + $0xa58] sm:$0xff]
  %v425 = vld [vmem:[%s1 + $0xa60] sm:$0xff]
  %v426 = vld [vmem:[%s1 + $0xa68] sm:$0xff]
  %v427 = vld [vmem:[%s1 + $0xa70] sm:$0xff]
  %v428 = vld [vmem:[%s1 + $0xa78] sm:$0xff]
  %v429 = vld [vmem:[%s1 + $0xa80] sm:$0xff]
  %v430 = vld [vmem:[%s1 + $0xa88] sm:$0xff]
  %v431 = vld [vmem:[%s1 + $0xa90] sm:$0xff]
  %v432 = vld [vmem:[%s1 + $0xa98] sm:$0xff]
  %v433 = vld [vmem:[%s1 + $0xaa0] sm:$0xff]
  %v434 = vld [vmem:[%s1 + $0xaa8] sm:$0xff]
  %v435 = vld [vmem:[%s1 + $0xab0] sm:$0xff]
  %v436 = vld [vmem:[%s1 + $0xab8] sm:$0xff]
  %v437 = vld [vmem:[%s1 + $0xac0] sm:$0xff]
  %v438 = vld [vmem:[%s1 + $0xac8] sm:$0xff]
  %v439 = vld [vmem:[%s1 + $0xad0] sm:$0xff]
  %v440 = vld [vmem:[%s1 + $0xad8] sm:$0xff]
  %v441 = vld [vmem:[%s1 + $0xae0] sm:$0xff]
  %v442 = vld [vmem:[%s1 + $0xae8] sm:$0xff]
  %v443 = vld [vmem:[%s1 + $0xaf0] sm:$0xff]
  %v444 = vld [vmem:[%s1 + $0xaf8] sm:$0xff]
  %v445 = vld [vmem:[%s1 + $0xb00] sm:$0xff]
  %v446 = vld [vmem:[%s1 + $0xb08] sm:$0xff]
  %v447 = vld [vmem:[%s1 + $0xb10] sm:$0xff]
  %v448 = vld [vmem:[%s1 + $0xb18] sm:$0xff]
  %v449 = vld [vmem:[%s1 + $0xb20] sm:$0xff]
  %v450 = vld [vmem:[%s1 + $0xb28] sm:$0xff]
  %v451 = vld [vmem:[%s1 + $0xb30] sm:$0xff]
  %v452 = vld [vmem:[%s1 + $0xb38] sm:$0xff]
  %v453 = vld [vmem:[%s1 + $0xb40] sm:$0xff]
  %v454 = vld [vmem:[%s1 + $0xb48] sm:$0xff]
  %v455 = vld [vmem:[%s1 + $0xb50] sm:$0xff]
  %v456 = vld [vmem:[%s1 + $0xb58] sm:$0xff]
  %v457 = vld [vmem:[%s1 + $0xb60] sm:$0xff]
  %v458 = vld [vmem:[%s1 + $0xb68] sm:$0xff]
  %v459 = vld [vmem:[%s1 + $0xb70] sm:$0xff]
  %v460 = vld [vmem:[%s1 + $0xb78] sm:$0xff]
  %v461 = vld [vmem:[%s1 + $0xb80] sm:$0xff]
  %v462 = vld [vmem:[%s1 + $0xb88] sm:$0xff]
  %v463 = vld [vmem:[%s1 + $0xb90] sm:$0xff]
  %v464 = vld [vmem:[%s1 + $0xb98] sm:$0xff]
  %v465 = vld [vmem:[%s1 + $0xba0] sm:$0xff]
  %v466 = vld [vmem:[%s1 + $0xba8] sm:$0xff]
  %v467 = vld [vmem:[%s1 + $0xbb0] sm:$0xff]
  %v468 = vld [vmem:[%s1 + $0xbb8] sm:$0xff]
  %v469 = vld [vmem:[%s1 + $0xbc0] sm:$0xff]
  %v470 = vld [vmem:[%s1 + $0xbc8] sm:$0xff]
  %v471 = vld [vmem:[%s1 + $0xbd0] sm:$0xff]
  %v472 = vld [vmem:[%s1 + $0xbd8] sm:$0xff]
  %v473 = vld [vmem:[%s1 + $0xbe0] sm:$0xff]
  %v474 = vld [vmem:[%s1 + $0xbe8] sm:$0xff]
  %v475 = vld [vmem:[%s1 + $0xbf0] sm:$0xff]
  %v476 = vld [vmem:[%s1 + $0xbf8] sm:$0xff]
  %v477 = vld [vmem:[%s1 + $0xc00] sm:$0xff]
  %v478 = vld [vmem:[%s1 + $0xc08] sm:$0xff]
  %v479 = vld [vmem:[%s1 + $0xc10] sm:$0xff]
  %v480 = vld [vmem:[%s1 + $0xc18] sm:$0xff]
  %v481 = vld [vmem:[%s1 + $0xc20] sm:$0xff]
  %v482 = vld [vmem:[%s1 + $0xc28] sm:$0xff]
  %v483 = vld [vmem:[%s1 + $0xc30] sm:$0xff]
  %v484 = vld [vmem:[%s1 + $0xc38] sm:$0xff]
  %v485 = vld [vmem:[%s1 + $0xc40] sm:$0xff]
  %v486 = vld [vmem:[%s1 + $0xc48] sm:$0xff]
  %v487 = vld [vmem:[%s1 + $0xc50] sm:$0xff]
  %v488 = vld [vmem:[%s1 + $0xc58] sm:$0xff]
  %v489 = vld [vmem:[%s1 + $0xc60] sm:$0xff]
  %v490 = vld [vmem:[%s1 + $0xc68] sm:$0xff]
  %v491 = vld [vmem:[%s1 + $0xc70] sm:$0xff]
  %v492 = vld [vmem:[%s1 + $0xc78] sm:$0xff]
  %v493 = vld [vmem:[%s1 + $0xc80] sm:$0xff]
  %v494 = vld [vmem:[%s1 + $0xc88] sm:$0xff]
  %v495 = vld [vmem:[%s1 + $0xc90] sm:$0xff]
  %v496 = vld [vmem:[%s1 + $0xc98] sm:$0xff]
  %v497 = vld [vmem:[%s1 + $0xca0] sm:$0xff]
  %v498 = vld [vmem:[%s1 + $0xca8] sm:$0xff]
  %v499 = vld [vmem:[%s1 + $0xcb0] sm:$0xff]
  %v500 = vld [vmem:[%s1 + $0xcb8] sm:$0xff]
  %v501 = vld [vmem:[%s1 + $0xcc0] sm:$0xff]
  %v502 = vld [vmem:[%s1 + $0xcc8] sm:$0xff]
  %v503 = vld [vmem:[%s1 + $0xcd0] sm:$0xff]
  %v504 = vld [vmem:[%s1 + $0xcd8] sm:$0xff]
  %v505 = vld [vmem:[%s1 + $0xce0] sm:$0xff]
  %v506 = vld [vmem:[%s1 + $0xce8] sm:$0xff]
  %v507 = vld [vmem:[%s1 + $0xcf0] sm:$0xff]
  %v508 = vld [vmem:[%s1 + $0xcf8] sm:$0xff]
  %v509 = vld [vmem:[%s1 + $0xd00] sm:$0xff]
  %v510 = vld [vmem:[%s1 + $0xd08] sm:$0xff]
  %v511 = vld [vmem:[%s1 + $0xd10] sm:$0xff]
  %v512 = vld [vmem:[%s1 + $0xd18] sm:$0xff]
  %v513 = vld [vmem:[%s1 + $0xd20] sm:$0xff]
  %v514 = vld [vmem:[%s1 + $0xd28] sm:$0xff]
  %v515 = vld [vmem:[%s1 + $0xd30] sm:$0xff]
  %v516 = vld [vmem:[%s1 + $0xd38] sm:$0xff]
  %v517 = vld [vmem:[%s1 + $0xd40] sm:$0xff]
  %v518 = vld [vmem:[%s1 + $0xd48] sm:$0xff]
  %v519 = vld [vmem:[%s1 + $0xd50] sm:$0xff]
  %v520 = vld [vmem:[%s1 + $0xd58] sm:$0xff]
  %v521 = vld [vmem:[%s1 + $0xd60] sm:$0xff]
  %v522 = vld [vmem:[%s1 + $0xd68] sm:$0xff]
  %v523 = vld [vmem:[%s1 + $0xd70] sm:$0xff]
  %v524 = vld [vmem:[%s1 + $0xd78] sm:$0xff]
  %v525 = vld [vmem:[%s1 + $0xd80] sm:$0xff]
  %v526 = vld [vmem:[%s1 + $0xd88] sm:$0xff]
  %v527 = vld [vmem:[%s1 + $0xd90] sm:$0xff]
  %v528 = vld [vmem:[%s1 + $0xd98] sm:$0xff]
  %v529 = vld [vmem:[%s1 + $0xda0] sm:$0xff]
  %v530 = vld [vmem:[%s1 + $0xda8] sm:$0xff]
  %v531 = vld [vmem:[%s1 + $0xdb0] sm:$0xff]
  %v532 = vld [vmem:[%s1 + $0xdb8] sm:$0xff]
  %v533 = vld [vmem:[%s1 + $0xdc0] sm:$0xff]
  %v534 = vld [vmem:[%s1 + $0xdc8] sm:$0xff]
  %v535 = vld [vmem:[%s1 + $0xdd0] sm:$0xff]
  %v536 = vld [vmem:[%s1 + $0xdd8] sm:$0xff]
  %v537 = vld [vmem:[%s1 + $0xde0] sm:$0xff]
  %v538 = vld [vmem:[%s1 + $0xde8] sm:$0xff]
  %v539 = vld [vmem:[%s1 + $0xdf0] sm:$0xff]
  %v540 = vld [vmem:[%s1 + $0xdf8] sm:$0xff]
  %v541 = vld [vmem:[%s1 + $0xe00] sm:$0xff]
  %v542 = vld [vmem:[%s1 + $0xe08] sm:$0xff]
  %v543 = vld [vmem:[%s1 + $0xe10] sm:$0xff]
  %v544 = vld [vmem:[%s1 + $0xe18] sm:$0xff]
  %v545 = vld [vmem:[%s1 + $0xe20] sm:$0xff]
  %v546 = vld [vmem:[%s1 + $0xe28] sm:$0xff]
  %v547 = vld [vmem:[%s1 + $0xe30] sm:$0xff]
  %v548 = vld [vmem:[%s1 + $0xe38] sm:$0xff]
  %v549 = vld [vmem:[%s1 + $0xe40] sm:$0xff]
  %v550 = vld [vmem:[%s1 + $0xe48] sm:$0xff]
  %v551 = vld [vmem:[%s1 + $0xe50] sm:$0xff]
  %v552 = vld [vmem:[%s1 + $0xe58] sm:$0xff]
  %v553 = vld [vmem:[%s1 + $0xe60] sm:$0xff]
  %v554 = vld [vmem:[%s1 + $0xe68] sm:$0xff]
  %v555 = vld [vmem:[%s1 + $0xe70] sm:$0xff]
  %v556 = vld [vmem:[%s1 + $0xe78] sm:$0xff]
  %v557 = vld [vmem:[%s1 + $0xe80] sm:$0xff]
  %v558 = vld [vmem:[%s1 + $0xe88] sm:$0xff]
  %v559 = vld [vmem:[%s1 + $0xe90] sm:$0xff]
  %v560 = vld [vmem:[%s1 + $0xe98] sm:$0xff]
  %v561 = vld [vmem:[%s1 + $0xea0] sm:$0xff]
  %v562 = vld [vmem:[%s1 + $0xea8] sm:$0xff]
  %v563 = vld [vmem:[%s1 + $0xeb0] sm:$0xff]
  %v564 = vld [vmem:[%s1 + $0xeb8] sm:$0xff]
  %v565 = vld [vmem:[%s1 + $0xec0] sm:$0xff]
  %v566 = vld [vmem:[%s1 + $0xec8] sm:$0xff]
  %v567 = vld [vmem:[%s1 + $0xed0] sm:$0xff]
  %v568 = vld [vmem:[%s1 + $0xed8] sm:$0xff]
  %v569 = vld [vmem:[%s1 + $0xee0] sm:$0xff]
  %v570 = vld [vmem:[%s1 + $0xee8] sm:$0xff]
  %v571 = vld [vmem:[%s1 + $0xef0] sm:$0xff]
  %v572 = vld [vmem:[%s1 + $0xef8] sm:$0xff]
  %v573 = vld [vmem:[%s1 + $0xf00] sm:$0xff]
  %v574 = vld [vmem:[%s1 + $0xf08] sm:$0xff]
  %v575 = vld [vmem:[%s1 + $0xf10] sm:$0xff]
  %v576 = vld [vmem:[%s1 + $0xf18] sm:$0xff]
  %v577 = vld [vmem:[%s1 + $0xf20] sm:$0xff]
  %v578 = vld [vmem:[%s1 + $0xf28] sm:$0xff]
  %v579 = vld [vmem:[%s1 + $0xf30] sm:$0xff]
  %v580 = vld [vmem:[%s1 + $0xf38] sm:$0xff]
  %v581 = vld [vmem:[%s1 + $0xf40] sm:$0xff]
  %v582 = vld [vmem:[%s1 + $0xf48] sm:$0xff]
  %v583 = vld [vmem:[%s1 + $0xf50] sm:$0xff]
  %v584 = vld [vmem:[%s1 + $0xf58] sm:$0xff]
  %v585 = vld [vmem:[%s1 + $0xf60] sm:$0xff]
  %v586 = vld [vmem:[%s1 + $0xf68] sm:$0xff]
  %v587 = vld [vmem:[%s1 + $0xf70] sm:$0xff]
  %v588 = vld [vmem:[%s1 + $0xf78] sm:$0xff]
  %v589 = vld [vmem:[%s1 + $0xf80] sm:$0xff]
  %v590 = vld [vmem:[%s1 + $0xf88] sm:$0xff]
  %v591 = vld [vmem:[%s1 + $0xf90] sm:$0xff]
  %v592 = vld [vmem:[%s1 + $0xf98] sm:$0xff]
  %v593 = vld [vmem:[%s1 + $0xfa0] sm:$0xff]
  %v594 = vld [vmem:[%s1 + $0xfa8] sm:$0xff]
  %v595 = vld [vmem:[%s1 + $0xfb0] sm:$0xff]
  %v596 = vld [vmem:[%s1 + $0xfb8] sm:$0xff]
  %v597 = vld [vmem:[%s1 + $0xfc0] sm:$0xff]
  %v598 = vld [vmem:[%s1 + $0xfc8] sm:$0xff]
  %v599 = vld [vmem:[%s1 + $0xfd0] sm:$0xff]
  %v600 = vld [vmem:[%s1 + $0xfd8] sm:$0xff]
  %v601 = vld [vmem:[%s1 + $0xfe0] sm:$0xff]
  %v602 = vld [vmem:[%s1 + $0xfe8] sm:$0xff]
  %v603 = vld [vmem:[%s1 + $0xff0] sm:$0xff]
  %v604 = vld [vmem:[%s1 + $0xff8] sm:$0xff]
  %v605 = vld [vmem:[%s1 + $0x1000] sm:$0xff]
  %v606 = vld [vmem:[%s1 + $0x1008] sm:$0xff]
  %v607 = vld [vmem:[%s1 + $0x1010] sm:$0xff]
  %v608 = vld [vmem:[%s1 + $0x1018] sm:$0xff]
  %v609 = vld [vmem:[%s1 + $0x1020] sm:$0xff]
  %v610 = vld [vmem:[%s1 + $0x1028] sm:$0xff]
  %v611 = vld [vmem:[%s1 + $0x1030] sm:$0xff]
  %v612 = vld [vmem:[%s1 + $0x1038] sm:$0xff]
  %v613 = vld [vmem:[%s1 + $0x1040] sm:$0xff]
  %v614 = vld [vmem:[%s1 + $0x1048] sm:$0xff]
  %v615 = vld [vmem:[%s1 + $0x1050] sm:$0xff]
  %v616 = vld [vmem:[%s1 + $0x1058] sm:$0xff]
  %v617 = vld [vmem:[%s1 + $0x1060] sm:$0xff]
  %v618 = vld [vmem:[%s1 + $0x1068] sm:$0xff]
  %v619 = vld [vmem:[%s1 + $0x1070] sm:$0xff]
  %v620 = vld [vmem:[%s1 + $0x1078] sm:$0xff]
  %v621 = vld [vmem:[%s1 + $0x1080] sm:$0xff]
  %v622 = vld [vmem:[%s1 + $0x1088] sm:$0xff]
  %v623 = vld [vmem:[%s1 + $0x1090] sm:$0xff]
  %v624 = vld [vmem:[%s1 + $0x1098] sm:$0xff]
  %v625 = vld [vmem:[%s1 + $0x10a0] sm:$0xff]
  %v626 = vld [vmem:[%s1 + $0x10a8] sm:$0xff]
  %v627 = vld [vmem:[%s1 + $0x10b0] sm:$0xff]
  %v628 = vld [vmem:[%s1 + $0x10b8] sm:$0xff]
  %v629 = vld [vmem:[%s1 + $0x10c0] sm:$0xff]
  %v630 = vld [vmem:[%s1 + $0x10c8] sm:$0xff]
  %v631 = vld [vmem:[%s1 + $0x10d0] sm:$0xff]
  %v632 = vld [vmem:[%s1 + $0x10d8] sm:$0xff]
  %v633 = vld [vmem:[%s1 + $0x10e0] sm:$0xff]
  %v634 = vld [vmem:[%s1 + $0x10e8] sm:$0xff]
  %v635 = vld [vmem:[%s1 + $0x10f0] sm:$0xff]
  %v636 = vld [vmem:[%s1 + $0x10f8] sm:$0xff]
  %v637 = vld [vmem:[%s1 + $0x1100] sm:$0xff]
  %v638 = vld [vmem:[%s1 + $0x1108] sm:$0xff]
  %v639 = vld [vmem:[%s1 + $0x1110] sm:$0xff]
  %v640 = vld [vmem:[%s1 + $0x1118] sm:$0xff]
  %v641 = vld [vmem:[%s1 + $0x1120] sm:$0xff]
  %v642 = vld [vmem:[%s1 + $0x1128] sm:$0xff]
  %v643 = vld [vmem:[%s1 + $0x1130] sm:$0xff]
  %v644 = vld [vmem:[%s1 + $0x1138] sm:$0xff]
  %v645 = vld [vmem:[%s1 + $0x1140] sm:$0xff]
  %v646 = vld [vmem:[%s1 + $0x1148] sm:$0xff]
  %v647 = vld [vmem:[%s1 + $0x1150] sm:$0xff]
  %v648 = vld [vmem:[%s1 + $0x1158] sm:$0xff]
  %v649 = vld [vmem:[%s1 + $0x1160] sm:$0xff]
  %v650 = vld [vmem:[%s1 + $0x1168] sm:$0xff]
  %v651 = vld [vmem:[%s1 + $0x1170] sm:$0xff]
  %v652 = vld [vmem:[%s1 + $0x1178] sm:$0xff]
  %v653 = vld [vmem:[%s1 + $0x1180] sm:$0xff]
  %v654 = vld [vmem:[%s1 + $0x1188] sm:$0xff]
  %v655 = vld [vmem:[%s1 + $0x1190] sm:$0xff]
  %v656 = vld [vmem:[%s1 + $0x1198] sm:$0xff]
  %v657 = vld [vmem:[%s1 + $0x11a0] sm:$0xff]
  %v658 = vld [vmem:[%s1 + $0x11a8] sm:$0xff]
  %v659 = vld [vmem:[%s1 + $0x11b0] sm:$0xff]
  %v660 = vld [vmem:[%s1 + $0x11b8] sm:$0xff]
  %v661 = vld [vmem:[%s1 + $0x11c0] sm:$0xff]
  %v662 = vld [vmem:[%s1 + $0x11c8] sm:$0xff]
  %v663 = vld [vmem:[%s1 + $0x11d0] sm:$0xff]
  %v664 = vld [vmem:[%s1 + $0x11d8] sm:$0xff]
  %v665 = vld [vmem:[%s1 + $0x11e0] sm:$0xff]
  %v666 = vld [vmem:[%s1 + $0x11e8] sm:$0xff]
  %v667 = vld [vmem:[%s1 + $0x11f0] sm:$0xff]
  %v668 = vld [vmem:[%s1 + $0x11f8] sm:$0xff]
  %v669 = vld [vmem:[%s1 + $0x1200] sm:$0xff]
  %v670 = vld [vmem:[%s1 + $0x1208] sm:$0xff]
  %v671 = vld [vmem:[%s1 + $0x1210] sm:$0xff]
  %v672 = vld [vmem:[%s1 + $0x1218] sm:$0xff]
  %v673 = vld [vmem:[%s1 + $0x1220] sm:$0xff]
  %v674 = vld [vmem:[%s1 + $0x1228] sm:$0xff]
  %v675 = vld [vmem:[%s1 + $0x1230] sm:$0xff]
  %v676 = vld [vmem:[%s1 + $0x1238] sm:$0xff]
  %v677 = vld [vmem:[%s1 + $0x1240] sm:$0xff]
  %v678 = vld [vmem:[%s1 + $0x1248] sm:$0xff]
  %v679 = vld [vmem:[%s1 + $0x1250] sm:$0xff]
  %v680 = vld [vmem:[%s1 + $0x1258] sm:$0xff]
  %v681 = vld [vmem:[%s1 + $0x1260] sm:$0xff]
  %v682 = vld [vmem:[%s1 + $0x1268] sm:$0xff]
  %v683 = vld [vmem:[%s1 + $0x1270] sm:$0xff]
  %v684 = vld [vmem:[%s1 + $0x1278] sm:$0xff]
  %v685 = vld [vmem:[%s1 + $0x1280] sm:$0xff]
  %v686 = vld [vmem:[%s1 + $0x1288] sm:$0xff]
  %v687 = vld [vmem:[%s1 + $0x1290] sm:$0xff]
  %v688 = vld [vmem:[%s1 + $0x1298] sm:$0xff]
  %v689 = vld [vmem:[%s1 + $0x12a0] sm:$0xff]
  %v690 = vld [vmem:[%s1 + $0x12a8] sm:$0xff]
  %v691 = vld [vmem:[%s1 + $0x12b0] sm:$0xff]
  %v692 = vld [vmem:[%s1 + $0x12b8] sm:$0xff]
  %v693 = vld [vmem:[%s1 + $0x12c0] sm:$0xff]
  %v694 = vld [vmem:[%s1 + $0x12c8] sm:$0xff]
  %v695 = vld [vmem:[%s1 + $0x12d0] sm:$0xff]
  %v696 = vld [vmem:[%s1 + $0x12d8] sm:$0xff]
  %v697 = vld [vmem:[%s1 + $0x12e0] sm:$0xff]
  %v698 = vld [vmem:[%s1 + $0x12e8] sm:$0xff]
  %v699 = vld [vmem:[%s1 + $0x12f0] sm:$0xff]
  %v700 = vld [vmem:[%s1 + $0x12f8] sm:$0xff]
  %v701 = vld [vmem:[%s1 + $0x1300] sm:$0xff]
  %v702 = vld [vmem:[%s1 + $0x1308] sm:$0xff]
  %v703 = vld [vmem:[%s1 + $0x1310] sm:$0xff]
  %v704 = vld [vmem:[%s1 + $0x1318] sm:$0xff]
  %v705 = vld [vmem:[%s1 + $0x1320] sm:$0xff]
  %v706 = vld [vmem:[%s1 + $0x1328] sm:$0xff]
  %v707 = vld [vmem:[%s1 + $0x1330] sm:$0xff]
  %v708 = vld [vmem:[%s1 + $0x1338] sm:$0xff]
  %v709 = vld [vmem:[%s1 + $0x1340] sm:$0xff]
  %v710 = vld [vmem:[%s1 + $0x1348] sm:$0xff]
  %v711 = vld [vmem:[%s1 + $0x1350] sm:$0xff]
  %v712 = vld [vmem:[%s1 + $0x1358] sm:$0xff]
  %v713 = vld [vmem:[%s1 + $0x1360] sm:$0xff]
  %v714 = vld [vmem:[%s1 + $0x1368] sm:$0xff]
  %v715 = vld [vmem:[%s1 + $0x1370] sm:$0xff]
  %v716 = vld [vmem:[%s1 + $0x1378] sm:$0xff]
  %v717 = vld [vmem:[%s1 + $0x1380] sm:$0xff]
  %v718 = vld [vmem:[%s1 + $0x1388] sm:$0xff]
  %v719 = vld [vmem:[%s1 + $0x1390] sm:$0xff]
  %v720 = vld [vmem:[%s1 + $0x1398] sm:$0xff]
  %v721 = vld [vmem:[%s1 + $0x13a0] sm:$0xff]
  %v722 = vld [vmem:[%s1 + $0x13a8] sm:$0xff]
  %v723 = vld [vmem:[%s1 + $0x13b0] sm:$0xff]
  %v724 = vld [vmem:[%s1 + $0x13b8] sm:$0xff]
  %v725 = vld [vmem:[%s1 + $0x13c0] sm:$0xff]
  %v726 = vld [vmem:[%s1 + $0x13c8] sm:$0xff]
  %v727 = vld [vmem:[%s1 + $0x13d0] sm:$0xff]
  %v728 = vld [vmem:[%s1 + $0x13d8] sm:$0xff]
  %v729 = vld [vmem:[%s1 + $0x13e0] sm:$0xff]
  %v730 = vld [vmem:[%s1 + $0x13e8] sm:$0xff]
  %v731 = vld [vmem:[%s1 + $0x13f0] sm:$0xff]
  %v732 = vld [vmem:[%s1 + $0x13f8] sm:$0xff]
  %v733 = vld [vmem:[%s1 + $0x1400] sm:$0xff]
  %v734 = vld [vmem:[%s1 + $0x1408] sm:$0xff]
  %v735 = vld [vmem:[%s1 + $0x1410] sm:$0xff]
  %v736 = vld [vmem:[%s1 + $0x1418] sm:$0xff]
  %v737 = vld [vmem:[%s1 + $0x1420] sm:$0xff]
  %v738 = vld [vmem:[%s1 + $0x1428] sm:$0xff]
  %v739 = vld [vmem:[%s1 + $0x1430] sm:$0xff]
  %v740 = vld [vmem:[%s1 + $0x1438] sm:$0xff]
  %v741 = vld [vmem:[%s1 + $0x1440] sm:$0xff]
  %v742 = vld [vmem:[%s1 + $0x1448] sm:$0xff]
  %v743 = vld [vmem:[%s1 + $0x1450] sm:$0xff]
  %v744 = vld [vmem:[%s1 + $0x1458] sm:$0xff]
  %v745 = vld [vmem:[%s1 + $0x1460] sm:$0xff]
  %v746 = vld [vmem:[%s1 + $0x1468] sm:$0xff]
  %v747 = vld [vmem:[%s1 + $0x1470] sm:$0xff]
  %v748 = vld [vmem:[%s1 + $0x1478] sm:$0xff]
  %v749 = vld [vmem:[%s1 + $0x1480] sm:$0xff]
  %v750 = vld [vmem:[%s1 + $0x1488] sm:$0xff]
  %v751 = vld [vmem:[%s1 + $0x1490] sm:$0xff]
  %v752 = vld [vmem:[%s1 + $0x1498] sm:$0xff]
  %v753 = vld [vmem:[%s1 + $0x14a0] sm:$0xff]
  %v754 = vld [vmem:[%s1 + $0x14a8] sm:$0xff]
  %v755 = vld [vmem:[%s1 + $0x14b0] sm:$0xff]
  %v756 = vld [vmem:[%s1 + $0x14b8] sm:$0xff]
  %v757 = vld [vmem:[%s1 + $0x14c0] sm:$0xff]
  %v758 = vld [vmem:[%s1 + $0x14c8] sm:$0xff]
  %v759 = vld [vmem:[%s1 + $0x14d0] sm:$0xff]
  %v760 = vld [vmem:[%s1 + $0x14d8] sm:$0xff]
  %v761 = vld [vmem:[%s1 + $0x14e0] sm:$0xff]
  %v762 = vld [vmem:[%s1 + $0x14e8] sm:$0xff]
  %v763 = vld [vmem:[%s1 + $0x14f0] sm:$0xff]
  %v764 = vld [vmem:[%s1 + $0x14f8] sm:$0xff]
  %v765 = vld [vmem:[%s1 + $0x1500] sm:$0xff]
  %v766 = vld [vmem:[%s1 + $0x1508] sm:$0xff]
  %v767 = vld [vmem:[%s1 + $0x1510] sm:$0xff]
  %v768 = vld [vmem:[%s1 + $0x1518] sm:$0xff]
  %v769 = vld [vmem:[%s1 + $0x1520] sm:$0xff]
  %v770 = vld [vmem:[%s1 + $0x1528] sm:$0xff]
  %v771 = vld [vmem:[%s1 + $0x1530] sm:$0xff]
  %v772 = vld [vmem:[%s1 + $0x1538] sm:$0xff]
  %v773 = vld [vmem:[%s1 + $0x1540] sm:$0xff]
  %v774 = vld [vmem:[%s1 + $0x1548] sm:$0xff]
  %v775 = vld [vmem:[%s1 + $0x1550] sm:$0xff]
  %v776 = vld [vmem:[%s1 + $0x1558] sm:$0xff]
  %v777 = vld [vmem:[%s1 + $0x1560] sm:$0xff]
  %v778 = vld [vmem:[%s1 + $0x1568] sm:$0xff]
  %v779 = vld [vmem:[%s1 + $0x1570] sm:$0xff]
  %v780 = vld [vmem:[%s1 + $0x1578] sm:$0xff]
  %v781 = vld [vmem:[%s1 + $0x1580] sm:$0xff]
  %v782 = vld [vmem:[%s1 + $0x1588] sm:$0xff]
  %v783 = vld [vmem:[%s1 + $0x1590] sm:$0xff]
  %v784 = vld [vmem:[%s1 + $0x1598] sm:$0xff]
  %v785 = vld [vmem:[%s1 + $0x15a0] sm:$0xff]
  %v786 = vld [vmem:[%s1 + $0x15a8] sm:$0xff]
  %v787 = vld [vmem:[%s1 + $0x15b0] sm:$0xff]
  %v788 = vld [vmem:[%s1 + $0x15b8] sm:$0xff]
  %v789 = vld [vmem:[%s1 + $0x15c0] sm:$0xff]
  %v790 = vld [vmem:[%s1 + $0x15c8] sm:$0xff]
  %v791 = vld [vmem:[%s1 + $0x15d0] sm:$0xff]
  %v792 = vld [vmem:[%s1 + $0x15d8] sm:$0xff]
  %v793 = vld [vmem:[%s1 + $0x15e0] sm:$0xff]
  %v794 = vld [vmem:[%s1 + $0x15e8] sm:$0xff]
  %v795 = vld [vmem:[%s1 + $0x15f0] sm:$0xff]
  %v796 = vld [vmem:[%s1 + $0x15f8] sm:$0xff]
  %v797 = vld [vmem:[%s1 + $0x1600] sm:$0xff]
  %v798 = vld [vmem:[%s1 + $0x1608] sm:$0xff]
  %v799 = vld [vmem:[%s1 + $0x1610] sm:$0xff]
  %v800 = vld [vmem:[%s1 + $0x1618] sm:$0xff]
  %v801 = vld [vmem:[%s1 + $0x1620] sm:$0xff]
  %v802 = vld [vmem:[%s1 + $0x1628] sm:$0xff]
  %v803 = vld [vmem:[%s1 + $0x1630] sm:$0xff]
  %v804 = vld [vmem:[%s1 + $0x1638] sm:$0xff]
  %v805 = vld [vmem:[%s1 + $0x1640] sm:$0xff]
  %v806 = vld [vmem:[%s1 + $0x1648] sm:$0xff]
  %v807 = vld [vmem:[%s1 + $0x1650] sm:$0xff]
  %v808 = vld [vmem:[%s1 + $0x1658] sm:$0xff]
  %v809 = vld [vmem:[%s1 + $0x1660] sm:$0xff]
  %v810 = vld [vmem:[%s1 + $0x1668] sm:$0xff]
  %v811 = vld [vmem:[%s1 + $0x1670] sm:$0xff]
  %v812 = vld [vmem:[%s1 + $0x1678] sm:$0xff]
  %v813 = vld [vmem:[%s1 + $0x1680] sm:$0xff]
  %v814 = vld [vmem:[%s1 + $0x1688] sm:$0xff]
  %v815 = vld [vmem:[%s1 + $0x1690] sm:$0xff]
  %v816 = vld [vmem:[%s1 + $0x1698] sm:$0xff]
  %v817 = vld [vmem:[%s1 + $0x16a0] sm:$0xff]
  %v818 = vld [vmem:[%s1 + $0x16a8] sm:$0xff]
  %v819 = vld [vmem:[%s1 + $0x16b0] sm:$0xff]
  %v820 = vld [vmem:[%s1 + $0x16b8] sm:$0xff]
  %v821 = vld [vmem:[%s1 + $0x16c0] sm:$0xff]
  %v822 = vld [vmem:[%s1 + $0x16c8] sm:$0xff]
  %v823 = vld [vmem:[%s1 + $0x16d0] sm:$0xff]
  %v824 = vld [vmem:[%s1 + $0x16d8] sm:$0xff]
  %v825 = vld [vmem:[%s1 + $0x16e0] sm:$0xff]
  %v826 = vld [vmem:[%s1 + $0x16e8] sm:$0xff]
  %v827 = vld [vmem:[%s1 + $0x16f0] sm:$0xff]
  %v828 = vld [vmem:[%s1 + $0x16f8] sm:$0xff]
  %v829 = vld [vmem:[%s1 + $0x1700] sm:$0xff]
  %v830 = vld [vmem:[%s1 + $0x1708] sm:$0xff]
  %v831 = vld [vmem:[%s1 + $0x1710] sm:$0xff]
  %v832 = vld [vmem:[%s1 + $0x1718] sm:$0xff]
  %v833 = vld [vmem:[%s1 + $0x1720] sm:$0xff]
  %v834 = vld [vmem:[%s1 + $0x1728] sm:$0xff]
  %v835 = vld [vmem:[%s1 + $0x1730] sm:$0xff]
  %v836 = vld [vmem:[%s1 + $0x1738] sm:$0xff]
  %v837 = vld [vmem:[%s1 + $0x1740] sm:$0xff]
  %v838 = vld [vmem:[%s1 + $0x1748] sm:$0xff]
  %v839 = vld [vmem:[%s1 + $0x1750] sm:$0xff]
  %v840 = vld [vmem:[%s1 + $0x1758] sm:$0xff]
  %v841 = vld [vmem:[%s1 + $0x1760] sm:$0xff]
  %v842 = vld [vmem:[%s1 + $0x1768] sm:$0xff]
  %v843 = vld [vmem:[%s1 + $0x1770] sm:$0xff]
  %v844 = vld [vmem:[%s1 + $0x1778] sm:$0xff]
  %v845 = vld [vmem:[%s1 + $0x1780] sm:$0xff]
  %v846 = vld [vmem:[%s1 + $0x1788] sm:$0xff]
  %v847 = vld [vmem:[%s1 + $0x1790] sm:$0xff]
  %v848 = vld [vmem:[%s1 + $0x1798] sm:$0xff]
  %v849 = vld [vmem:[%s1 + $0x17a0] sm:$0xff]
  %v850 = vld [vmem:[%s1 + $0x17a8] sm:$0xff]
  %v851 = vld [vmem:[%s1 + $0x17b0] sm:$0xff]
  %v852 = vld [vmem:[%s1 + $0x17b8] sm:$0xff]
  %v853 = vld [vmem:[%s1 + $0x17c0] sm:$0xff]
  %v854 = vld [vmem:[%s1 + $0x17c8] sm:$0xff]
  %v855 = vld [vmem:[%s1 + $0x17d0] sm:$0xff]
  %v856 = vld [vmem:[%s1 + $0x17d8] sm:$0xff]
  %v857 = vld [vmem:[%s1 + $0x17e0] sm:$0xff]
  %v858 = vld [vmem:[%s1 + $0x17e8] sm:$0xff]
  %v859 = vld [vmem:[%s1 + $0x17f0] sm:$0xff]
  %v860 = vld [vmem:[%s1 + $0x17f8] sm:$0xff]
  %v861 = vld [vmem:[%s2] sm:$0xf]
  %v863 = vlaneseq
  %v864 = vshrl.u32 %v863, 7
  %v865 = vsub.s32 0, %v864
  %v866 = vrot.slane %v861, %v865
  %v867 = vlaneseq
  %v868 = vshrl.u32 %v867, 7
  %v869 = vsub.s32 1, %v868
  %v870 = vrot.slane %v861, %v869
  %v871 = vlaneseq
  %v872 = vshrl.u32 %v871, 7
  %v873 = vsub.s32 2, %v872
  %v874 = vrot.slane %v861, %v873
  %v875 = vlaneseq
  %v876 = vshrl.u32 %v875, 7
  %v877 = vsub.s32 3, %v876
  %v878 = vrot.slane %v861, %v877
  %v1651 = vunpack.c.l.b16 %v93
  %v1652 = vunpack.c.h.b16 %v93
  %v1653 = vunpack.c.l.b16 %v94
  %v1654 = vunpack.c.h.b16 %v94
  %v1655 = vunpack.c.l.b16 %v95
  %v1656 = vunpack.c.h.b16 %v95
  %v1657 = vunpack.c.l.b16 %v96
  %v1658 = vunpack.c.h.b16 %v96
  %v1659 = vunpack.c.l.b16 %v97
  %v1660 = vunpack.c.h.b16 %v97
  %v1661 = vunpack.c.l.b16 %v98
  %v1662 = vunpack.c.h.b16 %v98
  %v1663 = vunpack.c.l.b16 %v99
  %v1664 = vunpack.c.h.b16 %v99
  %v1665 = vunpack.c.l.b16 %v100
  %v1666 = vunpack.c.h.b16 %v100
  %v1667 = vunpack.c.l.b16 %v101
  %v1668 = vunpack.c.h.b16 %v101
  %v1669 = vunpack.c.l.b16 %v102
  %v1670 = vunpack.c.h.b16 %v102
  %v1671 = vunpack.c.l.b16 %v103
  %v1672 = vunpack.c.h.b16 %v103
  %v1673 = vunpack.c.l.b16 %v104
  %v1674 = vunpack.c.h.b16 %v104
  %v1675 = vunpack.c.l.b16 %v105
  %v1676 = vunpack.c.h.b16 %v105
  %v1677 = vunpack.c.l.b16 %v106
  %v1678 = vunpack.c.h.b16 %v106
  %v1679 = vunpack.c.l.b16 %v107
  %v1680 = vunpack.c.h.b16 %v107
  %v1681 = vunpack.c.l.b16 %v108
  %v1682 = vunpack.c.h.b16 %v108
  %v1683 = vunpack.c.l.b16 %v109
  %v1684 = vunpack.c.h.b16 %v109
  %v1685 = vunpack.c.l.b16 %v110
  %v1686 = vunpack.c.h.b16 %v110
  %v1687 = vunpack.c.l.b16 %v111
  %v1688 = vunpack.c.h.b16 %v111
  %v1689 = vunpack.c.l.b16 %v112
  %v1690 = vunpack.c.h.b16 %v112
  %v1691 = vunpack.c.l.b16 %v113
  %v1692 = vunpack.c.h.b16 %v113
  %v1693 = vunpack.c.l.b16 %v114
  %v1694 = vunpack.c.h.b16 %v114
  %v1695 = vunpack.c.l.b16 %v115
  %v1696 = vunpack.c.h.b16 %v115
  %v1697 = vunpack.c.l.b16 %v116
  %v1698 = vunpack.c.h.b16 %v116
  %v1699 = vunpack.c.l.b16 %v117
  %v1700 = vunpack.c.h.b16 %v117
  %v1701 = vunpack.c.l.b16 %v118
  %v1702 = vunpack.c.h.b16 %v118
  %v1703 = vunpack.c.l.b16 %v119
  %v1704 = vunpack.c.h.b16 %v119
  %v1705 = vunpack.c.l.b16 %v120
  %v1706 = vunpack.c.h.b16 %v120
  %v1707 = vunpack.c.l.b16 %v121
  %v1708 = vunpack.c.h.b16 %v121
  %v1709 = vunpack.c.l.b16 %v122
  %v1710 = vunpack.c.h.b16 %v122
  %v1711 = vunpack.c.l.b16 %v123
  %v1712 = vunpack.c.h.b16 %v123
  %v1713 = vunpack.c.l.b16 %v124
  %v1714 = vunpack.c.h.b16 %v124
  %v1715 = vunpack.c.l.b16 %v125
  %v1716 = vunpack.c.h.b16 %v125
  %v1717 = vunpack.c.l.b16 %v126
  %v1718 = vunpack.c.h.b16 %v126
  %v1719 = vunpack.c.l.b16 %v127
  %v1720 = vunpack.c.h.b16 %v127
  %v1721 = vunpack.c.l.b16 %v128
  %v1722 = vunpack.c.h.b16 %v128
  %v1723 = vunpack.c.l.b16 %v129
  %v1724 = vunpack.c.h.b16 %v129
  %v1725 = vunpack.c.l.b16 %v130
  %v1726 = vunpack.c.h.b16 %v130
  %v1727 = vunpack.c.l.b16 %v131
  %v1728 = vunpack.c.h.b16 %v131
  %v1729 = vunpack.c.l.b16 %v132
  %v1730 = vunpack.c.h.b16 %v132
  %v1731 = vunpack.c.l.b16 %v133
  %v1732 = vunpack.c.h.b16 %v133
  %v1733 = vunpack.c.l.b16 %v134
  %v1734 = vunpack.c.h.b16 %v134
  %v1735 = vunpack.c.l.b16 %v135
  %v1736 = vunpack.c.h.b16 %v135
  %v1737 = vunpack.c.l.b16 %v136
  %v1738 = vunpack.c.h.b16 %v136
  %v1739 = vunpack.c.l.b16 %v137
  %v1740 = vunpack.c.h.b16 %v137
  %v1741 = vunpack.c.l.b16 %v138
  %v1742 = vunpack.c.h.b16 %v138
  %v1743 = vunpack.c.l.b16 %v139
  %v1744 = vunpack.c.h.b16 %v139
  %v1745 = vunpack.c.l.b16 %v140
  %v1746 = vunpack.c.h.b16 %v140
  %v1747 = vunpack.c.l.b16 %v141
  %v1748 = vunpack.c.h.b16 %v141
  %v1749 = vunpack.c.l.b16 %v142
  %v1750 = vunpack.c.h.b16 %v142
  %v1751 = vunpack.c.l.b16 %v143
  %v1752 = vunpack.c.h.b16 %v143
  %v1753 = vunpack.c.l.b16 %v144
  %v1754 = vunpack.c.h.b16 %v144
  %v1755 = vunpack.c.l.b16 %v145
  %v1756 = vunpack.c.h.b16 %v145
  %v1757 = vunpack.c.l.b16 %v146
  %v1758 = vunpack.c.h.b16 %v146
  %v1759 = vunpack.c.l.b16 %v147
  %v1760 = vunpack.c.h.b16 %v147
  %v1761 = vunpack.c.l.b16 %v148
  %v1762 = vunpack.c.h.b16 %v148
  %v1763 = vunpack.c.l.b16 %v149
  %v1764 = vunpack.c.h.b16 %v149
  %v1765 = vunpack.c.l.b16 %v150
  %v1766 = vunpack.c.h.b16 %v150
  %v1767 = vunpack.c.l.b16 %v151
  %v1768 = vunpack.c.h.b16 %v151
  %v1769 = vunpack.c.l.b16 %v152
  %v1770 = vunpack.c.h.b16 %v152
  %v1771 = vunpack.c.l.b16 %v153
  %v1772 = vunpack.c.h.b16 %v153
  %v1773 = vunpack.c.l.b16 %v154
  %v1774 = vunpack.c.h.b16 %v154
  %v1775 = vunpack.c.l.b16 %v155
  %v1776 = vunpack.c.h.b16 %v155
  %v1777 = vunpack.c.l.b16 %v156
  %v1778 = vunpack.c.h.b16 %v156
  %v1779 = vunpack.c.l.b16 %v157
  %v1780 = vunpack.c.h.b16 %v157
  %v1781 = vunpack.c.l.b16 %v158
  %v1782 = vunpack.c.h.b16 %v158
  %v1783 = vunpack.c.l.b16 %v159
  %v1784 = vunpack.c.h.b16 %v159
  %v1785 = vunpack.c.l.b16 %v160
  %v1786 = vunpack.c.h.b16 %v160
  %v1787 = vunpack.c.l.b16 %v161
  %v1788 = vunpack.c.h.b16 %v161
  %v1789 = vunpack.c.l.b16 %v162
  %v1790 = vunpack.c.h.b16 %v162
  %v1791 = vunpack.c.l.b16 %v163
  %v1792 = vunpack.c.h.b16 %v163
  %v1793 = vunpack.c.l.b16 %v164
  %v1794 = vunpack.c.h.b16 %v164
  %v1795 = vunpack.c.l.b16 %v165
  %v1796 = vunpack.c.h.b16 %v165
  %v1797 = vunpack.c.l.b16 %v166
  %v1798 = vunpack.c.h.b16 %v166
  %v1799 = vunpack.c.l.b16 %v167
  %v1800 = vunpack.c.h.b16 %v167
  %v1801 = vunpack.c.l.b16 %v168
  %v1802 = vunpack.c.h.b16 %v168
  %v1803 = vunpack.c.l.b16 %v169
  %v1804 = vunpack.c.h.b16 %v169
  %v1805 = vunpack.c.l.b16 %v170
  %v1806 = vunpack.c.h.b16 %v170
  %v1807 = vunpack.c.l.b16 %v171
  %v1808 = vunpack.c.h.b16 %v171
  %v1809 = vunpack.c.l.b16 %v172
  %v1810 = vunpack.c.h.b16 %v172
  %v1811 = vunpack.c.l.b16 %v173
  %v1812 = vunpack.c.h.b16 %v173
  %v1813 = vunpack.c.l.b16 %v174
  %v1814 = vunpack.c.h.b16 %v174
  %v1815 = vunpack.c.l.b16 %v175
  %v1816 = vunpack.c.h.b16 %v175
  %v1817 = vunpack.c.l.b16 %v176
  %v1818 = vunpack.c.h.b16 %v176
  %v1819 = vunpack.c.l.b16 %v177
  %v1820 = vunpack.c.h.b16 %v177
  %v1821 = vunpack.c.l.b16 %v178
  %v1822 = vunpack.c.h.b16 %v178
  %v1823 = vunpack.c.l.b16 %v179
  %v1824 = vunpack.c.h.b16 %v179
  %v1825 = vunpack.c.l.b16 %v180
  %v1826 = vunpack.c.h.b16 %v180
  %v1827 = vunpack.c.l.b16 %v181
  %v1828 = vunpack.c.h.b16 %v181
  %v1829 = vunpack.c.l.b16 %v182
  %v1830 = vunpack.c.h.b16 %v182
  %v1831 = vunpack.c.l.b16 %v183
  %v1832 = vunpack.c.h.b16 %v183
  %v1833 = vunpack.c.l.b16 %v184
  %v1834 = vunpack.c.h.b16 %v184
  %v1835 = vunpack.c.l.b16 %v185
  %v1836 = vunpack.c.h.b16 %v185
  %v1837 = vunpack.c.l.b16 %v186
  %v1838 = vunpack.c.h.b16 %v186
  %v1839 = vunpack.c.l.b16 %v187
  %v1840 = vunpack.c.h.b16 %v187
  %v1841 = vunpack.c.l.b16 %v188
  %v1842 = vunpack.c.h.b16 %v188
  %v1843 = vunpack.c.l.b16 %v189
  %v1844 = vunpack.c.h.b16 %v189
  %v1845 = vunpack.c.l.b16 %v190
  %v1846 = vunpack.c.h.b16 %v190
  %v1847 = vunpack.c.l.b16 %v191
  %v1848 = vunpack.c.h.b16 %v191
  %v1849 = vunpack.c.l.b16 %v192
  %v1850 = vunpack.c.h.b16 %v192
  %v1851 = vunpack.c.l.b16 %v193
  %v1852 = vunpack.c.h.b16 %v193
  %v1853 = vunpack.c.l.b16 %v194
  %v1854 = vunpack.c.h.b16 %v194
  %v1855 = vunpack.c.l.b16 %v195
  %v1856 = vunpack.c.h.b16 %v195
  %v1857 = vunpack.c.l.b16 %v196
  %v1858 = vunpack.c.h.b16 %v196
  %v1859 = vunpack.c.l.b16 %v197
  %v1860 = vunpack.c.h.b16 %v197
  %v1861 = vunpack.c.l.b16 %v198
  %v1862 = vunpack.c.h.b16 %v198
  %v1863 = vunpack.c.l.b16 %v199
  %v1864 = vunpack.c.h.b16 %v199
  %v1865 = vunpack.c.l.b16 %v200
  %v1866 = vunpack.c.h.b16 %v200
  %v1867 = vunpack.c.l.b16 %v201
  %v1868 = vunpack.c.h.b16 %v201
  %v1869 = vunpack.c.l.b16 %v202
  %v1870 = vunpack.c.h.b16 %v202
  %v1871 = vunpack.c.l.b16 %v203
  %v1872 = vunpack.c.h.b16 %v203
  %v1873 = vunpack.c.l.b16 %v204
  %v1874 = vunpack.c.h.b16 %v204
  %v1875 = vunpack.c.l.b16 %v205
  %v1876 = vunpack.c.h.b16 %v205
  %v1877 = vunpack.c.l.b16 %v206
  %v1878 = vunpack.c.h.b16 %v206
  %v1879 = vunpack.c.l.b16 %v207
  %v1880 = vunpack.c.h.b16 %v207
  %v1881 = vunpack.c.l.b16 %v208
  %v1882 = vunpack.c.h.b16 %v208
  %v1883 = vunpack.c.l.b16 %v209
  %v1884 = vunpack.c.h.b16 %v209
  %v1885 = vunpack.c.l.b16 %v210
  %v1886 = vunpack.c.h.b16 %v210
  %v1887 = vunpack.c.l.b16 %v211
  %v1888 = vunpack.c.h.b16 %v211
  %v1889 = vunpack.c.l.b16 %v212
  %v1890 = vunpack.c.h.b16 %v212
  %v1891 = vunpack.c.l.b16 %v213
  %v1892 = vunpack.c.h.b16 %v213
  %v1893 = vunpack.c.l.b16 %v214
  %v1894 = vunpack.c.h.b16 %v214
  %v1895 = vunpack.c.l.b16 %v215
  %v1896 = vunpack.c.h.b16 %v215
  %v1897 = vunpack.c.l.b16 %v216
  %v1898 = vunpack.c.h.b16 %v216
  %v1899 = vunpack.c.l.b16 %v217
  %v1900 = vunpack.c.h.b16 %v217
  %v1901 = vunpack.c.l.b16 %v218
  %v1902 = vunpack.c.h.b16 %v218
  %v1903 = vunpack.c.l.b16 %v219
  %v1904 = vunpack.c.h.b16 %v219
  %v1905 = vunpack.c.l.b16 %v220
  %v1906 = vunpack.c.h.b16 %v220
  %v1907 = vunpack.c.l.b16 %v221
  %v1908 = vunpack.c.h.b16 %v221
  %v1909 = vunpack.c.l.b16 %v222
  %v1910 = vunpack.c.h.b16 %v222
  %v1911 = vunpack.c.l.b16 %v223
  %v1912 = vunpack.c.h.b16 %v223
  %v1913 = vunpack.c.l.b16 %v224
  %v1914 = vunpack.c.h.b16 %v224
  %v1915 = vunpack.c.l.b16 %v225
  %v1916 = vunpack.c.h.b16 %v225
  %v1917 = vunpack.c.l.b16 %v226
  %v1918 = vunpack.c.h.b16 %v226
  %v1919 = vunpack.c.l.b16 %v227
  %v1920 = vunpack.c.h.b16 %v227
  %v1921 = vunpack.c.l.b16 %v228
  %v1922 = vunpack.c.h.b16 %v228
  %v1923 = vunpack.c.l.b16 %v229
  %v1924 = vunpack.c.h.b16 %v229
  %v1925 = vunpack.c.l.b16 %v230
  %v1926 = vunpack.c.h.b16 %v230
  %v1927 = vunpack.c.l.b16 %v231
  %v1928 = vunpack.c.h.b16 %v231
  %v1929 = vunpack.c.l.b16 %v232
  %v1930 = vunpack.c.h.b16 %v232
  %v1931 = vunpack.c.l.b16 %v233
  %v1932 = vunpack.c.h.b16 %v233
  %v1933 = vunpack.c.l.b16 %v234
  %v1934 = vunpack.c.h.b16 %v234
  %v1935 = vunpack.c.l.b16 %v235
  %v1936 = vunpack.c.h.b16 %v235
  %v1937 = vunpack.c.l.b16 %v236
  %v1938 = vunpack.c.h.b16 %v236
  %v1939 = vunpack.c.l.b16 %v237
  %v1940 = vunpack.c.h.b16 %v237
  %v1941 = vunpack.c.l.b16 %v238
  %v1942 = vunpack.c.h.b16 %v238
  %v1943 = vunpack.c.l.b16 %v239
  %v1944 = vunpack.c.h.b16 %v239
  %v1945 = vunpack.c.l.b16 %v240
  %v1946 = vunpack.c.h.b16 %v240
  %v1947 = vunpack.c.l.b16 %v241
  %v1948 = vunpack.c.h.b16 %v241
  %v1949 = vunpack.c.l.b16 %v242
  %v1950 = vunpack.c.h.b16 %v242
  %v1951 = vunpack.c.l.b16 %v243
  %v1952 = vunpack.c.h.b16 %v243
  %v1953 = vunpack.c.l.b16 %v244
  %v1954 = vunpack.c.h.b16 %v244
  %v1955 = vunpack.c.l.b16 %v245
  %v1956 = vunpack.c.h.b16 %v245
  %v1957 = vunpack.c.l.b16 %v246
  %v1958 = vunpack.c.h.b16 %v246
  %v1959 = vunpack.c.l.b16 %v247
  %v1960 = vunpack.c.h.b16 %v247
  %v1961 = vunpack.c.l.b16 %v248
  %v1962 = vunpack.c.h.b16 %v248
  %v1963 = vunpack.c.l.b16 %v249
  %v1964 = vunpack.c.h.b16 %v249
  %v1965 = vunpack.c.l.b16 %v250
  %v1966 = vunpack.c.h.b16 %v250
  %v1967 = vunpack.c.l.b16 %v251
  %v1968 = vunpack.c.h.b16 %v251
  %v1969 = vunpack.c.l.b16 %v252
  %v1970 = vunpack.c.h.b16 %v252
  %v1971 = vunpack.c.l.b16 %v253
  %v1972 = vunpack.c.h.b16 %v253
  %v1973 = vunpack.c.l.b16 %v254
  %v1974 = vunpack.c.h.b16 %v254
  %v1975 = vunpack.c.l.b16 %v255
  %v1976 = vunpack.c.h.b16 %v255
  %v1977 = vunpack.c.l.b16 %v256
  %v1978 = vunpack.c.h.b16 %v256
  %v1979 = vunpack.c.l.b16 %v257
  %v1980 = vunpack.c.h.b16 %v257
  %v1981 = vunpack.c.l.b16 %v258
  %v1982 = vunpack.c.h.b16 %v258
  %v1983 = vunpack.c.l.b16 %v259
  %v1984 = vunpack.c.h.b16 %v259
  %v1985 = vunpack.c.l.b16 %v260
  %v1986 = vunpack.c.h.b16 %v260
  %v1987 = vunpack.c.l.b16 %v261
  %v1988 = vunpack.c.h.b16 %v261
  %v1989 = vunpack.c.l.b16 %v262
  %v1990 = vunpack.c.h.b16 %v262
  %v1991 = vunpack.c.l.b16 %v263
  %v1992 = vunpack.c.h.b16 %v263
  %v1993 = vunpack.c.l.b16 %v264
  %v1994 = vunpack.c.h.b16 %v264
  %v1995 = vunpack.c.l.b16 %v265
  %v1996 = vunpack.c.h.b16 %v265
  %v1997 = vunpack.c.l.b16 %v266
  %v1998 = vunpack.c.h.b16 %v266
  %v1999 = vunpack.c.l.b16 %v267
  %v2000 = vunpack.c.h.b16 %v267
  %v2001 = vunpack.c.l.b16 %v268
  %v2002 = vunpack.c.h.b16 %v268
  %v2003 = vunpack.c.l.b16 %v269
  %v2004 = vunpack.c.h.b16 %v269
  %v2005 = vunpack.c.l.b16 %v270
  %v2006 = vunpack.c.h.b16 %v270
  %v2007 = vunpack.c.l.b16 %v271
  %v2008 = vunpack.c.h.b16 %v271
  %v2009 = vunpack.c.l.b16 %v272
  %v2010 = vunpack.c.h.b16 %v272
  %v2011 = vunpack.c.l.b16 %v273
  %v2012 = vunpack.c.h.b16 %v273
  %v2013 = vunpack.c.l.b16 %v274
  %v2014 = vunpack.c.h.b16 %v274
  %v2015 = vunpack.c.l.b16 %v275
  %v2016 = vunpack.c.h.b16 %v275
  %v2017 = vunpack.c.l.b16 %v276
  %v2018 = vunpack.c.h.b16 %v276
  %v2019 = vunpack.c.l.b16 %v277
  %v2020 = vunpack.c.h.b16 %v277
  %v2021 = vunpack.c.l.b16 %v278
  %v2022 = vunpack.c.h.b16 %v278
  %v2023 = vunpack.c.l.b16 %v279
  %v2024 = vunpack.c.h.b16 %v279
  %v2025 = vunpack.c.l.b16 %v280
  %v2026 = vunpack.c.h.b16 %v280
  %v2027 = vunpack.c.l.b16 %v281
  %v2028 = vunpack.c.h.b16 %v281
  %v2029 = vunpack.c.l.b16 %v282
  %v2030 = vunpack.c.h.b16 %v282
  %v2031 = vunpack.c.l.b16 %v283
  %v2032 = vunpack.c.h.b16 %v283
  %v2033 = vunpack.c.l.b16 %v284
  %v2034 = vunpack.c.h.b16 %v284
  %v2035 = vunpack.c.l.b16 %v285
  %v2036 = vunpack.c.h.b16 %v285
  %v2037 = vunpack.c.l.b16 %v286
  %v2038 = vunpack.c.h.b16 %v286
  %v2039 = vunpack.c.l.b16 %v287
  %v2040 = vunpack.c.h.b16 %v287
  %v2041 = vunpack.c.l.b16 %v288
  %v2042 = vunpack.c.h.b16 %v288
  %v2043 = vunpack.c.l.b16 %v289
  %v2044 = vunpack.c.h.b16 %v289
  %v2045 = vunpack.c.l.b16 %v290
  %v2046 = vunpack.c.h.b16 %v290
  %v2047 = vunpack.c.l.b16 %v291
  %v2048 = vunpack.c.h.b16 %v291
  %v2049 = vunpack.c.l.b16 %v292
  %v2050 = vunpack.c.h.b16 %v292
  %v2051 = vunpack.c.l.b16 %v293
  %v2052 = vunpack.c.h.b16 %v293
  %v2053 = vunpack.c.l.b16 %v294
  %v2054 = vunpack.c.h.b16 %v294
  %v2055 = vunpack.c.l.b16 %v295
  %v2056 = vunpack.c.h.b16 %v295
  %v2057 = vunpack.c.l.b16 %v296
  %v2058 = vunpack.c.h.b16 %v296
  %v2059 = vunpack.c.l.b16 %v297
  %v2060 = vunpack.c.h.b16 %v297
  %v2061 = vunpack.c.l.b16 %v298
  %v2062 = vunpack.c.h.b16 %v298
  %v2063 = vunpack.c.l.b16 %v299
  %v2064 = vunpack.c.h.b16 %v299
  %v2065 = vunpack.c.l.b16 %v300
  %v2066 = vunpack.c.h.b16 %v300
  %v2067 = vunpack.c.l.b16 %v301
  %v2068 = vunpack.c.h.b16 %v301
  %v2069 = vunpack.c.l.b16 %v302
  %v2070 = vunpack.c.h.b16 %v302
  %v2071 = vunpack.c.l.b16 %v303
  %v2072 = vunpack.c.h.b16 %v303
  %v2073 = vunpack.c.l.b16 %v304
  %v2074 = vunpack.c.h.b16 %v304
  %v2075 = vunpack.c.l.b16 %v305
  %v2076 = vunpack.c.h.b16 %v305
  %v2077 = vunpack.c.l.b16 %v306
  %v2078 = vunpack.c.h.b16 %v306
  %v2079 = vunpack.c.l.b16 %v307
  %v2080 = vunpack.c.h.b16 %v307
  %v2081 = vunpack.c.l.b16 %v308
  %v2082 = vunpack.c.h.b16 %v308
  %v2083 = vunpack.c.l.b16 %v309
  %v2084 = vunpack.c.h.b16 %v309
  %v2085 = vunpack.c.l.b16 %v310
  %v2086 = vunpack.c.h.b16 %v310
  %v2087 = vunpack.c.l.b16 %v311
  %v2088 = vunpack.c.h.b16 %v311
  %v2089 = vunpack.c.l.b16 %v312
  %v2090 = vunpack.c.h.b16 %v312
  %v2091 = vunpack.c.l.b16 %v313
  %v2092 = vunpack.c.h.b16 %v313
  %v2093 = vunpack.c.l.b16 %v314
  %v2094 = vunpack.c.h.b16 %v314
  %v2095 = vunpack.c.l.b16 %v315
  %v2096 = vunpack.c.h.b16 %v315
  %v2097 = vunpack.c.l.b16 %v316
  %v2098 = vunpack.c.h.b16 %v316
  %v2099 = vunpack.c.l.b16 %v317
  %v2100 = vunpack.c.h.b16 %v317
  %v2101 = vunpack.c.l.b16 %v318
  %v2102 = vunpack.c.h.b16 %v318
  %v2103 = vunpack.c.l.b16 %v319
  %v2104 = vunpack.c.h.b16 %v319
  %v2105 = vunpack.c.l.b16 %v320
  %v2106 = vunpack.c.h.b16 %v320
  %v2107 = vunpack.c.l.b16 %v321
  %v2108 = vunpack.c.h.b16 %v321
  %v2109 = vunpack.c.l.b16 %v322
  %v2110 = vunpack.c.h.b16 %v322
  %v2111 = vunpack.c.l.b16 %v323
  %v2112 = vunpack.c.h.b16 %v323
  %v2113 = vunpack.c.l.b16 %v324
  %v2114 = vunpack.c.h.b16 %v324
  %v2115 = vunpack.c.l.b16 %v325
  %v2116 = vunpack.c.h.b16 %v325
  %v2117 = vunpack.c.l.b16 %v326
  %v2118 = vunpack.c.h.b16 %v326
  %v2119 = vunpack.c.l.b16 %v327
  %v2120 = vunpack.c.h.b16 %v327
  %v2121 = vunpack.c.l.b16 %v328
  %v2122 = vunpack.c.h.b16 %v328
  %v2123 = vunpack.c.l.b16 %v329
  %v2124 = vunpack.c.h.b16 %v329
  %v2125 = vunpack.c.l.b16 %v330
  %v2126 = vunpack.c.h.b16 %v330
  %v2127 = vunpack.c.l.b16 %v331
  %v2128 = vunpack.c.h.b16 %v331
  %v2129 = vunpack.c.l.b16 %v332
  %v2130 = vunpack.c.h.b16 %v332
  %v2131 = vunpack.c.l.b16 %v333
  %v2132 = vunpack.c.h.b16 %v333
  %v2133 = vunpack.c.l.b16 %v334
  %v2134 = vunpack.c.h.b16 %v334
  %v2135 = vunpack.c.l.b16 %v335
  %v2136 = vunpack.c.h.b16 %v335
  %v2137 = vunpack.c.l.b16 %v336
  %v2138 = vunpack.c.h.b16 %v336
  %v2139 = vunpack.c.l.b16 %v337
  %v2140 = vunpack.c.h.b16 %v337
  %v2141 = vunpack.c.l.b16 %v338
  %v2142 = vunpack.c.h.b16 %v338
  %v2143 = vunpack.c.l.b16 %v339
  %v2144 = vunpack.c.h.b16 %v339
  %v2145 = vunpack.c.l.b16 %v340
  %v2146 = vunpack.c.h.b16 %v340
  %v2147 = vunpack.c.l.b16 %v341
  %v2148 = vunpack.c.h.b16 %v341
  %v2149 = vunpack.c.l.b16 %v342
  %v2150 = vunpack.c.h.b16 %v342
  %v2151 = vunpack.c.l.b16 %v343
  %v2152 = vunpack.c.h.b16 %v343
  %v2153 = vunpack.c.l.b16 %v344
  %v2154 = vunpack.c.h.b16 %v344
  %v2155 = vunpack.c.l.b16 %v345
  %v2156 = vunpack.c.h.b16 %v345
  %v2157 = vunpack.c.l.b16 %v346
  %v2158 = vunpack.c.h.b16 %v346
  %v2159 = vunpack.c.l.b16 %v347
  %v2160 = vunpack.c.h.b16 %v347
  %v2161 = vunpack.c.l.b16 %v348
  %v2162 = vunpack.c.h.b16 %v348
  %v2163 = vunpack.c.l.b16 %v349
  %v2164 = vunpack.c.h.b16 %v349
  %v2165 = vunpack.c.l.b16 %v350
  %v2166 = vunpack.c.h.b16 %v350
  %v2167 = vunpack.c.l.b16 %v351
  %v2168 = vunpack.c.h.b16 %v351
  %v2169 = vunpack.c.l.b16 %v352
  %v2170 = vunpack.c.h.b16 %v352
  %v2171 = vunpack.c.l.b16 %v353
  %v2172 = vunpack.c.h.b16 %v353
  %v2173 = vunpack.c.l.b16 %v354
  %v2174 = vunpack.c.h.b16 %v354
  %v2175 = vunpack.c.l.b16 %v355
  %v2176 = vunpack.c.h.b16 %v355
  %v2177 = vunpack.c.l.b16 %v356
  %v2178 = vunpack.c.h.b16 %v356
  %v2179 = vunpack.c.l.b16 %v357
  %v2180 = vunpack.c.h.b16 %v357
  %v2181 = vunpack.c.l.b16 %v358
  %v2182 = vunpack.c.h.b16 %v358
  %v2183 = vunpack.c.l.b16 %v359
  %v2184 = vunpack.c.h.b16 %v359
  %v2185 = vunpack.c.l.b16 %v360
  %v2186 = vunpack.c.h.b16 %v360
  %v2187 = vunpack.c.l.b16 %v361
  %v2188 = vunpack.c.h.b16 %v361
  %v2189 = vunpack.c.l.b16 %v362
  %v2190 = vunpack.c.h.b16 %v362
  %v2191 = vunpack.c.l.b16 %v363
  %v2192 = vunpack.c.h.b16 %v363
  %v2193 = vunpack.c.l.b16 %v364
  %v2194 = vunpack.c.h.b16 %v364
  %v2195 = vunpack.c.l.b16 %v365
  %v2196 = vunpack.c.h.b16 %v365
  %v2197 = vunpack.c.l.b16 %v366
  %v2198 = vunpack.c.h.b16 %v366
  %v2199 = vunpack.c.l.b16 %v367
  %v2200 = vunpack.c.h.b16 %v367
  %v2201 = vunpack.c.l.b16 %v368
  %v2202 = vunpack.c.h.b16 %v368
  %v2203 = vunpack.c.l.b16 %v369
  %v2204 = vunpack.c.h.b16 %v369
  %v2205 = vunpack.c.l.b16 %v370
  %v2206 = vunpack.c.h.b16 %v370
  %v2207 = vunpack.c.l.b16 %v371
  %v2208 = vunpack.c.h.b16 %v371
  %v2209 = vunpack.c.l.b16 %v372
  %v2210 = vunpack.c.h.b16 %v372
  %v2211 = vunpack.c.l.b16 %v373
  %v2212 = vunpack.c.h.b16 %v373
  %v2213 = vunpack.c.l.b16 %v374
  %v2214 = vunpack.c.h.b16 %v374
  %v2215 = vunpack.c.l.b16 %v375
  %v2216 = vunpack.c.h.b16 %v375
  %v2217 = vunpack.c.l.b16 %v376
  %v2218 = vunpack.c.h.b16 %v376
  %v2219 = vunpack.c.l.b16 %v377
  %v2220 = vunpack.c.h.b16 %v377
  %v2221 = vunpack.c.l.b16 %v378
  %v2222 = vunpack.c.h.b16 %v378
  %v2223 = vunpack.c.l.b16 %v379
  %v2224 = vunpack.c.h.b16 %v379
  %v2225 = vunpack.c.l.b16 %v380
  %v2226 = vunpack.c.h.b16 %v380
  %v2227 = vunpack.c.l.b16 %v381
  %v2228 = vunpack.c.h.b16 %v381
  %v2229 = vunpack.c.l.b16 %v382
  %v2230 = vunpack.c.h.b16 %v382
  %v2231 = vunpack.c.l.b16 %v383
  %v2232 = vunpack.c.h.b16 %v383
  %v2233 = vunpack.c.l.b16 %v384
  %v2234 = vunpack.c.h.b16 %v384
  %v2235 = vunpack.c.l.b16 %v385
  %v2236 = vunpack.c.h.b16 %v385
  %v2237 = vunpack.c.l.b16 %v386
  %v2238 = vunpack.c.h.b16 %v386
  %v2239 = vunpack.c.l.b16 %v387
  %v2240 = vunpack.c.h.b16 %v387
  %v2241 = vunpack.c.l.b16 %v388
  %v2242 = vunpack.c.h.b16 %v388
  %v2243 = vunpack.c.l.b16 %v389
  %v2244 = vunpack.c.h.b16 %v389
  %v2245 = vunpack.c.l.b16 %v390
  %v2246 = vunpack.c.h.b16 %v390
  %v2247 = vunpack.c.l.b16 %v391
  %v2248 = vunpack.c.h.b16 %v391
  %v2249 = vunpack.c.l.b16 %v392
  %v2250 = vunpack.c.h.b16 %v392
  %v2251 = vunpack.c.l.b16 %v393
  %v2252 = vunpack.c.h.b16 %v393
  %v2253 = vunpack.c.l.b16 %v394
  %v2254 = vunpack.c.h.b16 %v394
  %v2255 = vunpack.c.l.b16 %v395
  %v2256 = vunpack.c.h.b16 %v395
  %v2257 = vunpack.c.l.b16 %v396
  %v2258 = vunpack.c.h.b16 %v396
  %v2259 = vunpack.c.l.b16 %v397
  %v2260 = vunpack.c.h.b16 %v397
  %v2261 = vunpack.c.l.b16 %v398
  %v2262 = vunpack.c.h.b16 %v398
  %v2263 = vunpack.c.l.b16 %v399
  %v2264 = vunpack.c.h.b16 %v399
  %v2265 = vunpack.c.l.b16 %v400
  %v2266 = vunpack.c.h.b16 %v400
  %v2267 = vunpack.c.l.b16 %v401
  %v2268 = vunpack.c.h.b16 %v401
  %v2269 = vunpack.c.l.b16 %v402
  %v2270 = vunpack.c.h.b16 %v402
  %v2271 = vunpack.c.l.b16 %v403
  %v2272 = vunpack.c.h.b16 %v403
  %v2273 = vunpack.c.l.b16 %v404
  %v2274 = vunpack.c.h.b16 %v404
  %v2275 = vunpack.c.l.b16 %v405
  %v2276 = vunpack.c.h.b16 %v405
  %v2277 = vunpack.c.l.b16 %v406
  %v2278 = vunpack.c.h.b16 %v406
  %v2279 = vunpack.c.l.b16 %v407
  %v2280 = vunpack.c.h.b16 %v407
  %v2281 = vunpack.c.l.b16 %v408
  %v2282 = vunpack.c.h.b16 %v408
  %v2283 = vunpack.c.l.b16 %v409
  %v2284 = vunpack.c.h.b16 %v409
  %v2285 = vunpack.c.l.b16 %v410
  %v2286 = vunpack.c.h.b16 %v410
  %v2287 = vunpack.c.l.b16 %v411
  %v2288 = vunpack.c.h.b16 %v411
  %v2289 = vunpack.c.l.b16 %v412
  %v2290 = vunpack.c.h.b16 %v412
  %v2291 = vunpack.c.l.b16 %v413
  %v2292 = vunpack.c.h.b16 %v413
  %v2293 = vunpack.c.l.b16 %v414
  %v2294 = vunpack.c.h.b16 %v414
  %v2295 = vunpack.c.l.b16 %v415
  %v2296 = vunpack.c.h.b16 %v415
  %v2297 = vunpack.c.l.b16 %v416
  %v2298 = vunpack.c.h.b16 %v416
  %v2299 = vunpack.c.l.b16 %v417
  %v2300 = vunpack.c.h.b16 %v417
  %v2301 = vunpack.c.l.b16 %v418
  %v2302 = vunpack.c.h.b16 %v418
  %v2303 = vunpack.c.l.b16 %v419
  %v2304 = vunpack.c.h.b16 %v419
  %v2305 = vunpack.c.l.b16 %v420
  %v2306 = vunpack.c.h.b16 %v420
  %v2307 = vunpack.c.l.b16 %v421
  %v2308 = vunpack.c.h.b16 %v421
  %v2309 = vunpack.c.l.b16 %v422
  %v2310 = vunpack.c.h.b16 %v422
  %v2311 = vunpack.c.l.b16 %v423
  %v2312 = vunpack.c.h.b16 %v423
  %v2313 = vunpack.c.l.b16 %v424
  %v2314 = vunpack.c.h.b16 %v424
  %v2315 = vunpack.c.l.b16 %v425
  %v2316 = vunpack.c.h.b16 %v425
  %v2317 = vunpack.c.l.b16 %v426
  %v2318 = vunpack.c.h.b16 %v426
  %v2319 = vunpack.c.l.b16 %v427
  %v2320 = vunpack.c.h.b16 %v427
  %v2321 = vunpack.c.l.b16 %v428
  %v2322 = vunpack.c.h.b16 %v428
  %v2323 = vunpack.c.l.b16 %v429
  %v2324 = vunpack.c.h.b16 %v429
  %v2325 = vunpack.c.l.b16 %v430
  %v2326 = vunpack.c.h.b16 %v430
  %v2327 = vunpack.c.l.b16 %v431
  %v2328 = vunpack.c.h.b16 %v431
  %v2329 = vunpack.c.l.b16 %v432
  %v2330 = vunpack.c.h.b16 %v432
  %v2331 = vunpack.c.l.b16 %v433
  %v2332 = vunpack.c.h.b16 %v433
  %v2333 = vunpack.c.l.b16 %v434
  %v2334 = vunpack.c.h.b16 %v434
  %v2335 = vunpack.c.l.b16 %v435
  %v2336 = vunpack.c.h.b16 %v435
  %v2337 = vunpack.c.l.b16 %v436
  %v2338 = vunpack.c.h.b16 %v436
  %v2339 = vunpack.c.l.b16 %v437
  %v2340 = vunpack.c.h.b16 %v437
  %v2341 = vunpack.c.l.b16 %v438
  %v2342 = vunpack.c.h.b16 %v438
  %v2343 = vunpack.c.l.b16 %v439
  %v2344 = vunpack.c.h.b16 %v439
  %v2345 = vunpack.c.l.b16 %v440
  %v2346 = vunpack.c.h.b16 %v440
  %v2347 = vunpack.c.l.b16 %v441
  %v2348 = vunpack.c.h.b16 %v441
  %v2349 = vunpack.c.l.b16 %v442
  %v2350 = vunpack.c.h.b16 %v442
  %v2351 = vunpack.c.l.b16 %v443
  %v2352 = vunpack.c.h.b16 %v443
  %v2353 = vunpack.c.l.b16 %v444
  %v2354 = vunpack.c.h.b16 %v444
  %v2355 = vunpack.c.l.b16 %v445
  %v2356 = vunpack.c.h.b16 %v445
  %v2357 = vunpack.c.l.b16 %v446
  %v2358 = vunpack.c.h.b16 %v446
  %v2359 = vunpack.c.l.b16 %v447
  %v2360 = vunpack.c.h.b16 %v447
  %v2361 = vunpack.c.l.b16 %v448
  %v2362 = vunpack.c.h.b16 %v448
  %v2363 = vunpack.c.l.b16 %v449
  %v2364 = vunpack.c.h.b16 %v449
  %v2365 = vunpack.c.l.b16 %v450
  %v2366 = vunpack.c.h.b16 %v450
  %v2367 = vunpack.c.l.b16 %v451
  %v2368 = vunpack.c.h.b16 %v451
  %v2369 = vunpack.c.l.b16 %v452
  %v2370 = vunpack.c.h.b16 %v452
  %v2371 = vunpack.c.l.b16 %v453
  %v2372 = vunpack.c.h.b16 %v453
  %v2373 = vunpack.c.l.b16 %v454
  %v2374 = vunpack.c.h.b16 %v454
  %v2375 = vunpack.c.l.b16 %v455
  %v2376 = vunpack.c.h.b16 %v455
  %v2377 = vunpack.c.l.b16 %v456
  %v2378 = vunpack.c.h.b16 %v456
  %v2379 = vunpack.c.l.b16 %v457
  %v2380 = vunpack.c.h.b16 %v457
  %v2381 = vunpack.c.l.b16 %v458
  %v2382 = vunpack.c.h.b16 %v458
  %v2383 = vunpack.c.l.b16 %v459
  %v2384 = vunpack.c.h.b16 %v459
  %v2385 = vunpack.c.l.b16 %v460
  %v2386 = vunpack.c.h.b16 %v460
  %v2387 = vunpack.c.l.b16 %v461
  %v2388 = vunpack.c.h.b16 %v461
  %v2389 = vunpack.c.l.b16 %v462
  %v2390 = vunpack.c.h.b16 %v462
  %v2391 = vunpack.c.l.b16 %v463
  %v2392 = vunpack.c.h.b16 %v463
  %v2393 = vunpack.c.l.b16 %v464
  %v2394 = vunpack.c.h.b16 %v464
  %v2395 = vunpack.c.l.b16 %v465
  %v2396 = vunpack.c.h.b16 %v465
  %v2397 = vunpack.c.l.b16 %v466
  %v2398 = vunpack.c.h.b16 %v466
  %v2399 = vunpack.c.l.b16 %v467
  %v2400 = vunpack.c.h.b16 %v467
  %v2401 = vunpack.c.l.b16 %v468
  %v2402 = vunpack.c.h.b16 %v468
  %v2403 = vunpack.c.l.b16 %v469
  %v2404 = vunpack.c.h.b16 %v469
  %v2405 = vunpack.c.l.b16 %v470
  %v2406 = vunpack.c.h.b16 %v470
  %v2407 = vunpack.c.l.b16 %v471
  %v2408 = vunpack.c.h.b16 %v471
  %v2409 = vunpack.c.l.b16 %v472
  %v2410 = vunpack.c.h.b16 %v472
  %v2411 = vunpack.c.l.b16 %v473
  %v2412 = vunpack.c.h.b16 %v473
  %v2413 = vunpack.c.l.b16 %v474
  %v2414 = vunpack.c.h.b16 %v474
  %v2415 = vunpack.c.l.b16 %v475
  %v2416 = vunpack.c.h.b16 %v475
  %v2417 = vunpack.c.l.b16 %v476
  %v2418 = vunpack.c.h.b16 %v476
  %v2419 = vunpack.c.l.b16 %v477
  %v2420 = vunpack.c.h.b16 %v477
  %v2421 = vunpack.c.l.b16 %v478
  %v2422 = vunpack.c.h.b16 %v478
  %v2423 = vunpack.c.l.b16 %v479
  %v2424 = vunpack.c.h.b16 %v479
  %v2425 = vunpack.c.l.b16 %v480
  %v2426 = vunpack.c.h.b16 %v480
  %v2427 = vunpack.c.l.b16 %v481
  %v2428 = vunpack.c.h.b16 %v481
  %v2429 = vunpack.c.l.b16 %v482
  %v2430 = vunpack.c.h.b16 %v482
  %v2431 = vunpack.c.l.b16 %v483
  %v2432 = vunpack.c.h.b16 %v483
  %v2433 = vunpack.c.l.b16 %v484
  %v2434 = vunpack.c.h.b16 %v484
  %v2435 = vunpack.c.l.b16 %v485
  %v2436 = vunpack.c.h.b16 %v485
  %v2437 = vunpack.c.l.b16 %v486
  %v2438 = vunpack.c.h.b16 %v486
  %v2439 = vunpack.c.l.b16 %v487
  %v2440 = vunpack.c.h.b16 %v487
  %v2441 = vunpack.c.l.b16 %v488
  %v2442 = vunpack.c.h.b16 %v488
  %v2443 = vunpack.c.l.b16 %v489
  %v2444 = vunpack.c.h.b16 %v489
  %v2445 = vunpack.c.l.b16 %v490
  %v2446 = vunpack.c.h.b16 %v490
  %v2447 = vunpack.c.l.b16 %v491
  %v2448 = vunpack.c.h.b16 %v491
  %v2449 = vunpack.c.l.b16 %v492
  %v2450 = vunpack.c.h.b16 %v492
  %v2451 = vunpack.c.l.b16 %v493
  %v2452 = vunpack.c.h.b16 %v493
  %v2453 = vunpack.c.l.b16 %v494
  %v2454 = vunpack.c.h.b16 %v494
  %v2455 = vunpack.c.l.b16 %v495
  %v2456 = vunpack.c.h.b16 %v495
  %v2457 = vunpack.c.l.b16 %v496
  %v2458 = vunpack.c.h.b16 %v496
  %v2459 = vunpack.c.l.b16 %v497
  %v2460 = vunpack.c.h.b16 %v497
  %v2461 = vunpack.c.l.b16 %v498
  %v2462 = vunpack.c.h.b16 %v498
  %v2463 = vunpack.c.l.b16 %v499
  %v2464 = vunpack.c.h.b16 %v499
  %v2465 = vunpack.c.l.b16 %v500
  %v2466 = vunpack.c.h.b16 %v500
  %v2467 = vunpack.c.l.b16 %v501
  %v2468 = vunpack.c.h.b16 %v501
  %v2469 = vunpack.c.l.b16 %v502
  %v2470 = vunpack.c.h.b16 %v502
  %v2471 = vunpack.c.l.b16 %v503
  %v2472 = vunpack.c.h.b16 %v503
  %v2473 = vunpack.c.l.b16 %v504
  %v2474 = vunpack.c.h.b16 %v504
  %v2475 = vunpack.c.l.b16 %v505
  %v2476 = vunpack.c.h.b16 %v505
  %v2477 = vunpack.c.l.b16 %v506
  %v2478 = vunpack.c.h.b16 %v506
  %v2479 = vunpack.c.l.b16 %v507
  %v2480 = vunpack.c.h.b16 %v507
  %v2481 = vunpack.c.l.b16 %v508
  %v2482 = vunpack.c.h.b16 %v508
  %v2483 = vunpack.c.l.b16 %v509
  %v2484 = vunpack.c.h.b16 %v509
  %v2485 = vunpack.c.l.b16 %v510
  %v2486 = vunpack.c.h.b16 %v510
  %v2487 = vunpack.c.l.b16 %v511
  %v2488 = vunpack.c.h.b16 %v511
  %v2489 = vunpack.c.l.b16 %v512
  %v2490 = vunpack.c.h.b16 %v512
  %v2491 = vunpack.c.l.b16 %v513
  %v2492 = vunpack.c.h.b16 %v513
  %v2493 = vunpack.c.l.b16 %v514
  %v2494 = vunpack.c.h.b16 %v514
  %v2495 = vunpack.c.l.b16 %v515
  %v2496 = vunpack.c.h.b16 %v515
  %v2497 = vunpack.c.l.b16 %v516
  %v2498 = vunpack.c.h.b16 %v516
  %v2499 = vunpack.c.l.b16 %v517
  %v2500 = vunpack.c.h.b16 %v517
  %v2501 = vunpack.c.l.b16 %v518
  %v2502 = vunpack.c.h.b16 %v518
  %v2503 = vunpack.c.l.b16 %v519
  %v2504 = vunpack.c.h.b16 %v519
  %v2505 = vunpack.c.l.b16 %v520
  %v2506 = vunpack.c.h.b16 %v520
  %v2507 = vunpack.c.l.b16 %v521
  %v2508 = vunpack.c.h.b16 %v521
  %v2509 = vunpack.c.l.b16 %v522
  %v2510 = vunpack.c.h.b16 %v522
  %v2511 = vunpack.c.l.b16 %v523
  %v2512 = vunpack.c.h.b16 %v523
  %v2513 = vunpack.c.l.b16 %v524
  %v2514 = vunpack.c.h.b16 %v524
  %v2515 = vunpack.c.l.b16 %v525
  %v2516 = vunpack.c.h.b16 %v525
  %v2517 = vunpack.c.l.b16 %v526
  %v2518 = vunpack.c.h.b16 %v526
  %v2519 = vunpack.c.l.b16 %v527
  %v2520 = vunpack.c.h.b16 %v527
  %v2521 = vunpack.c.l.b16 %v528
  %v2522 = vunpack.c.h.b16 %v528
  %v2523 = vunpack.c.l.b16 %v529
  %v2524 = vunpack.c.h.b16 %v529
  %v2525 = vunpack.c.l.b16 %v530
  %v2526 = vunpack.c.h.b16 %v530
  %v2527 = vunpack.c.l.b16 %v531
  %v2528 = vunpack.c.h.b16 %v531
  %v2529 = vunpack.c.l.b16 %v532
  %v2530 = vunpack.c.h.b16 %v532
  %v2531 = vunpack.c.l.b16 %v533
  %v2532 = vunpack.c.h.b16 %v533
  %v2533 = vunpack.c.l.b16 %v534
  %v2534 = vunpack.c.h.b16 %v534
  %v2535 = vunpack.c.l.b16 %v535
  %v2536 = vunpack.c.h.b16 %v535
  %v2537 = vunpack.c.l.b16 %v536
  %v2538 = vunpack.c.h.b16 %v536
  %v2539 = vunpack.c.l.b16 %v537
  %v2540 = vunpack.c.h.b16 %v537
  %v2541 = vunpack.c.l.b16 %v538
  %v2542 = vunpack.c.h.b16 %v538
  %v2543 = vunpack.c.l.b16 %v539
  %v2544 = vunpack.c.h.b16 %v539
  %v2545 = vunpack.c.l.b16 %v540
  %v2546 = vunpack.c.h.b16 %v540
  %v2547 = vunpack.c.l.b16 %v541
  %v2548 = vunpack.c.h.b16 %v541
  %v2549 = vunpack.c.l.b16 %v542
  %v2550 = vunpack.c.h.b16 %v542
  %v2551 = vunpack.c.l.b16 %v543
  %v2552 = vunpack.c.h.b16 %v543
  %v2553 = vunpack.c.l.b16 %v544
  %v2554 = vunpack.c.h.b16 %v544
  %v2555 = vunpack.c.l.b16 %v545
  %v2556 = vunpack.c.h.b16 %v545
  %v2557 = vunpack.c.l.b16 %v546
  %v2558 = vunpack.c.h.b16 %v546
  %v2559 = vunpack.c.l.b16 %v547
  %v2560 = vunpack.c.h.b16 %v547
  %v2561 = vunpack.c.l.b16 %v548
  %v2562 = vunpack.c.h.b16 %v548
  %v2563 = vunpack.c.l.b16 %v549
  %v2564 = vunpack.c.h.b16 %v549
  %v2565 = vunpack.c.l.b16 %v550
  %v2566 = vunpack.c.h.b16 %v550
  %v2567 = vunpack.c.l.b16 %v551
  %v2568 = vunpack.c.h.b16 %v551
  %v2569 = vunpack.c.l.b16 %v552
  %v2570 = vunpack.c.h.b16 %v552
  %v2571 = vunpack.c.l.b16 %v553
  %v2572 = vunpack.c.h.b16 %v553
  %v2573 = vunpack.c.l.b16 %v554
  %v2574 = vunpack.c.h.b16 %v554
  %v2575 = vunpack.c.l.b16 %v555
  %v2576 = vunpack.c.h.b16 %v555
  %v2577 = vunpack.c.l.b16 %v556
  %v2578 = vunpack.c.h.b16 %v556
  %v2579 = vunpack.c.l.b16 %v557
  %v2580 = vunpack.c.h.b16 %v557
  %v2581 = vunpack.c.l.b16 %v558
  %v2582 = vunpack.c.h.b16 %v558
  %v2583 = vunpack.c.l.b16 %v559
  %v2584 = vunpack.c.h.b16 %v559
  %v2585 = vunpack.c.l.b16 %v560
  %v2586 = vunpack.c.h.b16 %v560
  %v2587 = vunpack.c.l.b16 %v561
  %v2588 = vunpack.c.h.b16 %v561
  %v2589 = vunpack.c.l.b16 %v562
  %v2590 = vunpack.c.h.b16 %v562
  %v2591 = vunpack.c.l.b16 %v563
  %v2592 = vunpack.c.h.b16 %v563
  %v2593 = vunpack.c.l.b16 %v564
  %v2594 = vunpack.c.h.b16 %v564
  %v2595 = vunpack.c.l.b16 %v565
  %v2596 = vunpack.c.h.b16 %v565
  %v2597 = vunpack.c.l.b16 %v566
  %v2598 = vunpack.c.h.b16 %v566
  %v2599 = vunpack.c.l.b16 %v567
  %v2600 = vunpack.c.h.b16 %v567
  %v2601 = vunpack.c.l.b16 %v568
  %v2602 = vunpack.c.h.b16 %v568
  %v2603 = vunpack.c.l.b16 %v569
  %v2604 = vunpack.c.h.b16 %v569
  %v2605 = vunpack.c.l.b16 %v570
  %v2606 = vunpack.c.h.b16 %v570
  %v2607 = vunpack.c.l.b16 %v571
  %v2608 = vunpack.c.h.b16 %v571
  %v2609 = vunpack.c.l.b16 %v572
  %v2610 = vunpack.c.h.b16 %v572
  %v2611 = vunpack.c.l.b16 %v573
  %v2612 = vunpack.c.h.b16 %v573
  %v2613 = vunpack.c.l.b16 %v574
  %v2614 = vunpack.c.h.b16 %v574
  %v2615 = vunpack.c.l.b16 %v575
  %v2616 = vunpack.c.h.b16 %v575
  %v2617 = vunpack.c.l.b16 %v576
  %v2618 = vunpack.c.h.b16 %v576
  %v2619 = vunpack.c.l.b16 %v577
  %v2620 = vunpack.c.h.b16 %v577
  %v2621 = vunpack.c.l.b16 %v578
  %v2622 = vunpack.c.h.b16 %v578
  %v2623 = vunpack.c.l.b16 %v579
  %v2624 = vunpack.c.h.b16 %v579
  %v2625 = vunpack.c.l.b16 %v580
  %v2626 = vunpack.c.h.b16 %v580
  %v2627 = vunpack.c.l.b16 %v581
  %v2628 = vunpack.c.h.b16 %v581
  %v2629 = vunpack.c.l.b16 %v582
  %v2630 = vunpack.c.h.b16 %v582
  %v2631 = vunpack.c.l.b16 %v583
  %v2632 = vunpack.c.h.b16 %v583
  %v2633 = vunpack.c.l.b16 %v584
  %v2634 = vunpack.c.h.b16 %v584
  %v2635 = vunpack.c.l.b16 %v585
  %v2636 = vunpack.c.h.b16 %v585
  %v2637 = vunpack.c.l.b16 %v586
  %v2638 = vunpack.c.h.b16 %v586
  %v2639 = vunpack.c.l.b16 %v587
  %v2640 = vunpack.c.h.b16 %v587
  %v2641 = vunpack.c.l.b16 %v588
  %v2642 = vunpack.c.h.b16 %v588
  %v2643 = vunpack.c.l.b16 %v589
  %v2644 = vunpack.c.h.b16 %v589
  %v2645 = vunpack.c.l.b16 %v590
  %v2646 = vunpack.c.h.b16 %v590
  %v2647 = vunpack.c.l.b16 %v591
  %v2648 = vunpack.c.h.b16 %v591
  %v2649 = vunpack.c.l.b16 %v592
  %v2650 = vunpack.c.h.b16 %v592
  %v2651 = vunpack.c.l.b16 %v593
  %v2652 = vunpack.c.h.b16 %v593
  %v2653 = vunpack.c.l.b16 %v594
  %v2654 = vunpack.c.h.b16 %v594
  %v2655 = vunpack.c.l.b16 %v595
  %v2656 = vunpack.c.h.b16 %v595
  %v2657 = vunpack.c.l.b16 %v596
  %v2658 = vunpack.c.h.b16 %v596
  %v2659 = vunpack.c.l.b16 %v597
  %v2660 = vunpack.c.h.b16 %v597
  %v2661 = vunpack.c.l.b16 %v598
  %v2662 = vunpack.c.h.b16 %v598
  %v2663 = vunpack.c.l.b16 %v599
  %v2664 = vunpack.c.h.b16 %v599
  %v2665 = vunpack.c.l.b16 %v600
  %v2666 = vunpack.c.h.b16 %v600
  %v2667 = vunpack.c.l.b16 %v601
  %v2668 = vunpack.c.h.b16 %v601
  %v2669 = vunpack.c.l.b16 %v602
  %v2670 = vunpack.c.h.b16 %v602
  %v2671 = vunpack.c.l.b16 %v603
  %v2672 = vunpack.c.h.b16 %v603
  %v2673 = vunpack.c.l.b16 %v604
  %v2674 = vunpack.c.h.b16 %v604
  %v2675 = vunpack.c.l.b16 %v605
  %v2676 = vunpack.c.h.b16 %v605
  %v2677 = vunpack.c.l.b16 %v606
  %v2678 = vunpack.c.h.b16 %v606
  %v2679 = vunpack.c.l.b16 %v607
  %v2680 = vunpack.c.h.b16 %v607
  %v2681 = vunpack.c.l.b16 %v608
  %v2682 = vunpack.c.h.b16 %v608
  %v2683 = vunpack.c.l.b16 %v609
  %v2684 = vunpack.c.h.b16 %v609
  %v2685 = vunpack.c.l.b16 %v610
  %v2686 = vunpack.c.h.b16 %v610
  %v2687 = vunpack.c.l.b16 %v611
  %v2688 = vunpack.c.h.b16 %v611
  %v2689 = vunpack.c.l.b16 %v612
  %v2690 = vunpack.c.h.b16 %v612
  %v2691 = vunpack.c.l.b16 %v613
  %v2692 = vunpack.c.h.b16 %v613
  %v2693 = vunpack.c.l.b16 %v614
  %v2694 = vunpack.c.h.b16 %v614
  %v2695 = vunpack.c.l.b16 %v615
  %v2696 = vunpack.c.h.b16 %v615
  %v2697 = vunpack.c.l.b16 %v616
  %v2698 = vunpack.c.h.b16 %v616
  %v2699 = vunpack.c.l.b16 %v617
  %v2700 = vunpack.c.h.b16 %v617
  %v2701 = vunpack.c.l.b16 %v618
  %v2702 = vunpack.c.h.b16 %v618
  %v2703 = vunpack.c.l.b16 %v619
  %v2704 = vunpack.c.h.b16 %v619
  %v2705 = vunpack.c.l.b16 %v620
  %v2706 = vunpack.c.h.b16 %v620
  %v2707 = vunpack.c.l.b16 %v621
  %v2708 = vunpack.c.h.b16 %v621
  %v2709 = vunpack.c.l.b16 %v622
  %v2710 = vunpack.c.h.b16 %v622
  %v2711 = vunpack.c.l.b16 %v623
  %v2712 = vunpack.c.h.b16 %v623
  %v2713 = vunpack.c.l.b16 %v624
  %v2714 = vunpack.c.h.b16 %v624
  %v2715 = vunpack.c.l.b16 %v625
  %v2716 = vunpack.c.h.b16 %v625
  %v2717 = vunpack.c.l.b16 %v626
  %v2718 = vunpack.c.h.b16 %v626
  %v2719 = vunpack.c.l.b16 %v627
  %v2720 = vunpack.c.h.b16 %v627
  %v2721 = vunpack.c.l.b16 %v628
  %v2722 = vunpack.c.h.b16 %v628
  %v2723 = vunpack.c.l.b16 %v629
  %v2724 = vunpack.c.h.b16 %v629
  %v2725 = vunpack.c.l.b16 %v630
  %v2726 = vunpack.c.h.b16 %v630
  %v2727 = vunpack.c.l.b16 %v631
  %v2728 = vunpack.c.h.b16 %v631
  %v2729 = vunpack.c.l.b16 %v632
  %v2730 = vunpack.c.h.b16 %v632
  %v2731 = vunpack.c.l.b16 %v633
  %v2732 = vunpack.c.h.b16 %v633
  %v2733 = vunpack.c.l.b16 %v634
  %v2734 = vunpack.c.h.b16 %v634
  %v2735 = vunpack.c.l.b16 %v635
  %v2736 = vunpack.c.h.b16 %v635
  %v2737 = vunpack.c.l.b16 %v636
  %v2738 = vunpack.c.h.b16 %v636
  %v2739 = vunpack.c.l.b16 %v637
  %v2740 = vunpack.c.h.b16 %v637
  %v2741 = vunpack.c.l.b16 %v638
  %v2742 = vunpack.c.h.b16 %v638
  %v2743 = vunpack.c.l.b16 %v639
  %v2744 = vunpack.c.h.b16 %v639
  %v2745 = vunpack.c.l.b16 %v640
  %v2746 = vunpack.c.h.b16 %v640
  %v2747 = vunpack.c.l.b16 %v641
  %v2748 = vunpack.c.h.b16 %v641
  %v2749 = vunpack.c.l.b16 %v642
  %v2750 = vunpack.c.h.b16 %v642
  %v2751 = vunpack.c.l.b16 %v643
  %v2752 = vunpack.c.h.b16 %v643
  %v2753 = vunpack.c.l.b16 %v644
  %v2754 = vunpack.c.h.b16 %v644
  %v2755 = vunpack.c.l.b16 %v645
  %v2756 = vunpack.c.h.b16 %v645
  %v2757 = vunpack.c.l.b16 %v646
  %v2758 = vunpack.c.h.b16 %v646
  %v2759 = vunpack.c.l.b16 %v647
  %v2760 = vunpack.c.h.b16 %v647
  %v2761 = vunpack.c.l.b16 %v648
  %v2762 = vunpack.c.h.b16 %v648
  %v2763 = vunpack.c.l.b16 %v649
  %v2764 = vunpack.c.h.b16 %v649
  %v2765 = vunpack.c.l.b16 %v650
  %v2766 = vunpack.c.h.b16 %v650
  %v2767 = vunpack.c.l.b16 %v651
  %v2768 = vunpack.c.h.b16 %v651
  %v2769 = vunpack.c.l.b16 %v652
  %v2770 = vunpack.c.h.b16 %v652
  %v2771 = vunpack.c.l.b16 %v653
  %v2772 = vunpack.c.h.b16 %v653
  %v2773 = vunpack.c.l.b16 %v654
  %v2774 = vunpack.c.h.b16 %v654
  %v2775 = vunpack.c.l.b16 %v655
  %v2776 = vunpack.c.h.b16 %v655
  %v2777 = vunpack.c.l.b16 %v656
  %v2778 = vunpack.c.h.b16 %v656
  %v2779 = vunpack.c.l.b16 %v657
  %v2780 = vunpack.c.h.b16 %v657
  %v2781 = vunpack.c.l.b16 %v658
  %v2782 = vunpack.c.h.b16 %v658
  %v2783 = vunpack.c.l.b16 %v659
  %v2784 = vunpack.c.h.b16 %v659
  %v2785 = vunpack.c.l.b16 %v660
  %v2786 = vunpack.c.h.b16 %v660
  %v2787 = vunpack.c.l.b16 %v661
  %v2788 = vunpack.c.h.b16 %v661
  %v2789 = vunpack.c.l.b16 %v662
  %v2790 = vunpack.c.h.b16 %v662
  %v2791 = vunpack.c.l.b16 %v663
  %v2792 = vunpack.c.h.b16 %v663
  %v2793 = vunpack.c.l.b16 %v664
  %v2794 = vunpack.c.h.b16 %v664
  %v2795 = vunpack.c.l.b16 %v665
  %v2796 = vunpack.c.h.b16 %v665
  %v2797 = vunpack.c.l.b16 %v666
  %v2798 = vunpack.c.h.b16 %v666
  %v2799 = vunpack.c.l.b16 %v667
  %v2800 = vunpack.c.h.b16 %v667
  %v2801 = vunpack.c.l.b16 %v668
  %v2802 = vunpack.c.h.b16 %v668
  %v2803 = vunpack.c.l.b16 %v669
  %v2804 = vunpack.c.h.b16 %v669
  %v2805 = vunpack.c.l.b16 %v670
  %v2806 = vunpack.c.h.b16 %v670
  %v2807 = vunpack.c.l.b16 %v671
  %v2808 = vunpack.c.h.b16 %v671
  %v2809 = vunpack.c.l.b16 %v672
  %v2810 = vunpack.c.h.b16 %v672
  %v2811 = vunpack.c.l.b16 %v673
  %v2812 = vunpack.c.h.b16 %v673
  %v2813 = vunpack.c.l.b16 %v674
  %v2814 = vunpack.c.h.b16 %v674
  %v2815 = vunpack.c.l.b16 %v675
  %v2816 = vunpack.c.h.b16 %v675
  %v2817 = vunpack.c.l.b16 %v676
  %v2818 = vunpack.c.h.b16 %v676
  %v2819 = vunpack.c.l.b16 %v677
  %v2820 = vunpack.c.h.b16 %v677
  %v2821 = vunpack.c.l.b16 %v678
  %v2822 = vunpack.c.h.b16 %v678
  %v2823 = vunpack.c.l.b16 %v679
  %v2824 = vunpack.c.h.b16 %v679
  %v2825 = vunpack.c.l.b16 %v680
  %v2826 = vunpack.c.h.b16 %v680
  %v2827 = vunpack.c.l.b16 %v681
  %v2828 = vunpack.c.h.b16 %v681
  %v2829 = vunpack.c.l.b16 %v682
  %v2830 = vunpack.c.h.b16 %v682
  %v2831 = vunpack.c.l.b16 %v683
  %v2832 = vunpack.c.h.b16 %v683
  %v2833 = vunpack.c.l.b16 %v684
  %v2834 = vunpack.c.h.b16 %v684
  %v2835 = vunpack.c.l.b16 %v685
  %v2836 = vunpack.c.h.b16 %v685
  %v2837 = vunpack.c.l.b16 %v686
  %v2838 = vunpack.c.h.b16 %v686
  %v2839 = vunpack.c.l.b16 %v687
  %v2840 = vunpack.c.h.b16 %v687
  %v2841 = vunpack.c.l.b16 %v688
  %v2842 = vunpack.c.h.b16 %v688
  %v2843 = vunpack.c.l.b16 %v689
  %v2844 = vunpack.c.h.b16 %v689
  %v2845 = vunpack.c.l.b16 %v690
  %v2846 = vunpack.c.h.b16 %v690
  %v2847 = vunpack.c.l.b16 %v691
  %v2848 = vunpack.c.h.b16 %v691
  %v2849 = vunpack.c.l.b16 %v692
  %v2850 = vunpack.c.h.b16 %v692
  %v2851 = vunpack.c.l.b16 %v693
  %v2852 = vunpack.c.h.b16 %v693
  %v2853 = vunpack.c.l.b16 %v694
  %v2854 = vunpack.c.h.b16 %v694
  %v2855 = vunpack.c.l.b16 %v695
  %v2856 = vunpack.c.h.b16 %v695
  %v2857 = vunpack.c.l.b16 %v696
  %v2858 = vunpack.c.h.b16 %v696
  %v2859 = vunpack.c.l.b16 %v697
  %v2860 = vunpack.c.h.b16 %v697
  %v2861 = vunpack.c.l.b16 %v698
  %v2862 = vunpack.c.h.b16 %v698
  %v2863 = vunpack.c.l.b16 %v699
  %v2864 = vunpack.c.h.b16 %v699
  %v2865 = vunpack.c.l.b16 %v700
  %v2866 = vunpack.c.h.b16 %v700
  %v2867 = vunpack.c.l.b16 %v701
  %v2868 = vunpack.c.h.b16 %v701
  %v2869 = vunpack.c.l.b16 %v702
  %v2870 = vunpack.c.h.b16 %v702
  %v2871 = vunpack.c.l.b16 %v703
  %v2872 = vunpack.c.h.b16 %v703
  %v2873 = vunpack.c.l.b16 %v704
  %v2874 = vunpack.c.h.b16 %v704
  %v2875 = vunpack.c.l.b16 %v705
  %v2876 = vunpack.c.h.b16 %v705
  %v2877 = vunpack.c.l.b16 %v706
  %v2878 = vunpack.c.h.b16 %v706
  %v2879 = vunpack.c.l.b16 %v707
  %v2880 = vunpack.c.h.b16 %v707
  %v2881 = vunpack.c.l.b16 %v708
  %v2882 = vunpack.c.h.b16 %v708
  %v2883 = vunpack.c.l.b16 %v709
  %v2884 = vunpack.c.h.b16 %v709
  %v2885 = vunpack.c.l.b16 %v710
  %v2886 = vunpack.c.h.b16 %v710
  %v2887 = vunpack.c.l.b16 %v711
  %v2888 = vunpack.c.h.b16 %v711
  %v2889 = vunpack.c.l.b16 %v712
  %v2890 = vunpack.c.h.b16 %v712
  %v2891 = vunpack.c.l.b16 %v713
  %v2892 = vunpack.c.h.b16 %v713
  %v2893 = vunpack.c.l.b16 %v714
  %v2894 = vunpack.c.h.b16 %v714
  %v2895 = vunpack.c.l.b16 %v715
  %v2896 = vunpack.c.h.b16 %v715
  %v2897 = vunpack.c.l.b16 %v716
  %v2898 = vunpack.c.h.b16 %v716
  %v2899 = vunpack.c.l.b16 %v717
  %v2900 = vunpack.c.h.b16 %v717
  %v2901 = vunpack.c.l.b16 %v718
  %v2902 = vunpack.c.h.b16 %v718
  %v2903 = vunpack.c.l.b16 %v719
  %v2904 = vunpack.c.h.b16 %v719
  %v2905 = vunpack.c.l.b16 %v720
  %v2906 = vunpack.c.h.b16 %v720
  %v2907 = vunpack.c.l.b16 %v721
  %v2908 = vunpack.c.h.b16 %v721
  %v2909 = vunpack.c.l.b16 %v722
  %v2910 = vunpack.c.h.b16 %v722
  %v2911 = vunpack.c.l.b16 %v723
  %v2912 = vunpack.c.h.b16 %v723
  %v2913 = vunpack.c.l.b16 %v724
  %v2914 = vunpack.c.h.b16 %v724
  %v2915 = vunpack.c.l.b16 %v725
  %v2916 = vunpack.c.h.b16 %v725
  %v2917 = vunpack.c.l.b16 %v726
  %v2918 = vunpack.c.h.b16 %v726
  %v2919 = vunpack.c.l.b16 %v727
  %v2920 = vunpack.c.h.b16 %v727
  %v2921 = vunpack.c.l.b16 %v728
  %v2922 = vunpack.c.h.b16 %v728
  %v2923 = vunpack.c.l.b16 %v729
  %v2924 = vunpack.c.h.b16 %v729
  %v2925 = vunpack.c.l.b16 %v730
  %v2926 = vunpack.c.h.b16 %v730
  %v2927 = vunpack.c.l.b16 %v731
  %v2928 = vunpack.c.h.b16 %v731
  %v2929 = vunpack.c.l.b16 %v732
  %v2930 = vunpack.c.h.b16 %v732
  %v2931 = vunpack.c.l.b16 %v733
  %v2932 = vunpack.c.h.b16 %v733
  %v2933 = vunpack.c.l.b16 %v734
  %v2934 = vunpack.c.h.b16 %v734
  %v2935 = vunpack.c.l.b16 %v735
  %v2936 = vunpack.c.h.b16 %v735
  %v2937 = vunpack.c.l.b16 %v736
  %v2938 = vunpack.c.h.b16 %v736
  %v2939 = vunpack.c.l.b16 %v737
  %v2940 = vunpack.c.h.b16 %v737
  %v2941 = vunpack.c.l.b16 %v738
  %v2942 = vunpack.c.h.b16 %v738
  %v2943 = vunpack.c.l.b16 %v739
  %v2944 = vunpack.c.h.b16 %v739
  %v2945 = vunpack.c.l.b16 %v740
  %v2946 = vunpack.c.h.b16 %v740
  %v2947 = vunpack.c.l.b16 %v741
  %v2948 = vunpack.c.h.b16 %v741
  %v2949 = vunpack.c.l.b16 %v742
  %v2950 = vunpack.c.h.b16 %v742
  %v2951 = vunpack.c.l.b16 %v743
  %v2952 = vunpack.c.h.b16 %v743
  %v2953 = vunpack.c.l.b16 %v744
  %v2954 = vunpack.c.h.b16 %v744
  %v2955 = vunpack.c.l.b16 %v745
  %v2956 = vunpack.c.h.b16 %v745
  %v2957 = vunpack.c.l.b16 %v746
  %v2958 = vunpack.c.h.b16 %v746
  %v2959 = vunpack.c.l.b16 %v747
  %v2960 = vunpack.c.h.b16 %v747
  %v2961 = vunpack.c.l.b16 %v748
  %v2962 = vunpack.c.h.b16 %v748
  %v2963 = vunpack.c.l.b16 %v749
  %v2964 = vunpack.c.h.b16 %v749
  %v2965 = vunpack.c.l.b16 %v750
  %v2966 = vunpack.c.h.b16 %v750
  %v2967 = vunpack.c.l.b16 %v751
  %v2968 = vunpack.c.h.b16 %v751
  %v2969 = vunpack.c.l.b16 %v752
  %v2970 = vunpack.c.h.b16 %v752
  %v2971 = vunpack.c.l.b16 %v753
  %v2972 = vunpack.c.h.b16 %v753
  %v2973 = vunpack.c.l.b16 %v754
  %v2974 = vunpack.c.h.b16 %v754
  %v2975 = vunpack.c.l.b16 %v755
  %v2976 = vunpack.c.h.b16 %v755
  %v2977 = vunpack.c.l.b16 %v756
  %v2978 = vunpack.c.h.b16 %v756
  %v2979 = vunpack.c.l.b16 %v757
  %v2980 = vunpack.c.h.b16 %v757
  %v2981 = vunpack.c.l.b16 %v758
  %v2982 = vunpack.c.h.b16 %v758
  %v2983 = vunpack.c.l.b16 %v759
  %v2984 = vunpack.c.h.b16 %v759
  %v2985 = vunpack.c.l.b16 %v760
  %v2986 = vunpack.c.h.b16 %v760
  %v2987 = vunpack.c.l.b16 %v761
  %v2988 = vunpack.c.h.b16 %v761
  %v2989 = vunpack.c.l.b16 %v762
  %v2990 = vunpack.c.h.b16 %v762
  %v2991 = vunpack.c.l.b16 %v763
  %v2992 = vunpack.c.h.b16 %v763
  %v2993 = vunpack.c.l.b16 %v764
  %v2994 = vunpack.c.h.b16 %v764
  %v2995 = vunpack.c.l.b16 %v765
  %v2996 = vunpack.c.h.b16 %v765
  %v2997 = vunpack.c.l.b16 %v766
  %v2998 = vunpack.c.h.b16 %v766
  %v2999 = vunpack.c.l.b16 %v767
  %v3000 = vunpack.c.h.b16 %v767
  %v3001 = vunpack.c.l.b16 %v768
  %v3002 = vunpack.c.h.b16 %v768
  %v3003 = vunpack.c.l.b16 %v769
  %v3004 = vunpack.c.h.b16 %v769
  %v3005 = vunpack.c.l.b16 %v770
  %v3006 = vunpack.c.h.b16 %v770
  %v3007 = vunpack.c.l.b16 %v771
  %v3008 = vunpack.c.h.b16 %v771
  %v3009 = vunpack.c.l.b16 %v772
  %v3010 = vunpack.c.h.b16 %v772
  %v3011 = vunpack.c.l.b16 %v773
  %v3012 = vunpack.c.h.b16 %v773
  %v3013 = vunpack.c.l.b16 %v774
  %v3014 = vunpack.c.h.b16 %v774
  %v3015 = vunpack.c.l.b16 %v775
  %v3016 = vunpack.c.h.b16 %v775
  %v3017 = vunpack.c.l.b16 %v776
  %v3018 = vunpack.c.h.b16 %v776
  %v3019 = vunpack.c.l.b16 %v777
  %v3020 = vunpack.c.h.b16 %v777
  %v3021 = vunpack.c.l.b16 %v778
  %v3022 = vunpack.c.h.b16 %v778
  %v3023 = vunpack.c.l.b16 %v779
  %v3024 = vunpack.c.h.b16 %v779
  %v3025 = vunpack.c.l.b16 %v780
  %v3026 = vunpack.c.h.b16 %v780
  %v3027 = vunpack.c.l.b16 %v781
  %v3028 = vunpack.c.h.b16 %v781
  %v3029 = vunpack.c.l.b16 %v782
  %v3030 = vunpack.c.h.b16 %v782
  %v3031 = vunpack.c.l.b16 %v783
  %v3032 = vunpack.c.h.b16 %v783
  %v3033 = vunpack.c.l.b16 %v784
  %v3034 = vunpack.c.h.b16 %v784
  %v3035 = vunpack.c.l.b16 %v785
  %v3036 = vunpack.c.h.b16 %v785
  %v3037 = vunpack.c.l.b16 %v786
  %v3038 = vunpack.c.h.b16 %v786
  %v3039 = vunpack.c.l.b16 %v787
  %v3040 = vunpack.c.h.b16 %v787
  %v3041 = vunpack.c.l.b16 %v788
  %v3042 = vunpack.c.h.b16 %v788
  %v3043 = vunpack.c.l.b16 %v789
  %v3044 = vunpack.c.h.b16 %v789
  %v3045 = vunpack.c.l.b16 %v790
  %v3046 = vunpack.c.h.b16 %v790
  %v3047 = vunpack.c.l.b16 %v791
  %v3048 = vunpack.c.h.b16 %v791
  %v3049 = vunpack.c.l.b16 %v792
  %v3050 = vunpack.c.h.b16 %v792
  %v3051 = vunpack.c.l.b16 %v793
  %v3052 = vunpack.c.h.b16 %v793
  %v3053 = vunpack.c.l.b16 %v794
  %v3054 = vunpack.c.h.b16 %v794
  %v3055 = vunpack.c.l.b16 %v795
  %v3056 = vunpack.c.h.b16 %v795
  %v3057 = vunpack.c.l.b16 %v796
  %v3058 = vunpack.c.h.b16 %v796
  %v3059 = vunpack.c.l.b16 %v797
  %v3060 = vunpack.c.h.b16 %v797
  %v3061 = vunpack.c.l.b16 %v798
  %v3062 = vunpack.c.h.b16 %v798
  %v3063 = vunpack.c.l.b16 %v799
  %v3064 = vunpack.c.h.b16 %v799
  %v3065 = vunpack.c.l.b16 %v800
  %v3066 = vunpack.c.h.b16 %v800
  %v3067 = vunpack.c.l.b16 %v801
  %v3068 = vunpack.c.h.b16 %v801
  %v3069 = vunpack.c.l.b16 %v802
  %v3070 = vunpack.c.h.b16 %v802
  %v3071 = vunpack.c.l.b16 %v803
  %v3072 = vunpack.c.h.b16 %v803
  %v3073 = vunpack.c.l.b16 %v804
  %v3074 = vunpack.c.h.b16 %v804
  %v3075 = vunpack.c.l.b16 %v805
  %v3076 = vunpack.c.h.b16 %v805
  %v3077 = vunpack.c.l.b16 %v806
  %v3078 = vunpack.c.h.b16 %v806
  %v3079 = vunpack.c.l.b16 %v807
  %v3080 = vunpack.c.h.b16 %v807
  %v3081 = vunpack.c.l.b16 %v808
  %v3082 = vunpack.c.h.b16 %v808
  %v3083 = vunpack.c.l.b16 %v809
  %v3084 = vunpack.c.h.b16 %v809
  %v3085 = vunpack.c.l.b16 %v810
  %v3086 = vunpack.c.h.b16 %v810
  %v3087 = vunpack.c.l.b16 %v811
  %v3088 = vunpack.c.h.b16 %v811
  %v3089 = vunpack.c.l.b16 %v812
  %v3090 = vunpack.c.h.b16 %v812
  %v3091 = vunpack.c.l.b16 %v813
  %v3092 = vunpack.c.h.b16 %v813
  %v3093 = vunpack.c.l.b16 %v814
  %v3094 = vunpack.c.h.b16 %v814
  %v3095 = vunpack.c.l.b16 %v815
  %v3096 = vunpack.c.h.b16 %v815
  %v3097 = vunpack.c.l.b16 %v816
  %v3098 = vunpack.c.h.b16 %v816
  %v3099 = vunpack.c.l.b16 %v817
  %v3100 = vunpack.c.h.b16 %v817
  %v3101 = vunpack.c.l.b16 %v818
  %v3102 = vunpack.c.h.b16 %v818
  %v3103 = vunpack.c.l.b16 %v819
  %v3104 = vunpack.c.h.b16 %v819
  %v3105 = vunpack.c.l.b16 %v820
  %v3106 = vunpack.c.h.b16 %v820
  %v3107 = vunpack.c.l.b16 %v821
  %v3108 = vunpack.c.h.b16 %v821
  %v3109 = vunpack.c.l.b16 %v822
  %v3110 = vunpack.c.h.b16 %v822
  %v3111 = vunpack.c.l.b16 %v823
  %v3112 = vunpack.c.h.b16 %v823
  %v3113 = vunpack.c.l.b16 %v824
  %v3114 = vunpack.c.h.b16 %v824
  %v3115 = vunpack.c.l.b16 %v825
  %v3116 = vunpack.c.h.b16 %v825
  %v3117 = vunpack.c.l.b16 %v826
  %v3118 = vunpack.c.h.b16 %v826
  %v3119 = vunpack.c.l.b16 %v827
  %v3120 = vunpack.c.h.b16 %v827
  %v3121 = vunpack.c.l.b16 %v828
  %v3122 = vunpack.c.h.b16 %v828
  %v3123 = vunpack.c.l.b16 %v829
  %v3124 = vunpack.c.h.b16 %v829
  %v3125 = vunpack.c.l.b16 %v830
  %v3126 = vunpack.c.h.b16 %v830
  %v3127 = vunpack.c.l.b16 %v831
  %v3128 = vunpack.c.h.b16 %v831
  %v3129 = vunpack.c.l.b16 %v832
  %v3130 = vunpack.c.h.b16 %v832
  %v3131 = vunpack.c.l.b16 %v833
  %v3132 = vunpack.c.h.b16 %v833
  %v3133 = vunpack.c.l.b16 %v834
  %v3134 = vunpack.c.h.b16 %v834
  %v3135 = vunpack.c.l.b16 %v835
  %v3136 = vunpack.c.h.b16 %v835
  %v3137 = vunpack.c.l.b16 %v836
  %v3138 = vunpack.c.h.b16 %v836
  %v3139 = vunpack.c.l.b16 %v837
  %v3140 = vunpack.c.h.b16 %v837
  %v3141 = vunpack.c.l.b16 %v838
  %v3142 = vunpack.c.h.b16 %v838
  %v3143 = vunpack.c.l.b16 %v839
  %v3144 = vunpack.c.h.b16 %v839
  %v3145 = vunpack.c.l.b16 %v840
  %v3146 = vunpack.c.h.b16 %v840
  %v3147 = vunpack.c.l.b16 %v841
  %v3148 = vunpack.c.h.b16 %v841
  %v3149 = vunpack.c.l.b16 %v842
  %v3150 = vunpack.c.h.b16 %v842
  %v3151 = vunpack.c.l.b16 %v843
  %v3152 = vunpack.c.h.b16 %v843
  %v3153 = vunpack.c.l.b16 %v844
  %v3154 = vunpack.c.h.b16 %v844
  %v3155 = vunpack.c.l.b16 %v845
  %v3156 = vunpack.c.h.b16 %v845
  %v3157 = vunpack.c.l.b16 %v846
  %v3158 = vunpack.c.h.b16 %v846
  %v3159 = vunpack.c.l.b16 %v847
  %v3160 = vunpack.c.h.b16 %v847
  %v3161 = vunpack.c.l.b16 %v848
  %v3162 = vunpack.c.h.b16 %v848
  %v3163 = vunpack.c.l.b16 %v849
  %v3164 = vunpack.c.h.b16 %v849
  %v3165 = vunpack.c.l.b16 %v850
  %v3166 = vunpack.c.h.b16 %v850
  %v3167 = vunpack.c.l.b16 %v851
  %v3168 = vunpack.c.h.b16 %v851
  %v3169 = vunpack.c.l.b16 %v852
  %v3170 = vunpack.c.h.b16 %v852
  %v3171 = vunpack.c.l.b16 %v853
  %v3172 = vunpack.c.h.b16 %v853
  %v3173 = vunpack.c.l.b16 %v854
  %v3174 = vunpack.c.h.b16 %v854
  %v3175 = vunpack.c.l.b16 %v855
  %v3176 = vunpack.c.h.b16 %v855
  %v3177 = vunpack.c.l.b16 %v856
  %v3178 = vunpack.c.h.b16 %v856
  %v3179 = vunpack.c.l.b16 %v857
  %v3180 = vunpack.c.h.b16 %v857
  %v3181 = vunpack.c.l.b16 %v858
  %v3182 = vunpack.c.h.b16 %v858
  %v3183 = vunpack.c.l.b16 %v859
  %v3184 = vunpack.c.h.b16 %v859
  %v3185 = vunpack.c.l.b16 %v860
  %v3186 = vunpack.c.h.b16 %v860
  %v3187 = vpack.c.b16 %v1655, %v1651
  %v3188 = vpack.c.b16 %v1656, %v1652
  %v3189 = vpack.c.b16 %v1657, %v1653
  %v3190 = vpack.c.b16 %v1658, %v1654
  %v3191 = vpack.c.b16 %v1663, %v1659
  %v3192 = vpack.c.b16 %v1664, %v1660
  %v3193 = vpack.c.b16 %v1665, %v1661
  %v3194 = vpack.c.b16 %v1666, %v1662
  %v3195 = vpack.c.b16 %v1671, %v1667
  %v3196 = vpack.c.b16 %v1672, %v1668
  %v3197 = vpack.c.b16 %v1673, %v1669
  %v3198 = vpack.c.b16 %v1674, %v1670
  %v3199 = vpack.c.b16 %v1679, %v1675
  %v3200 = vpack.c.b16 %v1680, %v1676
  %v3201 = vpack.c.b16 %v1681, %v1677
  %v3202 = vpack.c.b16 %v1682, %v1678
  %v3203 = vpack.c.b16 %v1687, %v1683
  %v3204 = vpack.c.b16 %v1688, %v1684
  %v3205 = vpack.c.b16 %v1689, %v1685
  %v3206 = vpack.c.b16 %v1690, %v1686
  %v3207 = vpack.c.b16 %v1695, %v1691
  %v3208 = vpack.c.b16 %v1696, %v1692
  %v3209 = vpack.c.b16 %v1697, %v1693
  %v3210 = vpack.c.b16 %v1698, %v1694
  %v3211 = vpack.c.b16 %v1703, %v1699
  %v3212 = vpack.c.b16 %v1704, %v1700
  %v3213 = vpack.c.b16 %v1705, %v1701
  %v3214 = vpack.c.b16 %v1706, %v1702
  %v3215 = vpack.c.b16 %v1711, %v1707
  %v3216 = vpack.c.b16 %v1712, %v1708
  %v3217 = vpack.c.b16 %v1713, %v1709
  %v3218 = vpack.c.b16 %v1714, %v1710
  %v3219 = vpack.c.b16 %v1719, %v1715
  %v3220 = vpack.c.b16 %v1720, %v1716
  %v3221 = vpack.c.b16 %v1721, %v1717
  %v3222 = vpack.c.b16 %v1722, %v1718
  %v3223 = vpack.c.b16 %v1727, %v1723
  %v3224 = vpack.c.b16 %v1728, %v1724
  %v3225 = vpack.c.b16 %v1729, %v1725
  %v3226 = vpack.c.b16 %v1730, %v1726
  %v3227 = vpack.c.b16 %v1735, %v1731
  %v3228 = vpack.c.b16 %v1736, %v1732
  %v3229 = vpack.c.b16 %v1737, %v1733
  %v3230 = vpack.c.b16 %v1738, %v1734
  %v3231 = vpack.c.b16 %v1743, %v1739
  %v3232 = vpack.c.b16 %v1744, %v1740
  %v3233 = vpack.c.b16 %v1745, %v1741
  %v3234 = vpack.c.b16 %v1746, %v1742
  %v3235 = vpack.c.b16 %v1751, %v1747
  %v3236 = vpack.c.b16 %v1752, %v1748
  %v3237 = vpack.c.b16 %v1753, %v1749
  %v3238 = vpack.c.b16 %v1754, %v1750
  %v3239 = vpack.c.b16 %v1759, %v1755
  %v3240 = vpack.c.b16 %v1760, %v1756
  %v3241 = vpack.c.b16 %v1761, %v1757
  %v3242 = vpack.c.b16 %v1762, %v1758
  %v3243 = vpack.c.b16 %v1767, %v1763
  %v3244 = vpack.c.b16 %v1768, %v1764
  %v3245 = vpack.c.b16 %v1769, %v1765
  %v3246 = vpack.c.b16 %v1770, %v1766
  %v3247 = vpack.c.b16 %v1775, %v1771
  %v3248 = vpack.c.b16 %v1776, %v1772
  %v3249 = vpack.c.b16 %v1777, %v1773
  %v3250 = vpack.c.b16 %v1778, %v1774
  %v3251 = vpack.c.b16 %v1783, %v1779
  %v3252 = vpack.c.b16 %v1784, %v1780
  %v3253 = vpack.c.b16 %v1785, %v1781
  %v3254 = vpack.c.b16 %v1786, %v1782
  %v3255 = vpack.c.b16 %v1791, %v1787
  %v3256 = vpack.c.b16 %v1792, %v1788
  %v3257 = vpack.c.b16 %v1793, %v1789
  %v3258 = vpack.c.b16 %v1794, %v1790
  %v3259 = vpack.c.b16 %v1799, %v1795
  %v3260 = vpack.c.b16 %v1800, %v1796
  %v3261 = vpack.c.b16 %v1801, %v1797
  %v3262 = vpack.c.b16 %v1802, %v1798
  %v3263 = vpack.c.b16 %v1807, %v1803
  %v3264 = vpack.c.b16 %v1808, %v1804
  %v3265 = vpack.c.b16 %v1809, %v1805
  %v3266 = vpack.c.b16 %v1810, %v1806
  %v3267 = vpack.c.b16 %v1815, %v1811
  %v3268 = vpack.c.b16 %v1816, %v1812
  %v3269 = vpack.c.b16 %v1817, %v1813
  %v3270 = vpack.c.b16 %v1818, %v1814
  %v3271 = vpack.c.b16 %v1823, %v1819
  %v3272 = vpack.c.b16 %v1824, %v1820
  %v3273 = vpack.c.b16 %v1825, %v1821
  %v3274 = vpack.c.b16 %v1826, %v1822
  %v3275 = vpack.c.b16 %v1831, %v1827
  %v3276 = vpack.c.b16 %v1832, %v1828
  %v3277 = vpack.c.b16 %v1833, %v1829
  %v3278 = vpack.c.b16 %v1834, %v1830
  %v3279 = vpack.c.b16 %v1839, %v1835
  %v3280 = vpack.c.b16 %v1840, %v1836
  %v3281 = vpack.c.b16 %v1841, %v1837
  %v3282 = vpack.c.b16 %v1842, %v1838
  %v3283 = vpack.c.b16 %v1847, %v1843
  %v3284 = vpack.c.b16 %v1848, %v1844
  %v3285 = vpack.c.b16 %v1849, %v1845
  %v3286 = vpack.c.b16 %v1850, %v1846
  %v3287 = vpack.c.b16 %v1855, %v1851
  %v3288 = vpack.c.b16 %v1856, %v1852
  %v3289 = vpack.c.b16 %v1857, %v1853
  %v3290 = vpack.c.b16 %v1858, %v1854
  %v3291 = vpack.c.b16 %v1863, %v1859
  %v3292 = vpack.c.b16 %v1864, %v1860
  %v3293 = vpack.c.b16 %v1865, %v1861
  %v3294 = vpack.c.b16 %v1866, %v1862
  %v3295 = vpack.c.b16 %v1871, %v1867
  %v3296 = vpack.c.b16 %v1872, %v1868
  %v3297 = vpack.c.b16 %v1873, %v1869
  %v3298 = vpack.c.b16 %v1874, %v1870
  %v3299 = vpack.c.b16 %v1879, %v1875
  %v3300 = vpack.c.b16 %v1880, %v1876
  %v3301 = vpack.c.b16 %v1881, %v1877
  %v3302 = vpack.c.b16 %v1882, %v1878
  %v3303 = vpack.c.b16 %v1887, %v1883
  %v3304 = vpack.c.b16 %v1888, %v1884
  %v3305 = vpack.c.b16 %v1889, %v1885
  %v3306 = vpack.c.b16 %v1890, %v1886
  %v3307 = vpack.c.b16 %v1895, %v1891
  %v3308 = vpack.c.b16 %v1896, %v1892
  %v3309 = vpack.c.b16 %v1897, %v1893
  %v3310 = vpack.c.b16 %v1898, %v1894
  %v3311 = vpack.c.b16 %v1903, %v1899
  %v3312 = vpack.c.b16 %v1904, %v1900
  %v3313 = vpack.c.b16 %v1905, %v1901
  %v3314 = vpack.c.b16 %v1906, %v1902
  %v3315 = vpack.c.b16 %v1911, %v1907
  %v3316 = vpack.c.b16 %v1912, %v1908
  %v3317 = vpack.c.b16 %v1913, %v1909
  %v3318 = vpack.c.b16 %v1914, %v1910
  %v3319 = vpack.c.b16 %v1919, %v1915
  %v3320 = vpack.c.b16 %v1920, %v1916
  %v3321 = vpack.c.b16 %v1921, %v1917
  %v3322 = vpack.c.b16 %v1922, %v1918
  %v3323 = vpack.c.b16 %v1927, %v1923
  %v3324 = vpack.c.b16 %v1928, %v1924
  %v3325 = vpack.c.b16 %v1929, %v1925
  %v3326 = vpack.c.b16 %v1930, %v1926
  %v3327 = vpack.c.b16 %v1935, %v1931
  %v3328 = vpack.c.b16 %v1936, %v1932
  %v3329 = vpack.c.b16 %v1937, %v1933
  %v3330 = vpack.c.b16 %v1938, %v1934
  %v3331 = vpack.c.b16 %v1943, %v1939
  %v3332 = vpack.c.b16 %v1944, %v1940
  %v3333 = vpack.c.b16 %v1945, %v1941
  %v3334 = vpack.c.b16 %v1946, %v1942
  %v3335 = vpack.c.b16 %v1951, %v1947
  %v3336 = vpack.c.b16 %v1952, %v1948
  %v3337 = vpack.c.b16 %v1953, %v1949
  %v3338 = vpack.c.b16 %v1954, %v1950
  %v3339 = vpack.c.b16 %v1959, %v1955
  %v3340 = vpack.c.b16 %v1960, %v1956
  %v3341 = vpack.c.b16 %v1961, %v1957
  %v3342 = vpack.c.b16 %v1962, %v1958
  %v3343 = vpack.c.b16 %v1967, %v1963
  %v3344 = vpack.c.b16 %v1968, %v1964
  %v3345 = vpack.c.b16 %v1969, %v1965
  %v3346 = vpack.c.b16 %v1970, %v1966
  %v3347 = vpack.c.b16 %v1975, %v1971
  %v3348 = vpack.c.b16 %v1976, %v1972
  %v3349 = vpack.c.b16 %v1977, %v1973
  %v3350 = vpack.c.b16 %v1978, %v1974
  %v3351 = vpack.c.b16 %v1983, %v1979
  %v3352 = vpack.c.b16 %v1984, %v1980
  %v3353 = vpack.c.b16 %v1985, %v1981
  %v3354 = vpack.c.b16 %v1986, %v1982
  %v3355 = vpack.c.b16 %v1991, %v1987
  %v3356 = vpack.c.b16 %v1992, %v1988
  %v3357 = vpack.c.b16 %v1993, %v1989
  %v3358 = vpack.c.b16 %v1994, %v1990
  %v3359 = vpack.c.b16 %v1999, %v1995
  %v3360 = vpack.c.b16 %v2000, %v1996
  %v3361 = vpack.c.b16 %v2001, %v1997
  %v3362 = vpack.c.b16 %v2002, %v1998
  %v3363 = vpack.c.b16 %v2007, %v2003
  %v3364 = vpack.c.b16 %v2008, %v2004
  %v3365 = vpack.c.b16 %v2009, %v2005
  %v3366 = vpack.c.b16 %v2010, %v2006
  %v3367 = vpack.c.b16 %v2015, %v2011
  %v3368 = vpack.c.b16 %v2016, %v2012
  %v3369 = vpack.c.b16 %v2017, %v2013
  %v3370 = vpack.c.b16 %v2018, %v2014
  %v3371 = vpack.c.b16 %v2023, %v2019
  %v3372 = vpack.c.b16 %v2024, %v2020
  %v3373 = vpack.c.b16 %v2025, %v2021
  %v3374 = vpack.c.b16 %v2026, %v2022
  %v3375 = vpack.c.b16 %v2031, %v2027
  %v3376 = vpack.c.b16 %v2032, %v2028
  %v3377 = vpack.c.b16 %v2033, %v2029
  %v3378 = vpack.c.b16 %v2034, %v2030
  %v3379 = vpack.c.b16 %v2039, %v2035
  %v3380 = vpack.c.b16 %v2040, %v2036
  %v3381 = vpack.c.b16 %v2041, %v2037
  %v3382 = vpack.c.b16 %v2042, %v2038
  %v3383 = vpack.c.b16 %v2047, %v2043
  %v3384 = vpack.c.b16 %v2048, %v2044
  %v3385 = vpack.c.b16 %v2049, %v2045
  %v3386 = vpack.c.b16 %v2050, %v2046
  %v3387 = vpack.c.b16 %v2055, %v2051
  %v3388 = vpack.c.b16 %v2056, %v2052
  %v3389 = vpack.c.b16 %v2057, %v2053
  %v3390 = vpack.c.b16 %v2058, %v2054
  %v3391 = vpack.c.b16 %v2063, %v2059
  %v3392 = vpack.c.b16 %v2064, %v2060
  %v3393 = vpack.c.b16 %v2065, %v2061
  %v3394 = vpack.c.b16 %v2066, %v2062
  %v3395 = vpack.c.b16 %v2071, %v2067
  %v3396 = vpack.c.b16 %v2072, %v2068
  %v3397 = vpack.c.b16 %v2073, %v2069
  %v3398 = vpack.c.b16 %v2074, %v2070
  %v3399 = vpack.c.b16 %v2079, %v2075
  %v3400 = vpack.c.b16 %v2080, %v2076
  %v3401 = vpack.c.b16 %v2081, %v2077
  %v3402 = vpack.c.b16 %v2082, %v2078
  %v3403 = vpack.c.b16 %v2087, %v2083
  %v3404 = vpack.c.b16 %v2088, %v2084
  %v3405 = vpack.c.b16 %v2089, %v2085
  %v3406 = vpack.c.b16 %v2090, %v2086
  %v3407 = vpack.c.b16 %v2095, %v2091
  %v3408 = vpack.c.b16 %v2096, %v2092
  %v3409 = vpack.c.b16 %v2097, %v2093
  %v3410 = vpack.c.b16 %v2098, %v2094
  %v3411 = vpack.c.b16 %v2103, %v2099
  %v3412 = vpack.c.b16 %v2104, %v2100
  %v3413 = vpack.c.b16 %v2105, %v2101
  %v3414 = vpack.c.b16 %v2106, %v2102
  %v3415 = vpack.c.b16 %v2111, %v2107
  %v3416 = vpack.c.b16 %v2112, %v2108
  %v3417 = vpack.c.b16 %v2113, %v2109
  %v3418 = vpack.c.b16 %v2114, %v2110
  %v3419 = vpack.c.b16 %v2119, %v2115
  %v3420 = vpack.c.b16 %v2120, %v2116
  %v3421 = vpack.c.b16 %v2121, %v2117
  %v3422 = vpack.c.b16 %v2122, %v2118
  %v3423 = vpack.c.b16 %v2127, %v2123
  %v3424 = vpack.c.b16 %v2128, %v2124
  %v3425 = vpack.c.b16 %v2129, %v2125
  %v3426 = vpack.c.b16 %v2130, %v2126
  %v3427 = vpack.c.b16 %v2135, %v2131
  %v3428 = vpack.c.b16 %v2136, %v2132
  %v3429 = vpack.c.b16 %v2137, %v2133
  %v3430 = vpack.c.b16 %v2138, %v2134
  %v3431 = vpack.c.b16 %v2143, %v2139
  %v3432 = vpack.c.b16 %v2144, %v2140
  %v3433 = vpack.c.b16 %v2145, %v2141
  %v3434 = vpack.c.b16 %v2146, %v2142
  %v3435 = vpack.c.b16 %v2151, %v2147
  %v3436 = vpack.c.b16 %v2152, %v2148
  %v3437 = vpack.c.b16 %v2153, %v2149
  %v3438 = vpack.c.b16 %v2154, %v2150
  %v3439 = vpack.c.b16 %v2159, %v2155
  %v3440 = vpack.c.b16 %v2160, %v2156
  %v3441 = vpack.c.b16 %v2161, %v2157
  %v3442 = vpack.c.b16 %v2162, %v2158
  %v3443 = vpack.c.b16 %v2167, %v2163
  %v3444 = vpack.c.b16 %v2168, %v2164
  %v3445 = vpack.c.b16 %v2169, %v2165
  %v3446 = vpack.c.b16 %v2170, %v2166
  %v3447 = vpack.c.b16 %v2175, %v2171
  %v3448 = vpack.c.b16 %v2176, %v2172
  %v3449 = vpack.c.b16 %v2177, %v2173
  %v3450 = vpack.c.b16 %v2178, %v2174
  %v3451 = vpack.c.b16 %v2183, %v2179
  %v3452 = vpack.c.b16 %v2184, %v2180
  %v3453 = vpack.c.b16 %v2185, %v2181
  %v3454 = vpack.c.b16 %v2186, %v2182
  %v3455 = vpack.c.b16 %v2191, %v2187
  %v3456 = vpack.c.b16 %v2192, %v2188
  %v3457 = vpack.c.b16 %v2193, %v2189
  %v3458 = vpack.c.b16 %v2194, %v2190
  %v3459 = vpack.c.b16 %v2199, %v2195
  %v3460 = vpack.c.b16 %v2200, %v2196
  %v3461 = vpack.c.b16 %v2201, %v2197
  %v3462 = vpack.c.b16 %v2202, %v2198
  %v3463 = vpack.c.b16 %v2207, %v2203
  %v3464 = vpack.c.b16 %v2208, %v2204
  %v3465 = vpack.c.b16 %v2209, %v2205
  %v3466 = vpack.c.b16 %v2210, %v2206
  %v3467 = vpack.c.b16 %v2215, %v2211
  %v3468 = vpack.c.b16 %v2216, %v2212
  %v3469 = vpack.c.b16 %v2217, %v2213
  %v3470 = vpack.c.b16 %v2218, %v2214
  %v3471 = vpack.c.b16 %v2223, %v2219
  %v3472 = vpack.c.b16 %v2224, %v2220
  %v3473 = vpack.c.b16 %v2225, %v2221
  %v3474 = vpack.c.b16 %v2226, %v2222
  %v3475 = vpack.c.b16 %v2231, %v2227
  %v3476 = vpack.c.b16 %v2232, %v2228
  %v3477 = vpack.c.b16 %v2233, %v2229
  %v3478 = vpack.c.b16 %v2234, %v2230
  %v3479 = vpack.c.b16 %v2239, %v2235
  %v3480 = vpack.c.b16 %v2240, %v2236
  %v3481 = vpack.c.b16 %v2241, %v2237
  %v3482 = vpack.c.b16 %v2242, %v2238
  %v3483 = vpack.c.b16 %v2247, %v2243
  %v3484 = vpack.c.b16 %v2248, %v2244
  %v3485 = vpack.c.b16 %v2249, %v2245
  %v3486 = vpack.c.b16 %v2250, %v2246
  %v3487 = vpack.c.b16 %v2255, %v2251
  %v3488 = vpack.c.b16 %v2256, %v2252
  %v3489 = vpack.c.b16 %v2257, %v2253
  %v3490 = vpack.c.b16 %v2258, %v2254
  %v3491 = vpack.c.b16 %v2263, %v2259
  %v3492 = vpack.c.b16 %v2264, %v2260
  %v3493 = vpack.c.b16 %v2265, %v2261
  %v3494 = vpack.c.b16 %v2266, %v2262
  %v3495 = vpack.c.b16 %v2271, %v2267
  %v3496 = vpack.c.b16 %v2272, %v2268
  %v3497 = vpack.c.b16 %v2273, %v2269
  %v3498 = vpack.c.b16 %v2274, %v2270
  %v3499 = vpack.c.b16 %v2279, %v2275
  %v3500 = vpack.c.b16 %v2280, %v2276
  %v3501 = vpack.c.b16 %v2281, %v2277
  %v3502 = vpack.c.b16 %v2282, %v2278
  %v3503 = vpack.c.b16 %v2287, %v2283
  %v3504 = vpack.c.b16 %v2288, %v2284
  %v3505 = vpack.c.b16 %v2289, %v2285
  %v3506 = vpack.c.b16 %v2290, %v2286
  %v3507 = vpack.c.b16 %v2295, %v2291
  %v3508 = vpack.c.b16 %v2296, %v2292
  %v3509 = vpack.c.b16 %v2297, %v2293
  %v3510 = vpack.c.b16 %v2298, %v2294
  %v3511 = vpack.c.b16 %v2303, %v2299
  %v3512 = vpack.c.b16 %v2304, %v2300
  %v3513 = vpack.c.b16 %v2305, %v2301
  %v3514 = vpack.c.b16 %v2306, %v2302
  %v3515 = vpack.c.b16 %v2311, %v2307
  %v3516 = vpack.c.b16 %v2312, %v2308
  %v3517 = vpack.c.b16 %v2313, %v2309
  %v3518 = vpack.c.b16 %v2314, %v2310
  %v3519 = vpack.c.b16 %v2319, %v2315
  %v3520 = vpack.c.b16 %v2320, %v2316
  %v3521 = vpack.c.b16 %v2321, %v2317
  %v3522 = vpack.c.b16 %v2322, %v2318
  %v3523 = vpack.c.b16 %v2327, %v2323
  %v3524 = vpack.c.b16 %v2328, %v2324
  %v3525 = vpack.c.b16 %v2329, %v2325
  %v3526 = vpack.c.b16 %v2330, %v2326
  %v3527 = vpack.c.b16 %v2335, %v2331
  %v3528 = vpack.c.b16 %v2336, %v2332
  %v3529 = vpack.c.b16 %v2337, %v2333
  %v3530 = vpack.c.b16 %v2338, %v2334
  %v3531 = vpack.c.b16 %v2343, %v2339
  %v3532 = vpack.c.b16 %v2344, %v2340
  %v3533 = vpack.c.b16 %v2345, %v2341
  %v3534 = vpack.c.b16 %v2346, %v2342
  %v3535 = vpack.c.b16 %v2351, %v2347
  %v3536 = vpack.c.b16 %v2352, %v2348
  %v3537 = vpack.c.b16 %v2353, %v2349
  %v3538 = vpack.c.b16 %v2354, %v2350
  %v3539 = vpack.c.b16 %v2359, %v2355
  %v3540 = vpack.c.b16 %v2360, %v2356
  %v3541 = vpack.c.b16 %v2361, %v2357
  %v3542 = vpack.c.b16 %v2362, %v2358
  %v3543 = vpack.c.b16 %v2367, %v2363
  %v3544 = vpack.c.b16 %v2368, %v2364
  %v3545 = vpack.c.b16 %v2369, %v2365
  %v3546 = vpack.c.b16 %v2370, %v2366
  %v3547 = vpack.c.b16 %v2375, %v2371
  %v3548 = vpack.c.b16 %v2376, %v2372
  %v3549 = vpack.c.b16 %v2377, %v2373
  %v3550 = vpack.c.b16 %v2378, %v2374
  %v3551 = vpack.c.b16 %v2383, %v2379
  %v3552 = vpack.c.b16 %v2384, %v2380
  %v3553 = vpack.c.b16 %v2385, %v2381
  %v3554 = vpack.c.b16 %v2386, %v2382
  %v3555 = vpack.c.b16 %v2391, %v2387
  %v3556 = vpack.c.b16 %v2392, %v2388
  %v3557 = vpack.c.b16 %v2393, %v2389
  %v3558 = vpack.c.b16 %v2394, %v2390
  %v3559 = vpack.c.b16 %v2399, %v2395
  %v3560 = vpack.c.b16 %v2400, %v2396
  %v3561 = vpack.c.b16 %v2401, %v2397
  %v3562 = vpack.c.b16 %v2402, %v2398
  %v3563 = vpack.c.b16 %v2407, %v2403
  %v3564 = vpack.c.b16 %v2408, %v2404
  %v3565 = vpack.c.b16 %v2409, %v2405
  %v3566 = vpack.c.b16 %v2410, %v2406
  %v3567 = vpack.c.b16 %v2415, %v2411
  %v3568 = vpack.c.b16 %v2416, %v2412
  %v3569 = vpack.c.b16 %v2417, %v2413
  %v3570 = vpack.c.b16 %v2418, %v2414
  %v3571 = vpack.c.b16 %v2423, %v2419
  %v3572 = vpack.c.b16 %v2424, %v2420
  %v3573 = vpack.c.b16 %v2425, %v2421
  %v3574 = vpack.c.b16 %v2426, %v2422
  %v3575 = vpack.c.b16 %v2431, %v2427
  %v3576 = vpack.c.b16 %v2432, %v2428
  %v3577 = vpack.c.b16 %v2433, %v2429
  %v3578 = vpack.c.b16 %v2434, %v2430
  %v3579 = vpack.c.b16 %v2439, %v2435
  %v3580 = vpack.c.b16 %v2440, %v2436
  %v3581 = vpack.c.b16 %v2441, %v2437
  %v3582 = vpack.c.b16 %v2442, %v2438
  %v3583 = vpack.c.b16 %v2447, %v2443
  %v3584 = vpack.c.b16 %v2448, %v2444
  %v3585 = vpack.c.b16 %v2449, %v2445
  %v3586 = vpack.c.b16 %v2450, %v2446
  %v3587 = vpack.c.b16 %v2455, %v2451
  %v3588 = vpack.c.b16 %v2456, %v2452
  %v3589 = vpack.c.b16 %v2457, %v2453
  %v3590 = vpack.c.b16 %v2458, %v2454
  %v3591 = vpack.c.b16 %v2463, %v2459
  %v3592 = vpack.c.b16 %v2464, %v2460
  %v3593 = vpack.c.b16 %v2465, %v2461
  %v3594 = vpack.c.b16 %v2466, %v2462
  %v3595 = vpack.c.b16 %v2471, %v2467
  %v3596 = vpack.c.b16 %v2472, %v2468
  %v3597 = vpack.c.b16 %v2473, %v2469
  %v3598 = vpack.c.b16 %v2474, %v2470
  %v3599 = vpack.c.b16 %v2479, %v2475
  %v3600 = vpack.c.b16 %v2480, %v2476
  %v3601 = vpack.c.b16 %v2481, %v2477
  %v3602 = vpack.c.b16 %v2482, %v2478
  %v3603 = vpack.c.b16 %v2487, %v2483
  %v3604 = vpack.c.b16 %v2488, %v2484
  %v3605 = vpack.c.b16 %v2489, %v2485
  %v3606 = vpack.c.b16 %v2490, %v2486
  %v3607 = vpack.c.b16 %v2495, %v2491
  %v3608 = vpack.c.b16 %v2496, %v2492
  %v3609 = vpack.c.b16 %v2497, %v2493
  %v3610 = vpack.c.b16 %v2498, %v2494
  %v3611 = vpack.c.b16 %v2503, %v2499
  %v3612 = vpack.c.b16 %v2504, %v2500
  %v3613 = vpack.c.b16 %v2505, %v2501
  %v3614 = vpack.c.b16 %v2506, %v2502
  %v3615 = vpack.c.b16 %v2511, %v2507
  %v3616 = vpack.c.b16 %v2512, %v2508
  %v3617 = vpack.c.b16 %v2513, %v2509
  %v3618 = vpack.c.b16 %v2514, %v2510
  %v3619 = vpack.c.b16 %v2519, %v2515
  %v3620 = vpack.c.b16 %v2520, %v2516
  %v3621 = vpack.c.b16 %v2521, %v2517
  %v3622 = vpack.c.b16 %v2522, %v2518
  %v3623 = vpack.c.b16 %v2527, %v2523
  %v3624 = vpack.c.b16 %v2528, %v2524
  %v3625 = vpack.c.b16 %v2529, %v2525
  %v3626 = vpack.c.b16 %v2530, %v2526
  %v3627 = vpack.c.b16 %v2535, %v2531
  %v3628 = vpack.c.b16 %v2536, %v2532
  %v3629 = vpack.c.b16 %v2537, %v2533
  %v3630 = vpack.c.b16 %v2538, %v2534
  %v3631 = vpack.c.b16 %v2543, %v2539
  %v3632 = vpack.c.b16 %v2544, %v2540
  %v3633 = vpack.c.b16 %v2545, %v2541
  %v3634 = vpack.c.b16 %v2546, %v2542
  %v3635 = vpack.c.b16 %v2551, %v2547
  %v3636 = vpack.c.b16 %v2552, %v2548
  %v3637 = vpack.c.b16 %v2553, %v2549
  %v3638 = vpack.c.b16 %v2554, %v2550
  %v3639 = vpack.c.b16 %v2559, %v2555
  %v3640 = vpack.c.b16 %v2560, %v2556
  %v3641 = vpack.c.b16 %v2561, %v2557
  %v3642 = vpack.c.b16 %v2562, %v2558
  %v3643 = vpack.c.b16 %v2567, %v2563
  %v3644 = vpack.c.b16 %v2568, %v2564
  %v3645 = vpack.c.b16 %v2569, %v2565
  %v3646 = vpack.c.b16 %v2570, %v2566
  %v3647 = vpack.c.b16 %v2575, %v2571
  %v3648 = vpack.c.b16 %v2576, %v2572
  %v3649 = vpack.c.b16 %v2577, %v2573
  %v3650 = vpack.c.b16 %v2578, %v2574
  %v3651 = vpack.c.b16 %v2583, %v2579
  %v3652 = vpack.c.b16 %v2584, %v2580
  %v3653 = vpack.c.b16 %v2585, %v2581
  %v3654 = vpack.c.b16 %v2586, %v2582
  %v3655 = vpack.c.b16 %v2591, %v2587
  %v3656 = vpack.c.b16 %v2592, %v2588
  %v3657 = vpack.c.b16 %v2593, %v2589
  %v3658 = vpack.c.b16 %v2594, %v2590
  %v3659 = vpack.c.b16 %v2599, %v2595
  %v3660 = vpack.c.b16 %v2600, %v2596
  %v3661 = vpack.c.b16 %v2601, %v2597
  %v3662 = vpack.c.b16 %v2602, %v2598
  %v3663 = vpack.c.b16 %v2607, %v2603
  %v3664 = vpack.c.b16 %v2608, %v2604
  %v3665 = vpack.c.b16 %v2609, %v2605
  %v3666 = vpack.c.b16 %v2610, %v2606
  %v3667 = vpack.c.b16 %v2615, %v2611
  %v3668 = vpack.c.b16 %v2616, %v2612
  %v3669 = vpack.c.b16 %v2617, %v2613
  %v3670 = vpack.c.b16 %v2618, %v2614
  %v3671 = vpack.c.b16 %v2623, %v2619
  %v3672 = vpack.c.b16 %v2624, %v2620
  %v3673 = vpack.c.b16 %v2625, %v2621
  %v3674 = vpack.c.b16 %v2626, %v2622
  %v3675 = vpack.c.b16 %v2631, %v2627
  %v3676 = vpack.c.b16 %v2632, %v2628
  %v3677 = vpack.c.b16 %v2633, %v2629
  %v3678 = vpack.c.b16 %v2634, %v2630
  %v3679 = vpack.c.b16 %v2639, %v2635
  %v3680 = vpack.c.b16 %v2640, %v2636
  %v3681 = vpack.c.b16 %v2641, %v2637
  %v3682 = vpack.c.b16 %v2642, %v2638
  %v3683 = vpack.c.b16 %v2647, %v2643
  %v3684 = vpack.c.b16 %v2648, %v2644
  %v3685 = vpack.c.b16 %v2649, %v2645
  %v3686 = vpack.c.b16 %v2650, %v2646
  %v3687 = vpack.c.b16 %v2655, %v2651
  %v3688 = vpack.c.b16 %v2656, %v2652
  %v3689 = vpack.c.b16 %v2657, %v2653
  %v3690 = vpack.c.b16 %v2658, %v2654
  %v3691 = vpack.c.b16 %v2663, %v2659
  %v3692 = vpack.c.b16 %v2664, %v2660
  %v3693 = vpack.c.b16 %v2665, %v2661
  %v3694 = vpack.c.b16 %v2666, %v2662
  %v3695 = vpack.c.b16 %v2671, %v2667
  %v3696 = vpack.c.b16 %v2672, %v2668
  %v3697 = vpack.c.b16 %v2673, %v2669
  %v3698 = vpack.c.b16 %v2674, %v2670
  %v3699 = vpack.c.b16 %v2679, %v2675
  %v3700 = vpack.c.b16 %v2680, %v2676
  %v3701 = vpack.c.b16 %v2681, %v2677
  %v3702 = vpack.c.b16 %v2682, %v2678
  %v3703 = vpack.c.b16 %v2687, %v2683
  %v3704 = vpack.c.b16 %v2688, %v2684
  %v3705 = vpack.c.b16 %v2689, %v2685
  %v3706 = vpack.c.b16 %v2690, %v2686
  %v3707 = vpack.c.b16 %v2695, %v2691
  %v3708 = vpack.c.b16 %v2696, %v2692
  %v3709 = vpack.c.b16 %v2697, %v2693
  %v3710 = vpack.c.b16 %v2698, %v2694
  %v3711 = vpack.c.b16 %v2703, %v2699
  %v3712 = vpack.c.b16 %v2704, %v2700
  %v3713 = vpack.c.b16 %v2705, %v2701
  %v3714 = vpack.c.b16 %v2706, %v2702
  %v3715 = vpack.c.b16 %v2711, %v2707
  %v3716 = vpack.c.b16 %v2712, %v2708
  %v3717 = vpack.c.b16 %v2713, %v2709
  %v3718 = vpack.c.b16 %v2714, %v2710
  %v3719 = vpack.c.b16 %v2719, %v2715
  %v3720 = vpack.c.b16 %v2720, %v2716
  %v3721 = vpack.c.b16 %v2721, %v2717
  %v3722 = vpack.c.b16 %v2722, %v2718
  %v3723 = vpack.c.b16 %v2727, %v2723
  %v3724 = vpack.c.b16 %v2728, %v2724
  %v3725 = vpack.c.b16 %v2729, %v2725
  %v3726 = vpack.c.b16 %v2730, %v2726
  %v3727 = vpack.c.b16 %v2735, %v2731
  %v3728 = vpack.c.b16 %v2736, %v2732
  %v3729 = vpack.c.b16 %v2737, %v2733
  %v3730 = vpack.c.b16 %v2738, %v2734
  %v3731 = vpack.c.b16 %v2743, %v2739
  %v3732 = vpack.c.b16 %v2744, %v2740
  %v3733 = vpack.c.b16 %v2745, %v2741
  %v3734 = vpack.c.b16 %v2746, %v2742
  %v3735 = vpack.c.b16 %v2751, %v2747
  %v3736 = vpack.c.b16 %v2752, %v2748
  %v3737 = vpack.c.b16 %v2753, %v2749
  %v3738 = vpack.c.b16 %v2754, %v2750
  %v3739 = vpack.c.b16 %v2759, %v2755
  %v3740 = vpack.c.b16 %v2760, %v2756
  %v3741 = vpack.c.b16 %v2761, %v2757
  %v3742 = vpack.c.b16 %v2762, %v2758
  %v3743 = vpack.c.b16 %v2767, %v2763
  %v3744 = vpack.c.b16 %v2768, %v2764
  %v3745 = vpack.c.b16 %v2769, %v2765
  %v3746 = vpack.c.b16 %v2770, %v2766
  %v3747 = vpack.c.b16 %v2775, %v2771
  %v3748 = vpack.c.b16 %v2776, %v2772
  %v3749 = vpack.c.b16 %v2777, %v2773
  %v3750 = vpack.c.b16 %v2778, %v2774
  %v3751 = vpack.c.b16 %v2783, %v2779
  %v3752 = vpack.c.b16 %v2784, %v2780
  %v3753 = vpack.c.b16 %v2785, %v2781
  %v3754 = vpack.c.b16 %v2786, %v2782
  %v3755 = vpack.c.b16 %v2791, %v2787
  %v3756 = vpack.c.b16 %v2792, %v2788
  %v3757 = vpack.c.b16 %v2793, %v2789
  %v3758 = vpack.c.b16 %v2794, %v2790
  %v3759 = vpack.c.b16 %v2799, %v2795
  %v3760 = vpack.c.b16 %v2800, %v2796
  %v3761 = vpack.c.b16 %v2801, %v2797
  %v3762 = vpack.c.b16 %v2802, %v2798
  %v3763 = vpack.c.b16 %v2807, %v2803
  %v3764 = vpack.c.b16 %v2808, %v2804
  %v3765 = vpack.c.b16 %v2809, %v2805
  %v3766 = vpack.c.b16 %v2810, %v2806
  %v3767 = vpack.c.b16 %v2815, %v2811
  %v3768 = vpack.c.b16 %v2816, %v2812
  %v3769 = vpack.c.b16 %v2817, %v2813
  %v3770 = vpack.c.b16 %v2818, %v2814
  %v3771 = vpack.c.b16 %v2823, %v2819
  %v3772 = vpack.c.b16 %v2824, %v2820
  %v3773 = vpack.c.b16 %v2825, %v2821
  %v3774 = vpack.c.b16 %v2826, %v2822
  %v3775 = vpack.c.b16 %v2831, %v2827
  %v3776 = vpack.c.b16 %v2832, %v2828
  %v3777 = vpack.c.b16 %v2833, %v2829
  %v3778 = vpack.c.b16 %v2834, %v2830
  %v3779 = vpack.c.b16 %v2839, %v2835
  %v3780 = vpack.c.b16 %v2840, %v2836
  %v3781 = vpack.c.b16 %v2841, %v2837
  %v3782 = vpack.c.b16 %v2842, %v2838
  %v3783 = vpack.c.b16 %v2847, %v2843
  %v3784 = vpack.c.b16 %v2848, %v2844
  %v3785 = vpack.c.b16 %v2849, %v2845
  %v3786 = vpack.c.b16 %v2850, %v2846
  %v3787 = vpack.c.b16 %v2855, %v2851
  %v3788 = vpack.c.b16 %v2856, %v2852
  %v3789 = vpack.c.b16 %v2857, %v2853
  %v3790 = vpack.c.b16 %v2858, %v2854
  %v3791 = vpack.c.b16 %v2863, %v2859
  %v3792 = vpack.c.b16 %v2864, %v2860
  %v3793 = vpack.c.b16 %v2865, %v2861
  %v3794 = vpack.c.b16 %v2866, %v2862
  %v3795 = vpack.c.b16 %v2871, %v2867
  %v3796 = vpack.c.b16 %v2872, %v2868
  %v3797 = vpack.c.b16 %v2873, %v2869
  %v3798 = vpack.c.b16 %v2874, %v2870
  %v3799 = vpack.c.b16 %v2879, %v2875
  %v3800 = vpack.c.b16 %v2880, %v2876
  %v3801 = vpack.c.b16 %v2881, %v2877
  %v3802 = vpack.c.b16 %v2882, %v2878
  %v3803 = vpack.c.b16 %v2887, %v2883
  %v3804 = vpack.c.b16 %v2888, %v2884
  %v3805 = vpack.c.b16 %v2889, %v2885
  %v3806 = vpack.c.b16 %v2890, %v2886
  %v3807 = vpack.c.b16 %v2895, %v2891
  %v3808 = vpack.c.b16 %v2896, %v2892
  %v3809 = vpack.c.b16 %v2897, %v2893
  %v3810 = vpack.c.b16 %v2898, %v2894
  %v3811 = vpack.c.b16 %v2903, %v2899
  %v3812 = vpack.c.b16 %v2904, %v2900
  %v3813 = vpack.c.b16 %v2905, %v2901
  %v3814 = vpack.c.b16 %v2906, %v2902
  %v3815 = vpack.c.b16 %v2911, %v2907
  %v3816 = vpack.c.b16 %v2912, %v2908
  %v3817 = vpack.c.b16 %v2913, %v2909
  %v3818 = vpack.c.b16 %v2914, %v2910
  %v3819 = vpack.c.b16 %v2919, %v2915
  %v3820 = vpack.c.b16 %v2920, %v2916
  %v3821 = vpack.c.b16 %v2921, %v2917
  %v3822 = vpack.c.b16 %v2922, %v2918
  %v3823 = vpack.c.b16 %v2927, %v2923
  %v3824 = vpack.c.b16 %v2928, %v2924
  %v3825 = vpack.c.b16 %v2929, %v2925
  %v3826 = vpack.c.b16 %v2930, %v2926
  %v3827 = vpack.c.b16 %v2935, %v2931
  %v3828 = vpack.c.b16 %v2936, %v2932
  %v3829 = vpack.c.b16 %v2937, %v2933
  %v3830 = vpack.c.b16 %v2938, %v2934
  %v3831 = vpack.c.b16 %v2943, %v2939
  %v3832 = vpack.c.b16 %v2944, %v2940
  %v3833 = vpack.c.b16 %v2945, %v2941
  %v3834 = vpack.c.b16 %v2946, %v2942
  %v3835 = vpack.c.b16 %v2951, %v2947
  %v3836 = vpack.c.b16 %v2952, %v2948
  %v3837 = vpack.c.b16 %v2953, %v2949
  %v3838 = vpack.c.b16 %v2954, %v2950
  %v3839 = vpack.c.b16 %v2959, %v2955
  %v3840 = vpack.c.b16 %v2960, %v2956
  %v3841 = vpack.c.b16 %v2961, %v2957
  %v3842 = vpack.c.b16 %v2962, %v2958
  %v3843 = vpack.c.b16 %v2967, %v2963
  %v3844 = vpack.c.b16 %v2968, %v2964
  %v3845 = vpack.c.b16 %v2969, %v2965
  %v3846 = vpack.c.b16 %v2970, %v2966
  %v3847 = vpack.c.b16 %v2975, %v2971
  %v3848 = vpack.c.b16 %v2976, %v2972
  %v3849 = vpack.c.b16 %v2977, %v2973
  %v3850 = vpack.c.b16 %v2978, %v2974
  %v3851 = vpack.c.b16 %v2983, %v2979
  %v3852 = vpack.c.b16 %v2984, %v2980
  %v3853 = vpack.c.b16 %v2985, %v2981
  %v3854 = vpack.c.b16 %v2986, %v2982
  %v3855 = vpack.c.b16 %v2991, %v2987
  %v3856 = vpack.c.b16 %v2992, %v2988
  %v3857 = vpack.c.b16 %v2993, %v2989
  %v3858 = vpack.c.b16 %v2994, %v2990
  %v3859 = vpack.c.b16 %v2999, %v2995
  %v3860 = vpack.c.b16 %v3000, %v2996
  %v3861 = vpack.c.b16 %v3001, %v2997
  %v3862 = vpack.c.b16 %v3002, %v2998
  %v3863 = vpack.c.b16 %v3007, %v3003
  %v3864 = vpack.c.b16 %v3008, %v3004
  %v3865 = vpack.c.b16 %v3009, %v3005
  %v3866 = vpack.c.b16 %v3010, %v3006
  %v3867 = vpack.c.b16 %v3015, %v3011
  %v3868 = vpack.c.b16 %v3016, %v3012
  %v3869 = vpack.c.b16 %v3017, %v3013
  %v3870 = vpack.c.b16 %v3018, %v3014
  %v3871 = vpack.c.b16 %v3023, %v3019
  %v3872 = vpack.c.b16 %v3024, %v3020
  %v3873 = vpack.c.b16 %v3025, %v3021
  %v3874 = vpack.c.b16 %v3026, %v3022
  %v3875 = vpack.c.b16 %v3031, %v3027
  %v3876 = vpack.c.b16 %v3032, %v3028
  %v3877 = vpack.c.b16 %v3033, %v3029
  %v3878 = vpack.c.b16 %v3034, %v3030
  %v3879 = vpack.c.b16 %v3039, %v3035
  %v3880 = vpack.c.b16 %v3040, %v3036
  %v3881 = vpack.c.b16 %v3041, %v3037
  %v3882 = vpack.c.b16 %v3042, %v3038
  %v3883 = vpack.c.b16 %v3047, %v3043
  %v3884 = vpack.c.b16 %v3048, %v3044
  %v3885 = vpack.c.b16 %v3049, %v3045
  %v3886 = vpack.c.b16 %v3050, %v3046
  %v3887 = vpack.c.b16 %v3055, %v3051
  %v3888 = vpack.c.b16 %v3056, %v3052
  %v3889 = vpack.c.b16 %v3057, %v3053
  %v3890 = vpack.c.b16 %v3058, %v3054
  %v3891 = vpack.c.b16 %v3063, %v3059
  %v3892 = vpack.c.b16 %v3064, %v3060
  %v3893 = vpack.c.b16 %v3065, %v3061
  %v3894 = vpack.c.b16 %v3066, %v3062
  %v3895 = vpack.c.b16 %v3071, %v3067
  %v3896 = vpack.c.b16 %v3072, %v3068
  %v3897 = vpack.c.b16 %v3073, %v3069
  %v3898 = vpack.c.b16 %v3074, %v3070
  %v3899 = vpack.c.b16 %v3079, %v3075
  %v3900 = vpack.c.b16 %v3080, %v3076
  %v3901 = vpack.c.b16 %v3081, %v3077
  %v3902 = vpack.c.b16 %v3082, %v3078
  %v3903 = vpack.c.b16 %v3087, %v3083
  %v3904 = vpack.c.b16 %v3088, %v3084
  %v3905 = vpack.c.b16 %v3089, %v3085
  %v3906 = vpack.c.b16 %v3090, %v3086
  %v3907 = vpack.c.b16 %v3095, %v3091
  %v3908 = vpack.c.b16 %v3096, %v3092
  %v3909 = vpack.c.b16 %v3097, %v3093
  %v3910 = vpack.c.b16 %v3098, %v3094
  %v3911 = vpack.c.b16 %v3103, %v3099
  %v3912 = vpack.c.b16 %v3104, %v3100
  %v3913 = vpack.c.b16 %v3105, %v3101
  %v3914 = vpack.c.b16 %v3106, %v3102
  %v3915 = vpack.c.b16 %v3111, %v3107
  %v3916 = vpack.c.b16 %v3112, %v3108
  %v3917 = vpack.c.b16 %v3113, %v3109
  %v3918 = vpack.c.b16 %v3114, %v3110
  %v3919 = vpack.c.b16 %v3119, %v3115
  %v3920 = vpack.c.b16 %v3120, %v3116
  %v3921 = vpack.c.b16 %v3121, %v3117
  %v3922 = vpack.c.b16 %v3122, %v3118
  %v3923 = vpack.c.b16 %v3127, %v3123
  %v3924 = vpack.c.b16 %v3128, %v3124
  %v3925 = vpack.c.b16 %v3129, %v3125
  %v3926 = vpack.c.b16 %v3130, %v3126
  %v3927 = vpack.c.b16 %v3135, %v3131
  %v3928 = vpack.c.b16 %v3136, %v3132
  %v3929 = vpack.c.b16 %v3137, %v3133
  %v3930 = vpack.c.b16 %v3138, %v3134
  %v3931 = vpack.c.b16 %v3143, %v3139
  %v3932 = vpack.c.b16 %v3144, %v3140
  %v3933 = vpack.c.b16 %v3145, %v3141
  %v3934 = vpack.c.b16 %v3146, %v3142
  %v3935 = vpack.c.b16 %v3151, %v3147
  %v3936 = vpack.c.b16 %v3152, %v3148
  %v3937 = vpack.c.b16 %v3153, %v3149
  %v3938 = vpack.c.b16 %v3154, %v3150
  %v3939 = vpack.c.b16 %v3159, %v3155
  %v3940 = vpack.c.b16 %v3160, %v3156
  %v3941 = vpack.c.b16 %v3161, %v3157
  %v3942 = vpack.c.b16 %v3162, %v3158
  %v3943 = vpack.c.b16 %v3167, %v3163
  %v3944 = vpack.c.b16 %v3168, %v3164
  %v3945 = vpack.c.b16 %v3169, %v3165
  %v3946 = vpack.c.b16 %v3170, %v3166
  %v3947 = vpack.c.b16 %v3175, %v3171
  %v3948 = vpack.c.b16 %v3176, %v3172
  %v3949 = vpack.c.b16 %v3177, %v3173
  %v3950 = vpack.c.b16 %v3178, %v3174
  %v3951 = vpack.c.b16 %v3183, %v3179
  %v3952 = vpack.c.b16 %v3184, %v3180
  %v3953 = vpack.c.b16 %v3185, %v3181
  %v3954 = vpack.c.b16 %v3186, %v3182
  %4723 = vmatprep.subr.bf16.mxu0 %v3188
  %4724 = vmatpush1.bf16.msra.mxu0 %v3187
  %4725 = vmatprep.subr.bf16.mxu0 %v3192
  %4726 = vmatpush1.bf16.msra.mxu0 %v3191
  %4727 = vmatprep.subr.bf16.mxu0 %v3196
  %4728 = vmatpush1.bf16.msra.mxu0 %v3195
  %4729 = vmatprep.subr.bf16.mxu0 %v3200
  %4730 = vmatpush1.bf16.msra.mxu0 %v3199
  %4731 = vmatprep.subr.bf16.mxu0 %v3204
  %4732 = vmatpush1.bf16.msra.mxu0 %v3203
  %4733 = vmatprep.subr.bf16.mxu0 %v3208
  %4734 = vmatpush1.bf16.msra.mxu0 %v3207
  %4735 = vmatprep.subr.bf16.mxu0 %v3212
  %4736 = vmatpush1.bf16.msra.mxu0 %v3211
  %4737 = vmatprep.subr.bf16.mxu0 %v3216
  %4738 = vmatpush1.bf16.msra.mxu0 %v3215
  %4739 = vmatprep.subr.bf16.mxu0 %v3220
  %4740 = vmatpush1.bf16.msra.mxu0 %v3219
  %4741 = vmatprep.subr.bf16.mxu0 %v3224
  %4742 = vmatpush1.bf16.msra.mxu0 %v3223
  %4743 = vmatprep.subr.bf16.mxu0 %v3228
  %4744 = vmatpush1.bf16.msra.mxu0 %v3227
  %4745 = vmatprep.subr.bf16.mxu0 %v3232
  %4746 = vmatpush1.bf16.msra.mxu0 %v3231
  %4747 = vmatprep.subr.bf16.mxu0 %v3236
  %4748 = vmatpush1.bf16.msra.mxu0 %v3235
  %4749 = vmatprep.subr.bf16.mxu0 %v3240
  %4750 = vmatpush1.bf16.msra.mxu0 %v3239
  %4751 = vmatprep.subr.bf16.mxu0 %v3244
  %4752 = vmatpush1.bf16.msra.mxu0 %v3243
  %4753 = vmatprep.subr.bf16.mxu0 %v3248
  %4754 = vmatpush1.bf16.msra.mxu0 %v3247
  %4755 = vmatprep.mubr.bf16.mxu0 %v70
  %4756 = vmatmul.mubr.bf16.gmra.mrb[0].mxu0 %v69
  %v4757 = vpop.f32.mrb[0].mxu0
  %v4758 = vadd.f32 %v866, %v4757
  %v4759 = vpop.f32.mrb[0].mxu0
  %v4760 = vadd.f32 %v870, %v4759
  %v4761 = vpop.f32.mrb[0].mxu0
  %v4762 = vadd.f32 %v866, %v4761
  %v4763 = vpop.f32.mrb[0].mxu0
  %v4764 = vadd.f32 %v870, %v4763
  %4765 = vdwg.mxu0
  %4766 = vmatprep.subr.bf16.mxu0 %v3252
  %4767 = vmatpush1.bf16.msra.mxu0 %v3251
  %4768 = vmatprep.subr.bf16.mxu0 %v3256
  %4769 = vmatpush1.bf16.msra.mxu0 %v3255
  %4770 = vmatprep.subr.bf16.mxu0 %v3260
  %4771 = vmatpush1.bf16.msra.mxu0 %v3259
  %4772 = vmatprep.subr.bf16.mxu0 %v3264
  %4773 = vmatpush1.bf16.msra.mxu0 %v3263
  %4774 = vmatprep.subr.bf16.mxu0 %v3268
  %4775 = vmatpush1.bf16.msra.mxu0 %v3267
  %4776 = vmatprep.subr.bf16.mxu0 %v3272
  %4777 = vmatpush1.bf16.msra.mxu0 %v3271
  %4778 = vmatprep.subr.bf16.mxu0 %v3276
  %4779 = vmatpush1.bf16.msra.mxu0 %v3275
  %4780 = vmatprep.subr.bf16.mxu0 %v3280
  %4781 = vmatpush1.bf16.msra.mxu0 %v3279
  %4782 = vmatprep.subr.bf16.mxu0 %v3284
  %4783 = vmatpush1.bf16.msra.mxu0 %v3283
  %4784 = vmatprep.subr.bf16.mxu0 %v3288
  %4785 = vmatpush1.bf16.msra.mxu0 %v3287
  %4786 = vmatprep.subr.bf16.mxu0 %v3292
  %4787 = vmatpush1.bf16.msra.mxu0 %v3291
  %4788 = vmatprep.subr.bf16.mxu0 %v3296
  %4789 = vmatpush1.bf16.msra.mxu0 %v3295
  %4790 = vmatprep.subr.bf16.mxu0 %v3300
  %4791 = vmatpush1.bf16.msra.mxu0 %v3299
  %4792 = vmatprep.subr.bf16.mxu0 %v3304
  %4793 = vmatpush1.bf16.msra.mxu0 %v3303
  %4794 = vmatprep.subr.bf16.mxu0 %v3308
  %4795 = vmatpush1.bf16.msra.mxu0 %v3307
  %4796 = vmatprep.subr.bf16.mxu0 %v3312
  %4797 = vmatpush1.bf16.msra.mxu0 %v3311
  %4798 = vmatprep.mubr.bf16.mxu0 %v72
  %4799 = vmatmul.mubr.bf16.gmra.mrb[0].mxu0 %v71
  %v4800 = vpop.f32.mrb[0].mxu0
  %v4801 = vadd.f32 %v4758, %v4800
  %v4802 = vpop.f32.mrb[0].mxu0
  %v4803 = vadd.f32 %v4760, %v4802
  %v4804 = vpop.f32.mrb[0].mxu0
  %v4805 = vadd.f32 %v4762, %v4804
  %v4806 = vpop.f32.mrb[0].mxu0
  %v4807 = vadd.f32 %v4764, %v4806
  %4808 = vdwg.mxu0
  %4809 = vmatprep.subr.bf16.mxu0 %v3316
  %4810 = vmatpush1.bf16.msra.mxu0 %v3315
  %4811 = vmatprep.subr.bf16.mxu0 %v3320
  %4812 = vmatpush1.bf16.msra.mxu0 %v3319
  %4813 = vmatprep.subr.bf16.mxu0 %v3324
  %4814 = vmatpush1.bf16.msra.mxu0 %v3323
  %4815 = vmatprep.subr.bf16.mxu0 %v3328
  %4816 = vmatpush1.bf16.msra.mxu0 %v3327
  %4817 = vmatprep.subr.bf16.mxu0 %v3332
  %4818 = vmatpush1.bf16.msra.mxu0 %v3331
  %4819 = vmatprep.subr.bf16.mxu0 %v3336
  %4820 = vmatpush1.bf16.msra.mxu0 %v3335
  %4821 = vmatprep.subr.bf16.mxu0 %v3340
  %4822 = vmatpush1.bf16.msra.mxu0 %v3339
  %4823 = vmatprep.subr.bf16.mxu0 %v3344
  %4824 = vmatpush1.bf16.msra.mxu0 %v3343
  %4825 = vmatprep.subr.bf16.mxu0 %v3348
  %4826 = vmatpush1.bf16.msra.mxu0 %v3347
  %4827 = vmatprep.subr.bf16.mxu0 %v3352
  %4828 = vmatpush1.bf16.msra.mxu0 %v3351
  %4829 = vmatprep.subr.bf16.mxu0 %v3356
  %4830 = vmatpush1.bf16.msra.mxu0 %v3355
  %4831 = vmatprep.subr.bf16.mxu0 %v3360
  %4832 = vmatpush1.bf16.msra.mxu0 %v3359
  %4833 = vmatprep.subr.bf16.mxu0 %v3364
  %4834 = vmatpush1.bf16.msra.mxu0 %v3363
  %4835 = vmatprep.subr.bf16.mxu0 %v3368
  %4836 = vmatpush1.bf16.msra.mxu0 %v3367
  %4837 = vmatprep.subr.bf16.mxu0 %v3372
  %4838 = vmatpush1.bf16.msra.mxu0 %v3371
  %4839 = vmatprep.subr.bf16.mxu0 %v3376
  %4840 = vmatpush1.bf16.msra.mxu0 %v3375
  %4841 = vmatprep.mubr.bf16.mxu0 %v74
  %4842 = vmatmul.mubr.bf16.gmra.mrb[0].mxu0 %v73
  %v4843 = vpop.f32.mrb[0].mxu0
  %v4844 = vadd.f32 %v4801, %v4843
  %v4845 = vpop.f32.mrb[0].mxu0
  %v4846 = vadd.f32 %v4803, %v4845
  %v4847 = vpop.f32.mrb[0].mxu0
  %v4848 = vadd.f32 %v4805, %v4847
  %v4849 = vpop.f32.mrb[0].mxu0
  %v4850 = vadd.f32 %v4807, %v4849
  %4851 = vdwg.mxu0
  %4852 = vmatprep.subr.bf16.mxu0 %v3380
  %4853 = vmatpush1.bf16.msra.mxu0 %v3379
  %4854 = vmatprep.subr.bf16.mxu0 %v3384
  %4855 = vmatpush1.bf16.msra.mxu0 %v3383
  %4856 = vmatprep.subr.bf16.mxu0 %v3388
  %4857 = vmatpush1.bf16.msra.mxu0 %v3387
  %4858 = vmatprep.subr.bf16.mxu0 %v3392
  %4859 = vmatpush1.bf16.msra.mxu0 %v3391
  %4860 = vmatprep.subr.bf16.mxu0 %v3396
  %4861 = vmatpush1.bf16.msra.mxu0 %v3395
  %4862 = vmatprep.subr.bf16.mxu0 %v3400
  %4863 = vmatpush1.bf16.msra.mxu0 %v3399
  %4864 = vmatprep.subr.bf16.mxu0 %v3404
  %4865 = vmatpush1.bf16.msra.mxu0 %v3403
  %4866 = vmatprep.subr.bf16.mxu0 %v3408
  %4867 = vmatpush1.bf16.msra.mxu0 %v3407
  %4868 = vmatprep.subr.bf16.mxu0 %v3412
  %4869 = vmatpush1.bf16.msra.mxu0 %v3411
  %4870 = vmatprep.subr.bf16.mxu0 %v3416
  %4871 = vmatpush1.bf16.msra.mxu0 %v3415
  %4872 = vmatprep.subr.bf16.mxu0 %v3420
  %4873 = vmatpush1.bf16.msra.mxu0 %v3419
  %4874 = vmatprep.subr.bf16.mxu0 %v3424
  %4875 = vmatpush1.bf16.msra.mxu0 %v3423
  %4876 = vmatprep.subr.bf16.mxu0 %v3428
  %4877 = vmatpush1.bf16.msra.mxu0 %v3427
  %4878 = vmatprep.subr.bf16.mxu0 %v3432
  %4879 = vmatpush1.bf16.msra.mxu0 %v3431
  %4880 = vmatprep.subr.bf16.mxu0 %v3436
  %4881 = vmatpush1.bf16.msra.mxu0 %v3435
  %4882 = vmatprep.subr.bf16.mxu0 %v3440
  %4883 = vmatpush1.bf16.msra.mxu0 %v3439
  %4884 = vmatprep.mubr.bf16.mxu0 %v76
  %4885 = vmatmul.mubr.bf16.gmra.mrb[0].mxu0 %v75
  %v4886 = vpop.f32.mrb[0].mxu0
  %v4887 = vadd.f32 %v4844, %v4886
  %v4888 = vpop.f32.mrb[0].mxu0
  %v4889 = vadd.f32 %v4846, %v4888
  %v4890 = vpop.f32.mrb[0].mxu0
  %v4891 = vadd.f32 %v4848, %v4890
  %v4892 = vpop.f32.mrb[0].mxu0
  %v4893 = vadd.f32 %v4850, %v4892
  %4894 = vdwg.mxu0
  %4895 = vmatprep.subr.bf16.mxu0 %v3444
  %4896 = vmatpush1.bf16.msra.mxu0 %v3443
  %4897 = vmatprep.subr.bf16.mxu0 %v3448
  %4898 = vmatpush1.bf16.msra.mxu0 %v3447
  %4899 = vmatprep.subr.bf16.mxu0 %v3452
  %4900 = vmatpush1.bf16.msra.mxu0 %v3451
  %4901 = vmatprep.subr.bf16.mxu0 %v3456
  %4902 = vmatpush1.bf16.msra.mxu0 %v3455
  %4903 = vmatprep.subr.bf16.mxu0 %v3460
  %4904 = vmatpush1.bf16.msra.mxu0 %v3459
  %4905 = vmatprep.subr.bf16.mxu0 %v3464
  %4906 = vmatpush1.bf16.msra.mxu0 %v3463
  %4907 = vmatprep.subr.bf16.mxu0 %v3468
  %4908 = vmatpush1.bf16.msra.mxu0 %v3467
  %4909 = vmatprep.subr.bf16.mxu0 %v3472
  %4910 = vmatpush1.bf16.msra.mxu0 %v3471
  %4911 = vmatprep.subr.bf16.mxu0 %v3476
  %4912 = vmatpush1.bf16.msra.mxu0 %v3475
  %4913 = vmatprep.subr.bf16.mxu0 %v3480
  %4914 = vmatpush1.bf16.msra.mxu0 %v3479
  %4915 = vmatprep.subr.bf16.mxu0 %v3484
  %4916 = vmatpush1.bf16.msra.mxu0 %v3483
  %4917 = vmatprep.subr.bf16.mxu0 %v3488
  %4918 = vmatpush1.bf16.msra.mxu0 %v3487
  %4919 = vmatprep.subr.bf16.mxu0 %v3492
  %4920 = vmatpush1.bf16.msra.mxu0 %v3491
  %4921 = vmatprep.subr.bf16.mxu0 %v3496
  %4922 = vmatpush1.bf16.msra.mxu0 %v3495
  %4923 = vmatprep.subr.bf16.mxu0 %v3500
  %4924 = vmatpush1.bf16.msra.mxu0 %v3499
  %4925 = vmatprep.subr.bf16.mxu0 %v3504
  %4926 = vmatpush1.bf16.msra.mxu0 %v3503
  %4927 = vmatprep.mubr.bf16.mxu0 %v78
  %4928 = vmatmul.mubr.bf16.gmra.mrb[0].mxu0 %v77
  %v4929 = vpop.f32.mrb[0].mxu0
  %v4930 = vadd.f32 %v4887, %v4929
  %v4931 = vpop.f32.mrb[0].mxu0
  %v4932 = vadd.f32 %v4889, %v4931
  %v4933 = vpop.f32.mrb[0].mxu0
  %v4934 = vadd.f32 %v4891, %v4933
  %v4935 = vpop.f32.mrb[0].mxu0
  %v4936 = vadd.f32 %v4893, %v4935
  %4937 = vdwg.mxu0
  %4938 = vmatprep.subr.bf16.mxu0 %v3508
  %4939 = vmatpush1.bf16.msra.mxu0 %v3507
  %4940 = vmatprep.subr.bf16.mxu0 %v3512
  %4941 = vmatpush1.bf16.msra.mxu0 %v3511
  %4942 = vmatprep.subr.bf16.mxu0 %v3516
  %4943 = vmatpush1.bf16.msra.mxu0 %v3515
  %4944 = vmatprep.subr.bf16.mxu0 %v3520
  %4945 = vmatpush1.bf16.msra.mxu0 %v3519
  %4946 = vmatprep.subr.bf16.mxu0 %v3524
  %4947 = vmatpush1.bf16.msra.mxu0 %v3523
  %4948 = vmatprep.subr.bf16.mxu0 %v3528
  %4949 = vmatpush1.bf16.msra.mxu0 %v3527
  %4950 = vmatprep.subr.bf16.mxu0 %v3532
  %4951 = vmatpush1.bf16.msra.mxu0 %v3531
  %4952 = vmatprep.subr.bf16.mxu0 %v3536
  %4953 = vmatpush1.bf16.msra.mxu0 %v3535
  %4954 = vmatprep.subr.bf16.mxu0 %v3540
  %4955 = vmatpush1.bf16.msra.mxu0 %v3539
  %4956 = vmatprep.subr.bf16.mxu0 %v3544
  %4957 = vmatpush1.bf16.msra.mxu0 %v3543
  %4958 = vmatprep.subr.bf16.mxu0 %v3548
  %4959 = vmatpush1.bf16.msra.mxu0 %v3547
  %4960 = vmatprep.subr.bf16.mxu0 %v3552
  %4961 = vmatpush1.bf16.msra.mxu0 %v3551
  %4962 = vmatprep.subr.bf16.mxu0 %v3556
  %4963 = vmatpush1.bf16.msra.mxu0 %v3555
  %4964 = vmatprep.subr.bf16.mxu0 %v3560
  %4965 = vmatpush1.bf16.msra.mxu0 %v3559
  %4966 = vmatprep.subr.bf16.mxu0 %v3564
  %4967 = vmatpush1.bf16.msra.mxu0 %v3563
  %4968 = vmatprep.subr.bf16.mxu0 %v3568
  %4969 = vmatpush1.bf16.msra.mxu0 %v3567
  %4970 = vmatprep.mubr.bf16.mxu0 %v80
  %4971 = vmatmul.mubr.bf16.gmra.mrb[0].mxu0 %v79
  %v4972 = vpop.f32.mrb[0].mxu0
  %v4973 = vadd.f32 %v4930, %v4972
  %v4974 = vpop.f32.mrb[0].mxu0
  %v4975 = vadd.f32 %v4932, %v4974
  %v4976 = vpop.f32.mrb[0].mxu0
  %v4977 = vadd.f32 %v4934, %v4976
  %v4978 = vpop.f32.mrb[0].mxu0
  %v4979 = vadd.f32 %v4936, %v4978
  %4980 = vdwg.mxu0
  %4981 = vmatprep.subr.bf16.mxu0 %v3572
  %4982 = vmatpush1.bf16.msra.mxu0 %v3571
  %4983 = vmatprep.subr.bf16.mxu0 %v3576
  %4984 = vmatpush1.bf16.msra.mxu0 %v3575
  %4985 = vmatprep.subr.bf16.mxu0 %v3580
  %4986 = vmatpush1.bf16.msra.mxu0 %v3579
  %4987 = vmatprep.subr.bf16.mxu0 %v3584
  %4988 = vmatpush1.bf16.msra.mxu0 %v3583
  %4989 = vmatprep.subr.bf16.mxu0 %v3588
  %4990 = vmatpush1.bf16.msra.mxu0 %v3587
  %4991 = vmatprep.subr.bf16.mxu0 %v3592
  %4992 = vmatpush1.bf16.msra.mxu0 %v3591
  %4993 = vmatprep.subr.bf16.mxu0 %v3596
  %4994 = vmatpush1.bf16.msra.mxu0 %v3595
  %4995 = vmatprep.subr.bf16.mxu0 %v3600
  %4996 = vmatpush1.bf16.msra.mxu0 %v3599
  %4997 = vmatprep.subr.bf16.mxu0 %v3604
  %4998 = vmatpush1.bf16.msra.mxu0 %v3603
  %4999 = vmatprep.subr.bf16.mxu0 %v3608
  %5000 = vmatpush1.bf16.msra.mxu0 %v3607
  %5001 = vmatprep.subr.bf16.mxu0 %v3612
  %5002 = vmatpush1.bf16.msra.mxu0 %v3611
  %5003 = vmatprep.subr.bf16.mxu0 %v3616
  %5004 = vmatpush1.bf16.msra.mxu0 %v3615
  %5005 = vmatprep.subr.bf16.mxu0 %v3620
  %5006 = vmatpush1.bf16.msra.mxu0 %v3619
  %5007 = vmatprep.subr.bf16.mxu0 %v3624
  %5008 = vmatpush1.bf16.msra.mxu0 %v3623
  %5009 = vmatprep.subr.bf16.mxu0 %v3628
  %5010 = vmatpush1.bf16.msra.mxu0 %v3627
  %5011 = vmatprep.subr.bf16.mxu0 %v3632
  %5012 = vmatpush1.bf16.msra.mxu0 %v3631
  %5013 = vmatprep.mubr.bf16.mxu0 %v82
  %5014 = vmatmul.mubr.bf16.gmra.mrb[0].mxu0 %v81
  %v5015 = vpop.f32.mrb[0].mxu0
  %v5016 = vadd.f32 %v4973, %v5015
  %v5017 = vpop.f32.mrb[0].mxu0
  %v5018 = vadd.f32 %v4975, %v5017
  %v5019 = vpop.f32.mrb[0].mxu0
  %v5020 = vadd.f32 %v4977, %v5019
  %v5021 = vpop.f32.mrb[0].mxu0
  %v5022 = vadd.f32 %v4979, %v5021
  %5023 = vdwg.mxu0
  %5024 = vmatprep.subr.bf16.mxu0 %v3636
  %5025 = vmatpush1.bf16.msra.mxu0 %v3635
  %5026 = vmatprep.subr.bf16.mxu0 %v3640
  %5027 = vmatpush1.bf16.msra.mxu0 %v3639
  %5028 = vmatprep.subr.bf16.mxu0 %v3644
  %5029 = vmatpush1.bf16.msra.mxu0 %v3643
  %5030 = vmatprep.subr.bf16.mxu0 %v3648
  %5031 = vmatpush1.bf16.msra.mxu0 %v3647
  %5032 = vmatprep.subr.bf16.mxu0 %v3652
  %5033 = vmatpush1.bf16.msra.mxu0 %v3651
  %5034 = vmatprep.subr.bf16.mxu0 %v3656
  %5035 = vmatpush1.bf16.msra.mxu0 %v3655
  %5036 = vmatprep.subr.bf16.mxu0 %v3660
  %5037 = vmatpush1.bf16.msra.mxu0 %v3659
  %5038 = vmatprep.subr.bf16.mxu0 %v3664
  %5039 = vmatpush1.bf16.msra.mxu0 %v3663
  %5040 = vmatprep.subr.bf16.mxu0 %v3668
  %5041 = vmatpush1.bf16.msra.mxu0 %v3667
  %5042 = vmatprep.subr.bf16.mxu0 %v3672
  %5043 = vmatpush1.bf16.msra.mxu0 %v3671
  %5044 = vmatprep.subr.bf16.mxu0 %v3676
  %5045 = vmatpush1.bf16.msra.mxu0 %v3675
  %5046 = vmatprep.subr.bf16.mxu0 %v3680
  %5047 = vmatpush1.bf16.msra.mxu0 %v3679
  %5048 = vmatprep.subr.bf16.mxu0 %v3684
  %5049 = vmatpush1.bf16.msra.mxu0 %v3683
  %5050 = vmatprep.subr.bf16.mxu0 %v3688
  %5051 = vmatpush1.bf16.msra.mxu0 %v3687
  %5052 = vmatprep.subr.bf16.mxu0 %v3692
  %5053 = vmatpush1.bf16.msra.mxu0 %v3691
  %5054 = vmatprep.subr.bf16.mxu0 %v3696
  %5055 = vmatpush1.bf16.msra.mxu0 %v3695
  %5056 = vmatprep.mubr.bf16.mxu0 %v84
  %5057 = vmatmul.mubr.bf16.gmra.mrb[0].mxu0 %v83
  %v5058 = vpop.f32.mrb[0].mxu0
  %v5059 = vadd.f32 %v5016, %v5058
  %v5060 = vpop.f32.mrb[0].mxu0
  %v5061 = vadd.f32 %v5018, %v5060
  %v5062 = vpop.f32.mrb[0].mxu0
  %v5063 = vadd.f32 %v5020, %v5062
  %v5064 = vpop.f32.mrb[0].mxu0
  %v5065 = vadd.f32 %v5022, %v5064
  %5066 = vdwg.mxu0
  %5067 = vmatprep.subr.bf16.mxu0 %v3700
  %5068 = vmatpush1.bf16.msra.mxu0 %v3699
  %5069 = vmatprep.subr.bf16.mxu0 %v3704
  %5070 = vmatpush1.bf16.msra.mxu0 %v3703
  %5071 = vmatprep.subr.bf16.mxu0 %v3708
  %5072 = vmatpush1.bf16.msra.mxu0 %v3707
  %5073 = vmatprep.subr.bf16.mxu0 %v3712
  %5074 = vmatpush1.bf16.msra.mxu0 %v3711
  %5075 = vmatprep.subr.bf16.mxu0 %v3716
  %5076 = vmatpush1.bf16.msra.mxu0 %v3715
  %5077 = vmatprep.subr.bf16.mxu0 %v3720
  %5078 = vmatpush1.bf16.msra.mxu0 %v3719
  %5079 = vmatprep.subr.bf16.mxu0 %v3724
  %5080 = vmatpush1.bf16.msra.mxu0 %v3723
  %5081 = vmatprep.subr.bf16.mxu0 %v3728
  %5082 = vmatpush1.bf16.msra.mxu0 %v3727
  %5083 = vmatprep.subr.bf16.mxu0 %v3732
  %5084 = vmatpush1.bf16.msra.mxu0 %v3731
  %5085 = vmatprep.subr.bf16.mxu0 %v3736
  %5086 = vmatpush1.bf16.msra.mxu0 %v3735
  %5087 = vmatprep.subr.bf16.mxu0 %v3740
  %5088 = vmatpush1.bf16.msra.mxu0 %v3739
  %5089 = vmatprep.subr.bf16.mxu0 %v3744
  %5090 = vmatpush1.bf16.msra.mxu0 %v3743
  %5091 = vmatprep.subr.bf16.mxu0 %v3748
  %5092 = vmatpush1.bf16.msra.mxu0 %v3747
  %5093 = vmatprep.subr.bf16.mxu0 %v3752
  %5094 = vmatpush1.bf16.msra.mxu0 %v3751
  %5095 = vmatprep.subr.bf16.mxu0 %v3756
  %5096 = vmatpush1.bf16.msra.mxu0 %v3755
  %5097 = vmatprep.subr.bf16.mxu0 %v3760
  %5098 = vmatpush1.bf16.msra.mxu0 %v3759
  %5099 = vmatprep.mubr.bf16.mxu0 %v86
  %5100 = vmatmul.mubr.bf16.gmra.mrb[0].mxu0 %v85
  %v5101 = vpop.f32.mrb[0].mxu0
  %v5102 = vadd.f32 %v5059, %v5101
  %v5103 = vpop.f32.mrb[0].mxu0
  %v5104 = vadd.f32 %v5061, %v5103
  %v5105 = vpop.f32.mrb[0].mxu0
  %v5106 = vadd.f32 %v5063, %v5105
  %v5107 = vpop.f32.mrb[0].mxu0
  %v5108 = vadd.f32 %v5065, %v5107
  %5109 = vdwg.mxu0
  %5110 = vmatprep.subr.bf16.mxu0 %v3764
  %5111 = vmatpush1.bf16.msra.mxu0 %v3763
  %5112 = vmatprep.subr.bf16.mxu0 %v3768
  %5113 = vmatpush1.bf16.msra.mxu0 %v3767
  %5114 = vmatprep.subr.bf16.mxu0 %v3772
  %5115 = vmatpush1.bf16.msra.mxu0 %v3771
  %5116 = vmatprep.subr.bf16.mxu0 %v3776
  %5117 = vmatpush1.bf16.msra.mxu0 %v3775
  %5118 = vmatprep.subr.bf16.mxu0 %v3780
  %5119 = vmatpush1.bf16.msra.mxu0 %v3779
  %5120 = vmatprep.subr.bf16.mxu0 %v3784
  %5121 = vmatpush1.bf16.msra.mxu0 %v3783
  %5122 = vmatprep.subr.bf16.mxu0 %v3788
  %5123 = vmatpush1.bf16.msra.mxu0 %v3787
  %5124 = vmatprep.subr.bf16.mxu0 %v3792
  %5125 = vmatpush1.bf16.msra.mxu0 %v3791
  %5126 = vmatprep.subr.bf16.mxu0 %v3796
  %5127 = vmatpush1.bf16.msra.mxu0 %v3795
  %5128 = vmatprep.subr.bf16.mxu0 %v3800
  %5129 = vmatpush1.bf16.msra.mxu0 %v3799
  %5130 = vmatprep.subr.bf16.mxu0 %v3804
  %5131 = vmatpush1.bf16.msra.mxu0 %v3803
  %5132 = vmatprep.subr.bf16.mxu0 %v3808
  %5133 = vmatpush1.bf16.msra.mxu0 %v3807
  %5134 = vmatprep.subr.bf16.mxu0 %v3812
  %5135 = vmatpush1.bf16.msra.mxu0 %v3811
  %5136 = vmatprep.subr.bf16.mxu0 %v3816
  %5137 = vmatpush1.bf16.msra.mxu0 %v3815
  %5138 = vmatprep.subr.bf16.mxu0 %v3820
  %5139 = vmatpush1.bf16.msra.mxu0 %v3819
  %5140 = vmatprep.subr.bf16.mxu0 %v3824
  %5141 = vmatpush1.bf16.msra.mxu0 %v3823
  %5142 = vmatprep.mubr.bf16.mxu0 %v88
  %5143 = vmatmul.mubr.bf16.gmra.mrb[0].mxu0 %v87
  %v5144 = vpop.f32.mrb[0].mxu0
  %v5145 = vadd.f32 %v5102, %v5144
  %v5146 = vpop.f32.mrb[0].mxu0
  %v5147 = vadd.f32 %v5104, %v5146
  %v5148 = vpop.f32.mrb[0].mxu0
  %v5149 = vadd.f32 %v5106, %v5148
  %v5150 = vpop.f32.mrb[0].mxu0
  %v5151 = vadd.f32 %v5108, %v5150
  %5152 = vdwg.mxu0
  %5153 = vmatprep.subr.bf16.mxu0 %v3828
  %5154 = vmatpush1.bf16.msra.mxu0 %v3827
  %5155 = vmatprep.subr.bf16.mxu0 %v3832
  %5156 = vmatpush1.bf16.msra.mxu0 %v3831
  %5157 = vmatprep.subr.bf16.mxu0 %v3836
  %5158 = vmatpush1.bf16.msra.mxu0 %v3835
  %5159 = vmatprep.subr.bf16.mxu0 %v3840
  %5160 = vmatpush1.bf16.msra.mxu0 %v3839
  %5161 = vmatprep.subr.bf16.mxu0 %v3844
  %5162 = vmatpush1.bf16.msra.mxu0 %v3843
  %5163 = vmatprep.subr.bf16.mxu0 %v3848
  %5164 = vmatpush1.bf16.msra.mxu0 %v3847
  %5165 = vmatprep.subr.bf16.mxu0 %v3852
  %5166 = vmatpush1.bf16.msra.mxu0 %v3851
  %5167 = vmatprep.subr.bf16.mxu0 %v3856
  %5168 = vmatpush1.bf16.msra.mxu0 %v3855
  %5169 = vmatprep.subr.bf16.mxu0 %v3860
  %5170 = vmatpush1.bf16.msra.mxu0 %v3859
  %5171 = vmatprep.subr.bf16.mxu0 %v3864
  %5172 = vmatpush1.bf16.msra.mxu0 %v3863
  %5173 = vmatprep.subr.bf16.mxu0 %v3868
  %5174 = vmatpush1.bf16.msra.mxu0 %v3867
  %5175 = vmatprep.subr.bf16.mxu0 %v3872
  %5176 = vmatpush1.bf16.msra.mxu0 %v3871
  %5177 = vmatprep.subr.bf16.mxu0 %v3876
  %5178 = vmatpush1.bf16.msra.mxu0 %v3875
  %5179 = vmatprep.subr.bf16.mxu0 %v3880
  %5180 = vmatpush1.bf16.msra.mxu0 %v3879
  %5181 = vmatprep.subr.bf16.mxu0 %v3884
  %5182 = vmatpush1.bf16.msra.mxu0 %v3883
  %5183 = vmatprep.subr.bf16.mxu0 %v3888
  %5184 = vmatpush1.bf16.msra.mxu0 %v3887
  %5185 = vmatprep.mubr.bf16.mxu0 %v90
  %5186 = vmatmul.mubr.bf16.gmra.mrb[0].mxu0 %v89
  %v5187 = vpop.f32.mrb[0].mxu0
  %v5188 = vadd.f32 %v5145, %v5187
  %v5189 = vpop.f32.mrb[0].mxu0
  %v5190 = vadd.f32 %v5147, %v5189
  %v5191 = vpop.f32.mrb[0].mxu0
  %v5192 = vadd.f32 %v5149, %v5191
  %v5193 = vpop.f32.mrb[0].mxu0
  %v5194 = vadd.f32 %v5151, %v5193
  %5195 = vdwg.mxu0
  %5196 = vmatprep.subr.bf16.mxu0 %v3892
  %5197 = vmatpush1.bf16.msra.mxu0 %v3891
  %5198 = vmatprep.subr.bf16.mxu0 %v3896
  %5199 = vmatpush1.bf16.msra.mxu0 %v3895
  %5200 = vmatprep.subr.bf16.mxu0 %v3900
  %5201 = vmatpush1.bf16.msra.mxu0 %v3899
  %5202 = vmatprep.subr.bf16.mxu0 %v3904
  %5203 = vmatpush1.bf16.msra.mxu0 %v3903
  %5204 = vmatprep.subr.bf16.mxu0 %v3908
  %5205 = vmatpush1.bf16.msra.mxu0 %v3907
  %5206 = vmatprep.subr.bf16.mxu0 %v3912
  %5207 = vmatpush1.bf16.msra.mxu0 %v3911
  %5208 = vmatprep.subr.bf16.mxu0 %v3916
  %5209 = vmatpush1.bf16.msra.mxu0 %v3915
  %5210 = vmatprep.subr.bf16.mxu0 %v3920
  %5211 = vmatpush1.bf16.msra.mxu0 %v3919
  %5212 = vmatprep.subr.bf16.mxu0 %v3924
  %5213 = vmatpush1.bf16.msra.mxu0 %v3923
  %5214 = vmatprep.subr.bf16.mxu0 %v3928
  %5215 = vmatpush1.bf16.msra.mxu0 %v3927
  %5216 = vmatprep.subr.bf16.mxu0 %v3932
  %5217 = vmatpush1.bf16.msra.mxu0 %v3931
  %5218 = vmatprep.subr.bf16.mxu0 %v3936
  %5219 = vmatpush1.bf16.msra.mxu0 %v3935
  %5220 = vmatprep.subr.bf16.mxu0 %v3940
  %5221 = vmatpush1.bf16.msra.mxu0 %v3939
  %5222 = vmatprep.subr.bf16.mxu0 %v3944
  %5223 = vmatpush1.bf16.msra.mxu0 %v3943
  %5224 = vmatprep.subr.bf16.mxu0 %v3948
  %5225 = vmatpush1.bf16.msra.mxu0 %v3947
  %5226 = vmatprep.subr.bf16.mxu0 %v3952
  %5227 = vmatpush1.bf16.msra.mxu0 %v3951
  %5228 = vmatprep.mubr.bf16.mxu0 %v92
  %5229 = vmatmul.mubr.bf16.gmra.mrb[0].mxu0 %v91
  %v5230 = vpop.f32.mrb[0].mxu0
  %v5231 = vadd.f32 %v5188, %v5230
  %v5232 = vpop.f32.mrb[0].mxu0
  %v5233 = vadd.f32 %v5190, %v5232
  %v5234 = vpop.f32.mrb[0].mxu0
  %v5235 = vadd.f32 %v5192, %v5234
  %v5236 = vpop.f32.mrb[0].mxu0
  %v5237 = vadd.f32 %v5194, %v5236
  %5238 = vdwg.mxu0
  %5239 = vmatprep.subr.bf16.mxu0 %v3190
  %5240 = vmatpush1.bf16.msra.mxu0 %v3189
  %5241 = vmatprep.subr.bf16.mxu0 %v3194
  %5242 = vmatpush1.bf16.msra.mxu0 %v3193
  %5243 = vmatprep.subr.bf16.mxu0 %v3198
  %5244 = vmatpush1.bf16.msra.mxu0 %v3197
  %5245 = vmatprep.subr.bf16.mxu0 %v3202
  %5246 = vmatpush1.bf16.msra.mxu0 %v3201
  %5247 = vmatprep.subr.bf16.mxu0 %v3206
  %5248 = vmatpush1.bf16.msra.mxu0 %v3205
  %5249 = vmatprep.subr.bf16.mxu0 %v3210
  %5250 = vmatpush1.bf16.msra.mxu0 %v3209
  %5251 = vmatprep.subr.bf16.mxu0 %v3214
  %5252 = vmatpush1.bf16.msra.mxu0 %v3213
  %5253 = vmatprep.subr.bf16.mxu0 %v3218
  %5254 = vmatpush1.bf16.msra.mxu0 %v3217
  %5255 = vmatprep.subr.bf16.mxu0 %v3222
  %5256 = vmatpush1.bf16.msra.mxu0 %v3221
  %5257 = vmatprep.subr.bf16.mxu0 %v3226
  %5258 = vmatpush1.bf16.msra.mxu0 %v3225
  %5259 = vmatprep.subr.bf16.mxu0 %v3230
  %5260 = vmatpush1.bf16.msra.mxu0 %v3229
  %5261 = vmatprep.subr.bf16.mxu0 %v3234
  %5262 = vmatpush1.bf16.msra.mxu0 %v3233
  %5263 = vmatprep.subr.bf16.mxu0 %v3238
  %5264 = vmatpush1.bf16.msra.mxu0 %v3237
  %5265 = vmatprep.subr.bf16.mxu0 %v3242
  %5266 = vmatpush1.bf16.msra.mxu0 %v3241
  %5267 = vmatprep.subr.bf16.mxu0 %v3246
  %5268 = vmatpush1.bf16.msra.mxu0 %v3245
  %5269 = vmatprep.subr.bf16.mxu0 %v3250
  %5270 = vmatpush1.bf16.msra.mxu0 %v3249
  %5271 = vmatprep.mubr.bf16.mxu0 %v70
  %5272 = vmatmul.mubr.bf16.gmra.mrb[0].mxu0 %v69
  %v5273 = vpop.f32.mrb[0].mxu0
  %v5274 = vadd.f32 %v874, %v5273
  %v5275 = vpop.f32.mrb[0].mxu0
  %v5276 = vadd.f32 %v878, %v5275
  %v5277 = vpop.f32.mrb[0].mxu0
  %v5278 = vadd.f32 %v874, %v5277
  %v5279 = vpop.f32.mrb[0].mxu0
  %v5280 = vadd.f32 %v878, %v5279
  %5281 = vdwg.mxu0
  %5282 = vmatprep.subr.bf16.mxu0 %v3254
  %5283 = vmatpush1.bf16.msra.mxu0 %v3253
  %5284 = vmatprep.subr.bf16.mxu0 %v3258
  %5285 = vmatpush1.bf16.msra.mxu0 %v3257
  %5286 = vmatprep.subr.bf16.mxu0 %v3262
  %5287 = vmatpush1.bf16.msra.mxu0 %v3261
  %5288 = vmatprep.subr.bf16.mxu0 %v3266
  %5289 = vmatpush1.bf16.msra.mxu0 %v3265
  %5290 = vmatprep.subr.bf16.mxu0 %v3270
  %5291 = vmatpush1.bf16.msra.mxu0 %v3269
  %5292 = vmatprep.subr.bf16.mxu0 %v3274
  %5293 = vmatpush1.bf16.msra.mxu0 %v3273
  %5294 = vmatprep.subr.bf16.mxu0 %v3278
  %5295 = vmatpush1.bf16.msra.mxu0 %v3277
  %5296 = vmatprep.subr.bf16.mxu0 %v3282
  %5297 = vmatpush1.bf16.msra.mxu0 %v3281
  %5298 = vmatprep.subr.bf16.mxu0 %v3286
  %5299 = vmatpush1.bf16.msra.mxu0 %v3285
  %5300 = vmatprep.subr.bf16.mxu0 %v3290
  %5301 = vmatpush1.bf16.msra.mxu0 %v3289
  %5302 = vmatprep.subr.bf16.mxu0 %v3294
  %5303 = vmatpush1.bf16.msra.mxu0 %v3293
  %5304 = vmatprep.subr.bf16.mxu0 %v3298
  %5305 = vmatpush1.bf16.msra.mxu0 %v3297
  %5306 = vmatprep.subr.bf16.mxu0 %v3302
  %5307 = vmatpush1.bf16.msra.mxu0 %v3301
  %5308 = vmatprep.subr.bf16.mxu0 %v3306
  %5309 = vmatpush1.bf16.msra.mxu0 %v3305
  %5310 = vmatprep.subr.bf16.mxu0 %v3310
  %5311 = vmatpush1.bf16.msra.mxu0 %v3309
  %5312 = vmatprep.subr.bf16.mxu0 %v3314
  %5313 = vmatpush1.bf16.msra.mxu0 %v3313
  %5314 = vmatprep.mubr.bf16.mxu0 %v72
  %5315 = vmatmul.mubr.bf16.gmra.mrb[0].mxu0 %v71
  %v5316 = vpop.f32.mrb[0].mxu0
  %v5317 = vadd.f32 %v5274, %v5316
  %v5318 = vpop.f32.mrb[0].mxu0
  %v5319 = vadd.f32 %v5276, %v5318
  %v5320 = vpop.f32.mrb[0].mxu0
  %v5321 = vadd.f32 %v5278, %v5320
  %v5322 = vpop.f32.mrb[0].mxu0
  %v5323 = vadd.f32 %v5280, %v5322
  %5324 = vdwg.mxu0
  %5325 = vmatprep.subr.bf16.mxu0 %v3318
  %5326 = vmatpush1.bf16.msra.mxu0 %v3317
  %5327 = vmatprep.subr.bf16.mxu0 %v3322
  %5328 = vmatpush1.bf16.msra.mxu0 %v3321
  %5329 = vmatprep.subr.bf16.mxu0 %v3326
  %5330 = vmatpush1.bf16.msra.mxu0 %v3325
  %5331 = vmatprep.subr.bf16.mxu0 %v3330
  %5332 = vmatpush1.bf16.msra.mxu0 %v3329
  %5333 = vmatprep.subr.bf16.mxu0 %v3334
  %5334 = vmatpush1.bf16.msra.mxu0 %v3333
  %5335 = vmatprep.subr.bf16.mxu0 %v3338
  %5336 = vmatpush1.bf16.msra.mxu0 %v3337
  %5337 = vmatprep.subr.bf16.mxu0 %v3342
  %5338 = vmatpush1.bf16.msra.mxu0 %v3341
  %5339 = vmatprep.subr.bf16.mxu0 %v3346
  %5340 = vmatpush1.bf16.msra.mxu0 %v3345
  %5341 = vmatprep.subr.bf16.mxu0 %v3350
  %5342 = vmatpush1.bf16.msra.mxu0 %v3349
  %5343 = vmatprep.subr.bf16.mxu0 %v3354
  %5344 = vmatpush1.bf16.msra.mxu0 %v3353
  %5345 = vmatprep.subr.bf16.mxu0 %v3358
  %5346 = vmatpush1.bf16.msra.mxu0 %v3357
  %5347 = vmatprep.subr.bf16.mxu0 %v3362
  %5348 = vmatpush1.bf16.msra.mxu0 %v3361
  %5349 = vmatprep.subr.bf16.mxu0 %v3366
  %5350 = vmatpush1.bf16.msra.mxu0 %v3365
  %5351 = vmatprep.subr.bf16.mxu0 %v3370
  %5352 = vmatpush1.bf16.msra.mxu0 %v3369
  %5353 = vmatprep.subr.bf16.mxu0 %v3374
  %5354 = vmatpush1.bf16.msra.mxu0 %v3373
  %5355 = vmatprep.subr.bf16.mxu0 %v3378
  %5356 = vmatpush1.bf16.msra.mxu0 %v3377
  %5357 = vmatprep.mubr.bf16.mxu0 %v74
  %5358 = vmatmul.mubr.bf16.gmra.mrb[0].mxu0 %v73
  %v5359 = vpop.f32.mrb[0].mxu0
  %v5360 = vadd.f32 %v5317, %v5359
  %v5361 = vpop.f32.mrb[0].mxu0
  %v5362 = vadd.f32 %v5319, %v5361
  %v5363 = vpop.f32.mrb[0].mxu0
  %v5364 = vadd.f32 %v5321, %v5363
  %v5365 = vpop.f32.mrb[0].mxu0
  %v5366 = vadd.f32 %v5323, %v5365
  %5367 = vdwg.mxu0
  %5368 = vmatprep.subr.bf16.mxu0 %v3382
  %5369 = vmatpush1.bf16.msra.mxu0 %v3381
  %5370 = vmatprep.subr.bf16.mxu0 %v3386
  %5371 = vmatpush1.bf16.msra.mxu0 %v3385
  %5372 = vmatprep.subr.bf16.mxu0 %v3390
  %5373 = vmatpush1.bf16.msra.mxu0 %v3389
  %5374 = vmatprep.subr.bf16.mxu0 %v3394
  %5375 = vmatpush1.bf16.msra.mxu0 %v3393
  %5376 = vmatprep.subr.bf16.mxu0 %v3398
  %5377 = vmatpush1.bf16.msra.mxu0 %v3397
  %5378 = vmatprep.subr.bf16.mxu0 %v3402
  %5379 = vmatpush1.bf16.msra.mxu0 %v3401
  %5380 = vmatprep.subr.bf16.mxu0 %v3406
  %5381 = vmatpush1.bf16.msra.mxu0 %v3405
  %5382 = vmatprep.subr.bf16.mxu0 %v3410
  %5383 = vmatpush1.bf16.msra.mxu0 %v3409
  %5384 = vmatprep.subr.bf16.mxu0 %v3414
  %5385 = vmatpush1.bf16.msra.mxu0 %v3413
  %5386 = vmatprep.subr.bf16.mxu0 %v3418
  %5387 = vmatpush1.bf16.msra.mxu0 %v3417
  %5388 = vmatprep.subr.bf16.mxu0 %v3422
  %5389 = vmatpush1.bf16.msra.mxu0 %v3421
  %5390 = vmatprep.subr.bf16.mxu0 %v3426
  %5391 = vmatpush1.bf16.msra.mxu0 %v3425
  %5392 = vmatprep.subr.bf16.mxu0 %v3430
  %5393 = vmatpush1.bf16.msra.mxu0 %v3429
  %5394 = vmatprep.subr.bf16.mxu0 %v3434
  %5395 = vmatpush1.bf16.msra.mxu0 %v3433
  %5396 = vmatprep.subr.bf16.mxu0 %v3438
  %5397 = vmatpush1.bf16.msra.mxu0 %v3437
  %5398 = vmatprep.subr.bf16.mxu0 %v3442
  %5399 = vmatpush1.bf16.msra.mxu0 %v3441
  %5400 = vmatprep.mubr.bf16.mxu0 %v76
  %5401 = vmatmul.mubr.bf16.gmra.mrb[0].mxu0 %v75
  %v5402 = vpop.f32.mrb[0].mxu0
  %v5403 = vadd.f32 %v5360, %v5402
  %v5404 = vpop.f32.mrb[0].mxu0
  %v5405 = vadd.f32 %v5362, %v5404
  %v5406 = vpop.f32.mrb[0].mxu0
  %v5407 = vadd.f32 %v5364, %v5406
  %v5408 = vpop.f32.mrb[0].mxu0
  %v5409 = vadd.f32 %v5366, %v5408
  %5410 = vdwg.mxu0
  %5411 = vmatprep.subr.bf16.mxu0 %v3446
  %5412 = vmatpush1.bf16.msra.mxu0 %v3445
  %5413 = vmatprep.subr.bf16.mxu0 %v3450
  %5414 = vmatpush1.bf16.msra.mxu0 %v3449
  %5415 = vmatprep.subr.bf16.mxu0 %v3454
  %5416 = vmatpush1.bf16.msra.mxu0 %v3453
  %5417 = vmatprep.subr.bf16.mxu0 %v3458
  %5418 = vmatpush1.bf16.msra.mxu0 %v3457
  %5419 = vmatprep.subr.bf16.mxu0 %v3462
  %5420 = vmatpush1.bf16.msra.mxu0 %v3461
  %5421 = vmatprep.subr.bf16.mxu0 %v3466
  %5422 = vmatpush1.bf16.msra.mxu0 %v3465
  %5423 = vmatprep.subr.bf16.mxu0 %v3470
  %5424 = vmatpush1.bf16.msra.mxu0 %v3469
  %5425 = vmatprep.subr.bf16.mxu0 %v3474
  %5426 = vmatpush1.bf16.msra.mxu0 %v3473
  %5427 = vmatprep.subr.bf16.mxu0 %v3478
  %5428 = vmatpush1.bf16.msra.mxu0 %v3477
  %5429 = vmatprep.subr.bf16.mxu0 %v3482
  %5430 = vmatpush1.bf16.msra.mxu0 %v3481
  %5431 = vmatprep.subr.bf16.mxu0 %v3486
  %5432 = vmatpush1.bf16.msra.mxu0 %v3485
  %5433 = vmatprep.subr.bf16.mxu0 %v3490
  %5434 = vmatpush1.bf16.msra.mxu0 %v3489
  %5435 = vmatprep.subr.bf16.mxu0 %v3494
  %5436 = vmatpush1.bf16.msra.mxu0 %v3493
  %5437 = vmatprep.subr.bf16.mxu0 %v3498
  %5438 = vmatpush1.bf16.msra.mxu0 %v3497
  %5439 = vmatprep.subr.bf16.mxu0 %v3502
  %5440 = vmatpush1.bf16.msra.mxu0 %v3501
  %5441 = vmatprep.subr.bf16.mxu0 %v3506
  %5442 = vmatpush1.bf16.msra.mxu0 %v3505
  %5443 = vmatprep.mubr.bf16.mxu0 %v78
  %5444 = vmatmul.mubr.bf16.gmra.mrb[0].mxu0 %v77
  %v5445 = vpop.f32.mrb[0].mxu0
  %v5446 = vadd.f32 %v5403, %v5445
  %v5447 = vpop.f32.mrb[0].mxu0
  %v5448 = vadd.f32 %v5405, %v5447
  %v5449 = vpop.f32.mrb[0].mxu0
  %v5450 = vadd.f32 %v5407, %v5449
  %v5451 = vpop.f32.mrb[0].mxu0
  %v5452 = vadd.f32 %v5409, %v5451
  %5453 = vdwg.mxu0
  %5454 = vmatprep.subr.bf16.mxu0 %v3510
  %5455 = vmatpush1.bf16.msra.mxu0 %v3509
  %5456 = vmatprep.subr.bf16.mxu0 %v3514
  %5457 = vmatpush1.bf16.msra.mxu0 %v3513
  %5458 = vmatprep.subr.bf16.mxu0 %v3518
  %5459 = vmatpush1.bf16.msra.mxu0 %v3517
  %5460 = vmatprep.subr.bf16.mxu0 %v3522
  %5461 = vmatpush1.bf16.msra.mxu0 %v3521
  %5462 = vmatprep.subr.bf16.mxu0 %v3526
  %5463 = vmatpush1.bf16.msra.mxu0 %v3525
  %5464 = vmatprep.subr.bf16.mxu0 %v3530
  %5465 = vmatpush1.bf16.msra.mxu0 %v3529
  %5466 = vmatprep.subr.bf16.mxu0 %v3534
  %5467 = vmatpush1.bf16.msra.mxu0 %v3533
  %5468 = vmatprep.subr.bf16.mxu0 %v3538
  %5469 = vmatpush1.bf16.msra.mxu0 %v3537
  %5470 = vmatprep.subr.bf16.mxu0 %v3542
  %5471 = vmatpush1.bf16.msra.mxu0 %v3541
  %5472 = vmatprep.subr.bf16.mxu0 %v3546
  %5473 = vmatpush1.bf16.msra.mxu0 %v3545
  %5474 = vmatprep.subr.bf16.mxu0 %v3550
  %5475 = vmatpush1.bf16.msra.mxu0 %v3549
  %5476 = vmatprep.subr.bf16.mxu0 %v3554
  %5477 = vmatpush1.bf16.msra.mxu0 %v3553
  %5478 = vmatprep.subr.bf16.mxu0 %v3558
  %5479 = vmatpush1.bf16.msra.mxu0 %v3557
  %5480 = vmatprep.subr.bf16.mxu0 %v3562
  %5481 = vmatpush1.bf16.msra.mxu0 %v3561
  %5482 = vmatprep.subr.bf16.mxu0 %v3566
  %5483 = vmatpush1.bf16.msra.mxu0 %v3565
  %5484 = vmatprep.subr.bf16.mxu0 %v3570
  %5485 = vmatpush1.bf16.msra.mxu0 %v3569
  %5486 = vmatprep.mubr.bf16.mxu0 %v80
  %5487 = vmatmul.mubr.bf16.gmra.mrb[0].mxu0 %v79
  %v5488 = vpop.f32.mrb[0].mxu0
  %v5489 = vadd.f32 %v5446, %v5488
  %v5490 = vpop.f32.mrb[0].mxu0
  %v5491 = vadd.f32 %v5448, %v5490
  %v5492 = vpop.f32.mrb[0].mxu0
  %v5493 = vadd.f32 %v5450, %v5492
  %v5494 = vpop.f32.mrb[0].mxu0
  %v5495 = vadd.f32 %v5452, %v5494
  %5496 = vdwg.mxu0
  %5497 = vmatprep.subr.bf16.mxu0 %v3574
  %5498 = vmatpush1.bf16.msra.mxu0 %v3573
  %5499 = vmatprep.subr.bf16.mxu0 %v3578
  %5500 = vmatpush1.bf16.msra.mxu0 %v3577
  %5501 = vmatprep.subr.bf16.mxu0 %v3582
  %5502 = vmatpush1.bf16.msra.mxu0 %v3581
  %5503 = vmatprep.subr.bf16.mxu0 %v3586
  %5504 = vmatpush1.bf16.msra.mxu0 %v3585
  %5505 = vmatprep.subr.bf16.mxu0 %v3590
  %5506 = vmatpush1.bf16.msra.mxu0 %v3589
  %5507 = vmatprep.subr.bf16.mxu0 %v3594
  %5508 = vmatpush1.bf16.msra.mxu0 %v3593
  %5509 = vmatprep.subr.bf16.mxu0 %v3598
  %5510 = vmatpush1.bf16.msra.mxu0 %v3597
  %5511 = vmatprep.subr.bf16.mxu0 %v3602
  %5512 = vmatpush1.bf16.msra.mxu0 %v3601
  %5513 = vmatprep.subr.bf16.mxu0 %v3606
  %5514 = vmatpush1.bf16.msra.mxu0 %v3605
  %5515 = vmatprep.subr.bf16.mxu0 %v3610
  %5516 = vmatpush1.bf16.msra.mxu0 %v3609
  %5517 = vmatprep.subr.bf16.mxu0 %v3614
  %5518 = vmatpush1.bf16.msra.mxu0 %v3613
  %5519 = vmatprep.subr.bf16.mxu0 %v3618
  %5520 = vmatpush1.bf16.msra.mxu0 %v3617
  %5521 = vmatprep.subr.bf16.mxu0 %v3622
  %5522 = vmatpush1.bf16.msra.mxu0 %v3621
  %5523 = vmatprep.subr.bf16.mxu0 %v3626
  %5524 = vmatpush1.bf16.msra.mxu0 %v3625
  %5525 = vmatprep.subr.bf16.mxu0 %v3630
  %5526 = vmatpush1.bf16.msra.mxu0 %v3629
  %5527 = vmatprep.subr.bf16.mxu0 %v3634
  %5528 = vmatpush1.bf16.msra.mxu0 %v3633
  %5529 = vmatprep.mubr.bf16.mxu0 %v82
  %5530 = vmatmul.mubr.bf16.gmra.mrb[0].mxu0 %v81
  %v5531 = vpop.f32.mrb[0].mxu0
  %v5532 = vadd.f32 %v5489, %v5531
  %v5533 = vpop.f32.mrb[0].mxu0
  %v5534 = vadd.f32 %v5491, %v5533
  %v5535 = vpop.f32.mrb[0].mxu0
  %v5536 = vadd.f32 %v5493, %v5535
  %v5537 = vpop.f32.mrb[0].mxu0
  %v5538 = vadd.f32 %v5495, %v5537
  %5539 = vdwg.mxu0
  %5540 = vmatprep.subr.bf16.mxu0 %v3638
  %5541 = vmatpush1.bf16.msra.mxu0 %v3637
  %5542 = vmatprep.subr.bf16.mxu0 %v3642
  %5543 = vmatpush1.bf16.msra.mxu0 %v3641
  %5544 = vmatprep.subr.bf16.mxu0 %v3646
  %5545 = vmatpush1.bf16.msra.mxu0 %v3645
  %5546 = vmatprep.subr.bf16.mxu0 %v3650
  %5547 = vmatpush1.bf16.msra.mxu0 %v3649
  %5548 = vmatprep.subr.bf16.mxu0 %v3654
  %5549 = vmatpush1.bf16.msra.mxu0 %v3653
  %5550 = vmatprep.subr.bf16.mxu0 %v3658
  %5551 = vmatpush1.bf16.msra.mxu0 %v3657
  %5552 = vmatprep.subr.bf16.mxu0 %v3662
  %5553 = vmatpush1.bf16.msra.mxu0 %v3661
  %5554 = vmatprep.subr.bf16.mxu0 %v3666
  %5555 = vmatpush1.bf16.msra.mxu0 %v3665
  %5556 = vmatprep.subr.bf16.mxu0 %v3670
  %5557 = vmatpush1.bf16.msra.mxu0 %v3669
  %5558 = vmatprep.subr.bf16.mxu0 %v3674
  %5559 = vmatpush1.bf16.msra.mxu0 %v3673
  %5560 = vmatprep.subr.bf16.mxu0 %v3678
  %5561 = vmatpush1.bf16.msra.mxu0 %v3677
  %5562 = vmatprep.subr.bf16.mxu0 %v3682
  %5563 = vmatpush1.bf16.msra.mxu0 %v3681
  %5564 = vmatprep.subr.bf16.mxu0 %v3686
  %5565 = vmatpush1.bf16.msra.mxu0 %v3685
  %5566 = vmatprep.subr.bf16.mxu0 %v3690
  %5567 = vmatpush1.bf16.msra.mxu0 %v3689
  %5568 = vmatprep.subr.bf16.mxu0 %v3694
  %5569 = vmatpush1.bf16.msra.mxu0 %v3693
  %5570 = vmatprep.subr.bf16.mxu0 %v3698
  %5571 = vmatpush1.bf16.msra.mxu0 %v3697
  %5572 = vmatprep.mubr.bf16.mxu0 %v84
  %5573 = vmatmul.mubr.bf16.gmra.mrb[0].mxu0 %v83
  %v5574 = vpop.f32.mrb[0].mxu0
  %v5575 = vadd.f32 %v5532, %v5574
  %v5576 = vpop.f32.mrb[0].mxu0
  %v5577 = vadd.f32 %v5534, %v5576
  %v5578 = vpop.f32.mrb[0].mxu0
  %v5579 = vadd.f32 %v5536, %v5578
  %v5580 = vpop.f32.mrb[0].mxu0
  %v5581 = vadd.f32 %v5538, %v5580
  %5582 = vdwg.mxu0
  %5583 = vmatprep.subr.bf16.mxu0 %v3702
  %5584 = vmatpush1.bf16.msra.mxu0 %v3701
  %5585 = vmatprep.subr.bf16.mxu0 %v3706
  %5586 = vmatpush1.bf16.msra.mxu0 %v3705
  %5587 = vmatprep.subr.bf16.mxu0 %v3710
  %5588 = vmatpush1.bf16.msra.mxu0 %v3709
  %5589 = vmatprep.subr.bf16.mxu0 %v3714
  %5590 = vmatpush1.bf16.msra.mxu0 %v3713
  %5591 = vmatprep.subr.bf16.mxu0 %v3718
  %5592 = vmatpush1.bf16.msra.mxu0 %v3717
  %5593 = vmatprep.subr.bf16.mxu0 %v3722
  %5594 = vmatpush1.bf16.msra.mxu0 %v3721
  %5595 = vmatprep.subr.bf16.mxu0 %v3726
  %5596 = vmatpush1.bf16.msra.mxu0 %v3725
  %5597 = vmatprep.subr.bf16.mxu0 %v3730
  %5598 = vmatpush1.bf16.msra.mxu0 %v3729
  %5599 = vmatprep.subr.bf16.mxu0 %v3734
  %5600 = vmatpush1.bf16.msra.mxu0 %v3733
  %5601 = vmatprep.subr.bf16.mxu0 %v3738
  %5602 = vmatpush1.bf16.msra.mxu0 %v3737
  %5603 = vmatprep.subr.bf16.mxu0 %v3742
  %5604 = vmatpush1.bf16.msra.mxu0 %v3741
  %5605 = vmatprep.subr.bf16.mxu0 %v3746
  %5606 = vmatpush1.bf16.msra.mxu0 %v3745
  %5607 = vmatprep.subr.bf16.mxu0 %v3750
  %5608 = vmatpush1.bf16.msra.mxu0 %v3749
  %5609 = vmatprep.subr.bf16.mxu0 %v3754
  %5610 = vmatpush1.bf16.msra.mxu0 %v3753
  %5611 = vmatprep.subr.bf16.mxu0 %v3758
  %5612 = vmatpush1.bf16.msra.mxu0 %v3757
  %5613 = vmatprep.subr.bf16.mxu0 %v3762
  %5614 = vmatpush1.bf16.msra.mxu0 %v3761
  %5615 = vmatprep.mubr.bf16.mxu0 %v86
  %5616 = vmatmul.mubr.bf16.gmra.mrb[0].mxu0 %v85
  %v5617 = vpop.f32.mrb[0].mxu0
  %v5618 = vadd.f32 %v5575, %v5617
  %v5619 = vpop.f32.mrb[0].mxu0
  %v5620 = vadd.f32 %v5577, %v5619
  %v5621 = vpop.f32.mrb[0].mxu0
  %v5622 = vadd.f32 %v5579, %v5621
  %v5623 = vpop.f32.mrb[0].mxu0
  %v5624 = vadd.f32 %v5581, %v5623
  %5625 = vdwg.mxu0
  %5626 = vmatprep.subr.bf16.mxu0 %v3766
  %5627 = vmatpush1.bf16.msra.mxu0 %v3765
  %5628 = vmatprep.subr.bf16.mxu0 %v3770
  %5629 = vmatpush1.bf16.msra.mxu0 %v3769
  %5630 = vmatprep.subr.bf16.mxu0 %v3774
  %5631 = vmatpush1.bf16.msra.mxu0 %v3773
  %5632 = vmatprep.subr.bf16.mxu0 %v3778
  %5633 = vmatpush1.bf16.msra.mxu0 %v3777
  %5634 = vmatprep.subr.bf16.mxu0 %v3782
  %5635 = vmatpush1.bf16.msra.mxu0 %v3781
  %5636 = vmatprep.subr.bf16.mxu0 %v3786
  %5637 = vmatpush1.bf16.msra.mxu0 %v3785
  %5638 = vmatprep.subr.bf16.mxu0 %v3790
  %5639 = vmatpush1.bf16.msra.mxu0 %v3789
  %5640 = vmatprep.subr.bf16.mxu0 %v3794
  %5641 = vmatpush1.bf16.msra.mxu0 %v3793
  %5642 = vmatprep.subr.bf16.mxu0 %v3798
  %5643 = vmatpush1.bf16.msra.mxu0 %v3797
  %5644 = vmatprep.subr.bf16.mxu0 %v3802
  %5645 = vmatpush1.bf16.msra.mxu0 %v3801
  %5646 = vmatprep.subr.bf16.mxu0 %v3806
  %5647 = vmatpush1.bf16.msra.mxu0 %v3805
  %5648 = vmatprep.subr.bf16.mxu0 %v3810
  %5649 = vmatpush1.bf16.msra.mxu0 %v3809
  %5650 = vmatprep.subr.bf16.mxu0 %v3814
  %5651 = vmatpush1.bf16.msra.mxu0 %v3813
  %5652 = vmatprep.subr.bf16.mxu0 %v3818
  %5653 = vmatpush1.bf16.msra.mxu0 %v3817
  %5654 = vmatprep.subr.bf16.mxu0 %v3822
  %5655 = vmatpush1.bf16.msra.mxu0 %v3821
  %5656 = vmatprep.subr.bf16.mxu0 %v3826
  %5657 = vmatpush1.bf16.msra.mxu0 %v3825
  %5658 = vmatprep.mubr.bf16.mxu0 %v88
  %5659 = vmatmul.mubr.bf16.gmra.mrb[0].mxu0 %v87
  %v5660 = vpop.f32.mrb[0].mxu0
  %v5661 = vadd.f32 %v5618, %v5660
  %v5662 = vpop.f32.mrb[0].mxu0
  %v5663 = vadd.f32 %v5620, %v5662
  %v5664 = vpop.f32.mrb[0].mxu0
  %v5665 = vadd.f32 %v5622, %v5664
  %v5666 = vpop.f32.mrb[0].mxu0
  %v5667 = vadd.f32 %v5624, %v5666
  %5668 = vdwg.mxu0
  %5669 = vmatprep.subr.bf16.mxu0 %v3830
  %5670 = vmatpush1.bf16.msra.mxu0 %v3829
  %5671 = vmatprep.subr.bf16.mxu0 %v3834
  %5672 = vmatpush1.bf16.msra.mxu0 %v3833
  %5673 = vmatprep.subr.bf16.mxu0 %v3838
  %5674 = vmatpush1.bf16.msra.mxu0 %v3837
  %5675 = vmatprep.subr.bf16.mxu0 %v3842
  %5676 = vmatpush1.bf16.msra.mxu0 %v3841
  %5677 = vmatprep.subr.bf16.mxu0 %v3846
  %5678 = vmatpush1.bf16.msra.mxu0 %v3845
  %5679 = vmatprep.subr.bf16.mxu0 %v3850
  %5680 = vmatpush1.bf16.msra.mxu0 %v3849
  %5681 = vmatprep.subr.bf16.mxu0 %v3854
  %5682 = vmatpush1.bf16.msra.mxu0 %v3853
  %5683 = vmatprep.subr.bf16.mxu0 %v3858
  %5684 = vmatpush1.bf16.msra.mxu0 %v3857
  %5685 = vmatprep.subr.bf16.mxu0 %v3862
  %5686 = vmatpush1.bf16.msra.mxu0 %v3861
  %5687 = vmatprep.subr.bf16.mxu0 %v3866
  %5688 = vmatpush1.bf16.msra.mxu0 %v3865
  %5689 = vmatprep.subr.bf16.mxu0 %v3870
  %5690 = vmatpush1.bf16.msra.mxu0 %v3869
  %5691 = vmatprep.subr.bf16.mxu0 %v3874
  %5692 = vmatpush1.bf16.msra.mxu0 %v3873
  %5693 = vmatprep.subr.bf16.mxu0 %v3878
  %5694 = vmatpush1.bf16.msra.mxu0 %v3877
  %5695 = vmatprep.subr.bf16.mxu0 %v3882
  %5696 = vmatpush1.bf16.msra.mxu0 %v3881
  %5697 = vmatprep.subr.bf16.mxu0 %v3886
  %5698 = vmatpush1.bf16.msra.mxu0 %v3885
  %5699 = vmatprep.subr.bf16.mxu0 %v3890
  %5700 = vmatpush1.bf16.msra.mxu0 %v3889
  %5701 = vmatprep.mubr.bf16.mxu0 %v90
  %5702 = vmatmul.mubr.bf16.gmra.mrb[0].mxu0 %v89
  %v5703 = vpop.f32.mrb[0].mxu0
  %v5704 = vadd.f32 %v5661, %v5703
  %v5705 = vpop.f32.mrb[0].mxu0
  %v5706 = vadd.f32 %v5663, %v5705
  %v5707 = vpop.f32.mrb[0].mxu0
  %v5708 = vadd.f32 %v5665, %v5707
  %v5709 = vpop.f32.mrb[0].mxu0
  %v5710 = vadd.f32 %v5667, %v5709
  %5711 = vdwg.mxu0
  %5712 = vmatprep.subr.bf16.mxu0 %v3894
  %5713 = vmatpush1.bf16.msra.mxu0 %v3893
  %5714 = vmatprep.subr.bf16.mxu0 %v3898
  %5715 = vmatpush1.bf16.msra.mxu0 %v3897
  %5716 = vmatprep.subr.bf16.mxu0 %v3902
  %5717 = vmatpush1.bf16.msra.mxu0 %v3901
  %5718 = vmatprep.subr.bf16.mxu0 %v3906
  %5719 = vmatpush1.bf16.msra.mxu0 %v3905
  %5720 = vmatprep.subr.bf16.mxu0 %v3910
  %5721 = vmatpush1.bf16.msra.mxu0 %v3909
  %5722 = vmatprep.subr.bf16.mxu0 %v3914
  %5723 = vmatpush1.bf16.msra.mxu0 %v3913
  %5724 = vmatprep.subr.bf16.mxu0 %v3918
  %5725 = vmatpush1.bf16.msra.mxu0 %v3917
  %5726 = vmatprep.subr.bf16.mxu0 %v3922
  %5727 = vmatpush1.bf16.msra.mxu0 %v3921
  %5728 = vmatprep.subr.bf16.mxu0 %v3926
  %5729 = vmatpush1.bf16.msra.mxu0 %v3925
  %5730 = vmatprep.subr.bf16.mxu0 %v3930
  %5731 = vmatpush1.bf16.msra.mxu0 %v3929
  %5732 = vmatprep.subr.bf16.mxu0 %v3934
  %5733 = vmatpush1.bf16.msra.mxu0 %v3933
  %5734 = vmatprep.subr.bf16.mxu0 %v3938
  %5735 = vmatpush1.bf16.msra.mxu0 %v3937
  %5736 = vmatprep.subr.bf16.mxu0 %v3942
  %5737 = vmatpush1.bf16.msra.mxu0 %v3941
  %5738 = vmatprep.subr.bf16.mxu0 %v3946
  %5739 = vmatpush1.bf16.msra.mxu0 %v3945
  %5740 = vmatprep.subr.bf16.mxu0 %v3950
  %5741 = vmatpush1.bf16.msra.mxu0 %v3949
  %5742 = vmatprep.subr.bf16.mxu0 %v3954
  %5743 = vmatpush1.bf16.msra.mxu0 %v3953
  %5744 = vmatprep.mubr.bf16.mxu0 %v92
  %5745 = vmatmul.mubr.bf16.gmra.mrb[0].mxu0 %v91
  %v5746 = vpop.f32.mrb[0].mxu0
  %v5747 = vadd.f32 %v5704, %v5746
  %v5748 = vpop.f32.mrb[0].mxu0
  %v5749 = vadd.f32 %v5706, %v5748
  %v5750 = vpop.f32.mrb[0].mxu0
  %v5751 = vadd.f32 %v5708, %v5750
  %v5752 = vpop.f32.mrb[0].mxu0
  %v5753 = vadd.f32 %v5710, %v5752
  %5754 = vdwg.mxu0
  %v5755 = vmax.f32 %v5231, 0.0
  %v5756 = vmax.f32 %v5233, 0.0
  %v5757 = vmax.f32 %v5747, 0.0
  %v5758 = vmax.f32 %v5749, 0.0
  %v5759 = vmax.f32 %v5235, 0.0
  %v5760 = vmax.f32 %v5237, 0.0
  %v5761 = vmax.f32 %v5751, 0.0
  %v5762 = vmax.f32 %v5753, 0.0
  %v5763 = vpack.c.bf16 %v5759, %v5755
  %v5764 = vpack.c.bf16 %v5760, %v5756
  %v5765 = vpack.c.bf16 %v5761, %v5757
  %v5766 = vpack.c.bf16 %v5762, %v5758
  %v5767 = vld [vmem:[%s3] sm:$0xf]
  %v5768 = vld [vmem:[%s3 + $0x4] sm:$0xf]
  %v5769 = vld [vmem:[%s3 + $0x8] sm:$0xf]
  %v5770 = vld [vmem:[%s3 + $0xc] sm:$0xf]
  %v5771 = vld [vmem:[%s3 + $0x10] sm:$0xf]
  %v5772 = vld [vmem:[%s3 + $0x14] sm:$0xf]
  %v5773 = vld [vmem:[%s3 + $0x18] sm:$0xf]
  %v5774 = vld [vmem:[%s3 + $0x1c] sm:$0xf]
  %v5775 = vld [vmem:[%s3 + $0x20] sm:$0xf]
  %v5776 = vld [vmem:[%s3 + $0x24] sm:$0xf]
  %v5777 = vld [vmem:[%s3 + $0x28] sm:$0xf]
  %v5778 = vld [vmem:[%s3 + $0x2c] sm:$0xf]
  %v5779 = vld [vmem:[%s3 + $0x30] sm:$0xf]
  %v5780 = vld [vmem:[%s3 + $0x34] sm:$0xf]
  %v5781 = vld [vmem:[%s3 + $0x38] sm:$0xf]
  %v5782 = vld [vmem:[%s3 + $0x3c] sm:$0xf]
  %v5783 = vld [vmem:[%s3 + $0x40] sm:$0xf]
  %v5784 = vld [vmem:[%s3 + $0x44] sm:$0xf]
  %v5785 = vld [vmem:[%s3 + $0x48] sm:$0xf]
  %v5786 = vld [vmem:[%s3 + $0x4c] sm:$0xf]
  %v5787 = vld [vmem:[%s3 + $0x50] sm:$0xf]
  %v5788 = vld [vmem:[%s3 + $0x54] sm:$0xf]
  %v5789 = vld [vmem:[%s3 + $0x58] sm:$0xf]
  %v5790 = vld [vmem:[%s3 + $0x5c] sm:$0xf]
  %v5791 = vld [vmem:[%s3 + $0x60] sm:$0xf]
  %v5792 = vld [vmem:[%s3 + $0x64] sm:$0xf]
  %v5793 = vld [vmem:[%s3 + $0x68] sm:$0xf]
  %v5794 = vld [vmem:[%s3 + $0x6c] sm:$0xf]
  %v5795 = vld [vmem:[%s3 + $0x70] sm:$0xf]
  %v5796 = vld [vmem:[%s3 + $0x74] sm:$0xf]
  %v5797 = vld [vmem:[%s3 + $0x78] sm:$0xf]
  %v5798 = vld [vmem:[%s3 + $0x7c] sm:$0xf]
  %v5799 = vld [vmem:[%s3 + $0x80] sm:$0xf]
  %v5800 = vld [vmem:[%s3 + $0x84] sm:$0xf]
  %v5801 = vld [vmem:[%s3 + $0x88] sm:$0xf]
  %v5802 = vld [vmem:[%s3 + $0x8c] sm:$0xf]
  %v5803 = vld [vmem:[%s3 + $0x90] sm:$0xf]
  %v5804 = vld [vmem:[%s3 + $0x94] sm:$0xf]
  %v5805 = vld [vmem:[%s3 + $0x98] sm:$0xf]
  %v5806 = vld [vmem:[%s3 + $0x9c] sm:$0xf]
  %v5807 = vld [vmem:[%s3 + $0xa0] sm:$0xf]
  %v5808 = vld [vmem:[%s3 + $0xa4] sm:$0xf]
  %v5809 = vld [vmem:[%s3 + $0xa8] sm:$0xf]
  %v5810 = vld [vmem:[%s3 + $0xac] sm:$0xf]
  %v5811 = vld [vmem:[%s3 + $0xb0] sm:$0xf]
  %v5812 = vld [vmem:[%s3 + $0xb4] sm:$0xf]
  %v5813 = vld [vmem:[%s3 + $0xb8] sm:$0xf]
  %v5814 = vld [vmem:[%s3 + $0xbc] sm:$0xf]
  %v5815 = vld [vmem:[%s3 + $0xc0] sm:$0xf]
  %v5816 = vld [vmem:[%s3 + $0xc4] sm:$0xf]
  %v5817 = vld [vmem:[%s3 + $0xc8] sm:$0xf]
  %v5818 = vld [vmem:[%s3 + $0xcc] sm:$0xf]
  %v5819 = vld [vmem:[%s3 + $0xd0] sm:$0xf]
  %v5820 = vld [vmem:[%s3 + $0xd4] sm:$0xf]
  %v5821 = vld [vmem:[%s3 + $0xd8] sm:$0xf]
  %v5822 = vld [vmem:[%s3 + $0xdc] sm:$0xf]
  %v5823 = vld [vmem:[%s3 + $0xe0] sm:$0xf]
  %v5824 = vld [vmem:[%s3 + $0xe4] sm:$0xf]
  %v5825 = vld [vmem:[%s3 + $0xe8] sm:$0xf]
  %v5826 = vld [vmem:[%s3 + $0xec] sm:$0xf]
  %v5827 = vld [vmem:[%s3 + $0xf0] sm:$0xf]
  %v5828 = vld [vmem:[%s3 + $0xf4] sm:$0xf]
  %v5829 = vld [vmem:[%s3 + $0xf8] sm:$0xf]
  %v5830 = vld [vmem:[%s3 + $0xfc] sm:$0xf]
  %v5831 = vld [vmem:[%s4] sm:$0x1]
  %v5833 = vlaneseq
  %v5834 = vshrl.u32 %v5833, 7
  %v5835 = vsub.s32 0, %v5834
  %v5836 = vrot.slane %v5831, %v5835
  %v5902 = vunpack.c.l.b16 %v5767
  %v5903 = vunpack.c.l.b16 %v5768
  %v5904 = vunpack.c.l.b16 %v5769
  %v5905 = vunpack.c.l.b16 %v5770
  %v5906 = vunpack.c.l.b16 %v5771
  %v5907 = vunpack.c.l.b16 %v5772
  %v5908 = vunpack.c.l.b16 %v5773
  %v5909 = vunpack.c.l.b16 %v5774
  %v5910 = vunpack.c.l.b16 %v5775
  %v5911 = vunpack.c.l.b16 %v5776
  %v5912 = vunpack.c.l.b16 %v5777
  %v5913 = vunpack.c.l.b16 %v5778
  %v5914 = vunpack.c.l.b16 %v5779
  %v5915 = vunpack.c.l.b16 %v5780
  %v5916 = vunpack.c.l.b16 %v5781
  %v5917 = vunpack.c.l.b16 %v5782
  %v5918 = vunpack.c.l.b16 %v5783
  %v5919 = vunpack.c.l.b16 %v5784
  %v5920 = vunpack.c.l.b16 %v5785
  %v5921 = vunpack.c.l.b16 %v5786
  %v5922 = vunpack.c.l.b16 %v5787
  %v5923 = vunpack.c.l.b16 %v5788
  %v5924 = vunpack.c.l.b16 %v5789
  %v5925 = vunpack.c.l.b16 %v5790
  %v5926 = vunpack.c.l.b16 %v5791
  %v5927 = vunpack.c.l.b16 %v5792
  %v5928 = vunpack.c.l.b16 %v5793
  %v5929 = vunpack.c.l.b16 %v5794
  %v5930 = vunpack.c.l.b16 %v5795
  %v5931 = vunpack.c.l.b16 %v5796
  %v5932 = vunpack.c.l.b16 %v5797
  %v5933 = vunpack.c.l.b16 %v5798
  %v5934 = vunpack.c.l.b16 %v5799
  %v5935 = vunpack.c.l.b16 %v5800
  %v5936 = vunpack.c.l.b16 %v5801
  %v5937 = vunpack.c.l.b16 %v5802
  %v5938 = vunpack.c.l.b16 %v5803
  %v5939 = vunpack.c.l.b16 %v5804
  %v5940 = vunpack.c.l.b16 %v5805
  %v5941 = vunpack.c.l.b16 %v5806
  %v5942 = vunpack.c.l.b16 %v5807
  %v5943 = vunpack.c.l.b16 %v5808
  %v5944 = vunpack.c.l.b16 %v5809
  %v5945 = vunpack.c.l.b16 %v5810
  %v5946 = vunpack.c.l.b16 %v5811
  %v5947 = vunpack.c.l.b16 %v5812
  %v5948 = vunpack.c.l.b16 %v5813
  %v5949 = vunpack.c.l.b16 %v5814
  %v5950 = vunpack.c.l.b16 %v5815
  %v5951 = vunpack.c.l.b16 %v5816
  %v5952 = vunpack.c.l.b16 %v5817
  %v5953 = vunpack.c.l.b16 %v5818
  %v5954 = vunpack.c.l.b16 %v5819
  %v5955 = vunpack.c.l.b16 %v5820
  %v5956 = vunpack.c.l.b16 %v5821
  %v5957 = vunpack.c.l.b16 %v5822
  %v5958 = vunpack.c.l.b16 %v5823
  %v5959 = vunpack.c.l.b16 %v5824
  %v5960 = vunpack.c.l.b16 %v5825
  %v5961 = vunpack.c.l.b16 %v5826
  %v5962 = vunpack.c.l.b16 %v5827
  %v5963 = vunpack.c.l.b16 %v5828
  %v5964 = vunpack.c.l.b16 %v5829
  %v5965 = vunpack.c.l.b16 %v5830
  %v5966 = vpack.c.b16 %v5903, %v5902
  %v5967 = vpack.c.b16 %v5905, %v5904
  %v5968 = vpack.c.b16 %v5907, %v5906
  %v5969 = vpack.c.b16 %v5909, %v5908
  %v5970 = vpack.c.b16 %v5911, %v5910
  %v5971 = vpack.c.b16 %v5913, %v5912
  %v5972 = vpack.c.b16 %v5915, %v5914
  %v5973 = vpack.c.b16 %v5917, %v5916
  %v5974 = vpack.c.b16 %v5919, %v5918
  %v5975 = vpack.c.b16 %v5921, %v5920
  %v5976 = vpack.c.b16 %v5923, %v5922
  %v5977 = vpack.c.b16 %v5925, %v5924
  %v5978 = vpack.c.b16 %v5927, %v5926
  %v5979 = vpack.c.b16 %v5929, %v5928
  %v5980 = vpack.c.b16 %v5931, %v5930
  %v5981 = vpack.c.b16 %v5933, %v5932
  %v5982 = vpack.c.b16 %v5935, %v5934
  %v5983 = vpack.c.b16 %v5937, %v5936
  %v5984 = vpack.c.b16 %v5939, %v5938
  %v5985 = vpack.c.b16 %v5941, %v5940
  %v5986 = vpack.c.b16 %v5943, %v5942
  %v5987 = vpack.c.b16 %v5945, %v5944
  %v5988 = vpack.c.b16 %v5947, %v5946
  %v5989 = vpack.c.b16 %v5949, %v5948
  %v5990 = vpack.c.b16 %v5951, %v5950
  %v5991 = vpack.c.b16 %v5953, %v5952
  %v5992 = vpack.c.b16 %v5955, %v5954
  %v5993 = vpack.c.b16 %v5957, %v5956
  %v5994 = vpack.c.b16 %v5959, %v5958
  %v5995 = vpack.c.b16 %v5961, %v5960
  %v5996 = vpack.c.b16 %v5963, %v5962
  %v5997 = vpack.c.b16 %v5965, %v5964
  %6030 = vmatprep.subr.bf16.mxu0 0
  %6031 = vmatpush1.bf16.msra.mxu0 %v5966
  %6032 = vmatprep.subr.bf16.mxu0 0
  %6033 = vmatpush1.bf16.msra.mxu0 %v5967
  %6034 = vmatprep.subr.bf16.mxu0 0
  %6035 = vmatpush1.bf16.msra.mxu0 %v5968
  %6036 = vmatprep.subr.bf16.mxu0 0
  %6037 = vmatpush1.bf16.msra.mxu0 %v5969
  %6038 = vmatprep.subr.bf16.mxu0 0
  %6039 = vmatpush1.bf16.msra.mxu0 %v5970
  %6040 = vmatprep.subr.bf16.mxu0 0
  %6041 = vmatpush1.bf16.msra.mxu0 %v5971
  %6042 = vmatprep.subr.bf16.mxu0 0
  %6043 = vmatpush1.bf16.msra.mxu0 %v5972
  %6044 = vmatprep.subr.bf16.mxu0 0
  %6045 = vmatpush1.bf16.msra.mxu0 %v5973
  %6046 = vmatprep.subr.bf16.mxu0 0
  %6047 = vmatpush1.bf16.msra.mxu0 %v5974
  %6048 = vmatprep.subr.bf16.mxu0 0
  %6049 = vmatpush1.bf16.msra.mxu0 %v5975
  %6050 = vmatprep.subr.bf16.mxu0 0
  %6051 = vmatpush1.bf16.msra.mxu0 %v5976
  %6052 = vmatprep.subr.bf16.mxu0 0
  %6053 = vmatpush1.bf16.msra.mxu0 %v5977
  %6054 = vmatprep.subr.bf16.mxu0 0
  %6055 = vmatpush1.bf16.msra.mxu0 %v5978
  %6056 = vmatprep.subr.bf16.mxu0 0
  %6057 = vmatpush1.bf16.msra.mxu0 %v5979
  %6058 = vmatprep.subr.bf16.mxu0 0
  %6059 = vmatpush1.bf16.msra.mxu0 %v5980
  %6060 = vmatprep.subr.bf16.mxu0 0
  %6061 = vmatpush1.bf16.msra.mxu0 %v5981
  %6062 = vmatprep.mubr.bf16.mxu0 %v5764
  %6063 = vmatmul.mubr.bf16.gmra.mrb[0].mxu0 %v5763
  %v6064 = vpop.f32.mrb[0].mxu0
  %v6065 = vadd.f32 %v5836, %v6064
  %v6066 = vpop.f32.mrb[0].mxu0
  %v6067 = vpop.f32.mrb[0].mxu0
  %v6068 = vadd.f32 %v5836, %v6067
  %v6069 = vpop.f32.mrb[0].mxu0
  %6070 = vdwg.mxu0
  %6071 = vmatprep.subr.bf16.mxu0 0
  %6072 = vmatpush1.bf16.msra.mxu0 %v5982
  %6073 = vmatprep.subr.bf16.mxu0 0
  %6074 = vmatpush1.bf16.msra.mxu0 %v5983
  %6075 = vmatprep.subr.bf16.mxu0 0
  %6076 = vmatpush1.bf16.msra.mxu0 %v5984
  %6077 = vmatprep.subr.bf16.mxu0 0
  %6078 = vmatpush1.bf16.msra.mxu0 %v5985
  %6079 = vmatprep.subr.bf16.mxu0 0
  %6080 = vmatpush1.bf16.msra.mxu0 %v5986
  %6081 = vmatprep.subr.bf16.mxu0 0
  %6082 = vmatpush1.bf16.msra.mxu0 %v5987
  %6083 = vmatprep.subr.bf16.mxu0 0
  %6084 = vmatpush1.bf16.msra.mxu0 %v5988
  %6085 = vmatprep.subr.bf16.mxu0 0
  %6086 = vmatpush1.bf16.msra.mxu0 %v5989
  %6087 = vmatprep.subr.bf16.mxu0 0
  %6088 = vmatpush1.bf16.msra.mxu0 %v5990
  %6089 = vmatprep.subr.bf16.mxu0 0
  %6090 = vmatpush1.bf16.msra.mxu0 %v5991
  %6091 = vmatprep.subr.bf16.mxu0 0
  %6092 = vmatpush1.bf16.msra.mxu0 %v5992
  %6093 = vmatprep.subr.bf16.mxu0 0
  %6094 = vmatpush1.bf16.msra.mxu0 %v5993
  %6095 = vmatprep.subr.bf16.mxu0 0
  %6096 = vmatpush1.bf16.msra.mxu0 %v5994
  %6097 = vmatprep.subr.bf16.mxu0 0
  %6098 = vmatpush1.bf16.msra.mxu0 %v5995
  %6099 = vmatprep.subr.bf16.mxu0 0
  %6100 = vmatpush1.bf16.msra.mxu0 %v5996
  %6101 = vmatprep.subr.bf16.mxu0 0
  %6102 = vmatpush1.bf16.msra.mxu0 %v5997
  %6103 = vmatprep.mubr.bf16.mxu0 %v5766
  %6104 = vmatmul.mubr.bf16.gmra.mrb[0].mxu0 %v5765
  %v6105 = vpop.f32.mrb[0].mxu0
  %v6106 = vadd.f32 %v6065, %v6105
  %v6107 = vpop.f32.mrb[0].mxu0
  %v6108 = vpop.f32.mrb[0].mxu0
  %v6109 = vadd.f32 %v6068, %v6108
  %v6110 = vpop.f32.mrb[0].mxu0
  %6111 = vdwg.mxu0
  %6112 = vst [vmem:[%s5] sm:$0xff] %v6106
  %6113 = vst [vmem:[%s5 + $0x8] sm:$0xff] %v6109
  // Predicated region
  $region22: #{small_mlp_forward.1} parent=0 // pred_check
    _
  $region23: #{small_mlp_forward.1} parent=0 // pred_check_branch
    %6115 = sbr.rel (0) target = $region25
  $region24: #{small_mlp_forward.1} parent=0 // pred_region
    _
  $region25: #{small_mlp_forward.1} parent=0 // pred_fallthru
    _
  // Predicated region
  $region26: #{small_mlp_forward.1} parent=0 // pred_check
    _
  $region27: #{small_mlp_forward.1} parent=0 // pred_check_branch
    %6117 = sbr.rel (0) target = $region29
  $region28: #{small_mlp_forward.1} parent=0 // pred_region
    _
  $region29: #{small_mlp_forward.1} parent=0 // pred_fallthru
    _

</llo_original>
